<compile_context>
chip_gen: v7x
topology: tpu7x:2x2x1
jax: 0.10.0
libtpu: 0.0.40
codegen_flags: <defaults>
</compile_context>

<pallas_src>
import functools

import jax
import jax.numpy as jnp
from jax.experimental import pallas as pl
from jax.experimental.pallas import tpu as pltpu

BN_EPS = 1e-5
_TILE_BYTES = 1 << 20          # ~1 MiB per-tile target


@functools.lru_cache(maxsize=None)
def _vmem_limit():
    """Generation-aware VMEM budget (<=48 MiB on v7x, <=96 MiB on v5e/v6e)."""
    try:
        cap = pltpu.get_tpu_info().vmem_capacity_bytes
    except Exception:
        cap = 64 * 1024 * 1024
    return int(min(cap * 3 // 4, 96 * 1024 * 1024))


def _compiler_params(semantics):
    return pltpu.CompilerParams(
        dimension_semantics=semantics,
        vmem_limit_bytes=_vmem_limit(),
    )


def _pick_tile_m(m, row_bytes, mult=8):
    """Largest multiple-of-`mult` divisor of m whose tile is ~_TILE_BYTES,
    capped so the grid has >= 2 steps whenever m allows it."""
    if m <= mult:
        return m
    tgt = max(mult, _TILE_BYTES // max(int(row_bytes), 1))
    half = (m // 2 // mult) * mult
    if half >= mult:
        tgt = min(tgt, half)          # >= 2 grid steps (v7x megacore)
    t = max(mult, (min(tgt, m) // mult) * mult)
    while t >= mult:
        if m % t == 0:
            return t
        t -= mult
    return m


def _pick_tile_n(n, want_split):
    """Lane-dense (multiple of 128) divisor of n, <= 2048; split when the M
    grid has a single step so both v7x cores get work."""
    if n <= 128:
        return n
    target = 2048
    if want_split:
        half = (n // 2 // 128) * 128
        if half >= 128:
            target = min(target, half)
    t = (min(target, n) // 128) * 128
    while t >= 128:
        if n % t == 0:
            return t
        t -= 128
    return n


# --------------------------------------------------------------------------
# Kernel 1: tiled matmul (bf16 MXU inputs, f32 accumulate) with an optional
# fused BN(scale/shift)+ReLU prologue and optional bias/activation epilogue.
#   out(M, N) = act( prologue(X)(M, K) @ W(K, N) + b )
# --------------------------------------------------------------------------
def matmul_fused(x, w, *, scale=None, shift=None, bias=None, act="none",
                 out_dtype=jnp.bfloat16):
    m, k = x.shape
    k2, n = w.shape
    assert k == k2
    has_norm = scale is not None
    has_bias = bias is not None

    x_bytes = jnp.dtype(x.dtype).itemsize
    tm = _pick_tile_m(m, row_bytes=k * x_bytes + 2 * min(n, 2048))
    tn = _pick_tile_n(n, want_split=(m // tm <= 1))

    def kernel(*refs):
        idx = 0
        x_ref = refs[idx]; idx += 1
        w_ref = refs[idx]; idx += 1
        if has_norm:
            sc_ref = refs[idx]; idx += 1
            sh_ref = refs[idx]; idx += 1
        if has_bias:
            b_ref = refs[idx]; idx += 1
        o_ref = refs[idx]

        xv = x_ref[...]
        if has_norm:
            # Fused BatchNorm-apply + ReLU on the matmul input (f32 math).
            xv = xv.astype(jnp.float32) * sc_ref[...] + sh_ref[...]
            xv = jnp.maximum(xv, 0.0)
        xv = xv.astype(jnp.bfloat16)
        wv = w_ref[...].astype(jnp.bfloat16)
        y = jnp.dot(xv, wv, preferred_element_type=jnp.float32)
        if has_bias:
            y = y + b_ref[...]
        if act == "relu":
            y = jnp.maximum(y, 0.0)
        elif act == "tanh":
            y = jnp.tanh(y)
        o_ref[...] = y.astype(o_ref.dtype)

    inputs = [x, w]
    in_specs = [
        pl.BlockSpec((tm, k), lambda i, j: (i, 0)),
        pl.BlockSpec((k, tn), lambda i, j: (0, j)),
    ]
    if has_norm:
        inputs += [scale.reshape(1, k).astype(jnp.float32),
                   shift.reshape(1, k).astype(jnp.float32)]
        in_specs += [pl.BlockSpec((1, k), lambda i, j: (0, 0)),
                     pl.BlockSpec((1, k), lambda i, j: (0, 0))]
    if has_bias:
        inputs.append(bias.reshape(1, n).astype(jnp.float32))
        in_specs.append(pl.BlockSpec((1, tn), lambda i, j: (0, j)))

    return pl.pallas_call(
        kernel,
        out_shape=jax.ShapeDtypeStruct((m, n), out_dtype),
        grid=(m // tm, n // tn),
        in_specs=in_specs,
        out_specs=pl.BlockSpec((tm, tn), lambda i, j: (i, j)),
        compiler_params=_compiler_params(("parallel", "parallel")),
    )(*inputs)


# --------------------------------------------------------------------------
# Kernel 2: per-column sum and sum-of-squares on a LANE-DENSE view
# (B*2H, 2W*C); folded back to per-channel sums in the wrapper.
# Accumulated across the M grid axis into resident (1, C_lane) outputs.
# --------------------------------------------------------------------------
def column_stats(x):
    m, c = x.shape
    tm = _pick_tile_m(m, row_bytes=c * jnp.dtype(x.dtype).itemsize)

    def kernel(x_ref, sum_ref, ssq_ref):
        @pl.when(pl.program_id(0) == 0)
        def _():
            sum_ref[...] = jnp.zeros_like(sum_ref)
            ssq_ref[...] = jnp.zeros_like(ssq_ref)

        xv = x_ref[...].astype(jnp.float32)
        sum_ref[...] += jnp.sum(xv, axis=0, keepdims=True)
        ssq_ref[...] += jnp.sum(xv * xv, axis=0, keepdims=True)

    return pl.pallas_call(
        kernel,
        out_shape=(
            jax.ShapeDtypeStruct((1, c), jnp.float32),
            jax.ShapeDtypeStruct((1, c), jnp.float32),
        ),
        grid=(m // tm,),
        in_specs=[pl.BlockSpec((tm, c), lambda i: (i, 0))],
        out_specs=(
            pl.BlockSpec((1, c), lambda i: (0, 0)),
            pl.BlockSpec((1, c), lambda i: (0, 0)),
        ),
        compiler_params=_compiler_params(("arbitrary",)),
    )(x)


# --------------------------------------------------------------------------
# Kernel 3: final epilogue  tanh(x + bias_row) on the lane-dense (B*64, 64*C)
# view; bias_row is the per-channel bias tiled across W (prepared once).
# --------------------------------------------------------------------------
def bias_tanh(x, bias_row):
    m, c = x.shape
    tm = _pick_tile_m(m, row_bytes=c * (jnp.dtype(x.dtype).itemsize + 4))

    def kernel(x_ref, b_ref, o_ref):
        o_ref[...] = jnp.tanh(x_ref[...].astype(jnp.float32) + b_ref[...])

    return pl.pallas_call(
        kernel,
        out_shape=jax.ShapeDtypeStruct((m, c), jnp.float32),
        grid=(m // tm,),
        in_specs=[
            pl.BlockSpec((tm, c), lambda i: (i, 0)),
            pl.BlockSpec((1, c), lambda i: (0, 0)),
        ],
        out_specs=pl.BlockSpec((tm, c), lambda i: (i, 0)),
        compiler_params=_compiler_params(("parallel",)),
    )(x, bias_row)


# --------------------------------------------------------------------------
# Plain-JAX glue: col2im overlap-add for ConvTranspose2d(k=4, s=2, p=1).
# z rows are (b, hi, wi); columns are (ki, kj, cout).  Each element lands at
# output position (2*hi - 1 + ki, 2*wi - 1 + kj); out-of-range drops (p=1).
# bf16 in/out, f32 adds (XLA fuses the whole thing into one pass over z).
# --------------------------------------------------------------------------
def _col2im_convT(z, b, h, w, cout, out_dtype=jnp.bfloat16):
    z = z.reshape(b, h, w, 4, 4, cout).astype(jnp.float32)

    # Rows: even output rows (2m)  <- (hi=m, ki=1) + (hi=m-1, ki=3)
    #       odd  output rows (2m+1)<- (hi=m, ki=2) + (hi=m+1, ki=0)
    zp = jnp.pad(z, ((0, 0), (1, 1), (0, 0), (0, 0), (0, 0), (0, 0)))
    even_h = zp[:, 1:h + 1, :, 1] + zp[:, 0:h, :, 3]
    odd_h = zp[:, 1:h + 1, :, 2] + zp[:, 2:h + 2, :, 0]
    y = jnp.stack([even_h, odd_h], axis=2).reshape(b, 2 * h, w, 4, cout)

    # Columns: same pattern along W with kj.
    yp = jnp.pad(y, ((0, 0), (0, 0), (1, 1), (0, 0), (0, 0)))
    even_w = yp[:, :, 1:w + 1, 1] + yp[:, :, 0:w, 3]
    odd_w = yp[:, :, 1:w + 1, 2] + yp[:, :, 2:w + 2, 0]
    out = jnp.stack([even_w, odd_w], axis=3).reshape(b, 2 * h, 2 * w, cout)
    return out.astype(out_dtype)


def _conv_channels(ngf):
    # (cin, cout, cout_padded)  -- only the last layer pads 3 -> 8 so that
    # its matmul N = 16*8 = 128 is a full lane group.
    return [
        (ngf * 8, ngf * 4, ngf * 4),
        (ngf * 4, ngf * 2, ngf * 2),
        (ngf * 2, ngf, ngf),
        (ngf, 3, 8),
    ]


# --------------------------------------------------------------------------
# One-time parameter preprocessing (hoisted out of the forward pass).
# --------------------------------------------------------------------------
def prepare_params(raw, ngf):
    p = {
        "lin_w": raw["lin_w"].astype(jnp.bfloat16),
        "lin_b": raw["lin_b"],
    }
    for li, (cin, cout, cpad) in enumerate(_conv_channels(ngf)):
        w_ct = raw[f"conv{li}_w"]                       # (cin, cout, 4, 4)
        # Input-stationary layout: columns ordered (ki, kj, cout); no flip.
        w_t = jnp.transpose(w_ct, (0, 2, 3, 1))         # (cin, 4, 4, cout)
        if cpad != cout:
            w_t = jnp.pad(w_t, ((0, 0), (0, 0), (0, 0), (0, cpad - cout)))
        p[f"conv{li}_wmat"] = w_t.reshape(cin, 16 * cpad).astype(jnp.bfloat16)
        if li < 3:
            # ConvT bias cancels exactly under training-mode BN mean
            # subtraction, so it is dropped here.
            p[f"bn{li}_g"] = raw[f"bn{li}_g"]
            p[f"bn{li}_b"] = raw[f"bn{li}_b"]
        else:
            bias_pad = jnp.pad(raw[f"conv{li}_b"], (0, cpad - cout))
            # Tile across W=64 so the final tanh kernel is lane-dense.
            p["out_bias_row"] = jnp.tile(bias_pad, 64).reshape(1, 64 * cpad)
    return p


# --------------------------------------------------------------------------
# Full forward pass.
# --------------------------------------------------------------------------
def generator_forward(noise, params, ngf):
    b = noise.shape[0]

    # Linear + (first) ReLU fused; bf16 activation storage at the producer.
    x = matmul_fused(noise, params["lin_w"], bias=params["lin_b"],
                     act="relu", out_dtype=jnp.bfloat16)
    # NCHW view -> NHWC.
    x = x.reshape(b, ngf * 8, 4, 4).transpose(0, 2, 3, 1)      # (B,4,4,8ngf)

    scale = shift = None
    chans = _conv_channels(ngf)
    for li, (cin, cout, cpad) in enumerate(chans):
        _, h, w, _ = x.shape
        a = x.reshape(b * h * w, cin)

        # Input-stationary ConvT matmul; BN-apply+ReLU of the PREVIOUS layer
        # is folded into this matmul's prologue (scale/shift).
        z = matmul_fused(a, params[f"conv{li}_wmat"], scale=scale, shift=shift,
                         out_dtype=jnp.bfloat16)
        y = _col2im_convT(z, b, h, w, cpad)            # (B, 2H, 2W, cpad) bf16
        h2, w2 = 2 * h, 2 * w
        y_lane = y.reshape(b * h2, w2 * cpad)          # lane-dense view

        if li < len(chans) - 1:
            # Exact training-mode batch statistics on the lane-dense view,
            # folded back to per-channel sums (tiny reduction) in XLA.
            fsum, fssq = column_stats(y_lane)
            col_sum = fsum.reshape(w2, cpad).sum(axis=0)
            col_ssq = fssq.reshape(w2, cpad).sum(axis=0)
            count = float(b * h2 * w2)
            mean = col_sum / count
            var = col_ssq / count - mean * mean
            inv = jax.lax.rsqrt(var + BN_EPS)
            scale = params[f"bn{li}_g"] * inv
            shift = params[f"bn{li}_b"] - mean * scale
            x = y                                      # consumed by next matmul
        else:
            out = bias_tanh(y_lane, params["out_bias_row"])
            out = out.reshape(b, h2, w2, cpad)[..., :cout]     # drop pad chans
            return out.transpose(0, 3, 1, 2)                   # (B, 3, 64, 64)


def init_params(key, noise_size, ngf):
    ks = jax.random.split(key, 16)
    p = {}
    p["lin_w"] = 0.05 * jax.random.normal(
        ks[0], (noise_size, ngf * 8 * 4 * 4), jnp.float32)
    p["lin_b"] = 0.05 * jax.random.normal(
        ks[1], (ngf * 8 * 4 * 4,), jnp.float32)

    ki = 2
    for li, (cin, cout, _) in enumerate(_conv_channels(ngf)):
        p[f"conv{li}_w"] = 0.05 * jax.random.normal(
            ks[ki], (cin, cout, 4, 4), jnp.float32); ki += 1
        p[f"conv{li}_b"] = 0.05 * jax.random.normal(
            ks[ki], (cout,), jnp.float32); ki += 1
        if li < 3:
            p[f"bn{li}_g"] = 1.0 + 0.1 * jax.random.normal(
                ks[ki], (cout,), jnp.float32); ki += 1
            p[f"bn{li}_b"] = 0.1 * jax.random.normal(
                ks[ki], (cout,), jnp.float32); ki += 1
    return p


if __name__ == "__main__":
    noise_size, ngf, batch = 32, 8, 2

    key = jax.random.PRNGKey(0)
    k_param, k_noise = jax.random.split(key)
    raw_params = init_params(k_param, noise_size, ngf)
    params = prepare_params(raw_params, ngf)        # one-time weight prep
    noise = jax.random.normal(k_noise, (batch, noise_size), jnp.float32)

    fwd = jax.jit(functools.partial(generator_forward, ngf=ngf))
    out = jax.block_until_ready(fwd(noise, params))

    assert out.shape == (batch, 3, 64, 64), out.shape
    assert out.dtype == jnp.float32
    assert bool(jnp.all(jnp.isfinite(out)))
    assert bool(jnp.all(jnp.abs(out) <= 1.0 + 1e-6))   # tanh range
    print("KERNEL_OK")
</pallas_src>

<mosaic_0001>
module attributes {stable_mosaic.version = 11 : i64} {
  func.func @kernel(%arg0: i32, %arg1: i32, %arg2: memref<2x32xf32, #tpu.memory_space<vmem>>, %arg3: memref<32x512xbf16, #tpu.memory_space<vmem>>, %arg4: memref<1x512xf32, #tpu.memory_space<vmem>>, %arg5: memref<2x512xbf16, #tpu.memory_space<vmem>>) attributes {dimension_semantics = [#tpu.dimension_semantics<parallel>, #tpu.dimension_semantics<parallel>], iteration_bounds = array<i64: 1, 2>, scalar_prefetch = 0 : i64, scratch_operands = 0 : i64, tpu.core_type = #tpu.core_type<tc>, window_params = [{transform_indices = @transform_0, window_bounds = array<i64: 2, 32>}, {transform_indices = @transform_1, window_bounds = array<i64: 32, 512>}, {transform_indices = @transform_2, window_bounds = array<i64: 1, 512>}, {transform_indices = @transform_3, window_bounds = array<i64: 2, 512>}]} {
    %c0 = arith.constant 0 : index
    %c0_0 = arith.constant 0 : index
    %0 = vector.load %arg2[%c0, %c0_0] : memref<2x32xf32, #tpu.memory_space<vmem>>, vector<2x32xf32>
    %1 = arith.truncf %0 : vector<2x32xf32> to vector<2x32xbf16>
    %c0_1 = arith.constant 0 : index
    %c0_2 = arith.constant 0 : index
    %2 = vector.load %arg3[%c0_1, %c0_2] : memref<32x512xbf16, #tpu.memory_space<vmem>>, vector<32x512xbf16>
    %cst = arith.constant dense<0.000000e+00> : vector<2x512xf32>
    %3 = tpu.matmul %1, %2, %cst {dimension_numbers = #tpu.dot_dimension_numbers<[1], [0], [0], [1], [0, 0, 1, 1], [], []>} : vector<2x32xbf16>, vector<32x512xbf16>, vector<2x512xf32> -> vector<2x512xf32>
    %c0_3 = arith.constant 0 : index
    %c0_4 = arith.constant 0 : index
    %4 = vector.load %arg4[%c0_3, %c0_4] : memref<1x512xf32, #tpu.memory_space<vmem>>, vector<1x512xf32>
    %5 = vector.broadcast %4 : vector<1x512xf32> to vector<2x512xf32>
    %6 = arith.addf %3, %5 : vector<2x512xf32>
    %cst_5 = arith.constant 0.000000e+00 : f32
    %7 = vector.broadcast %cst_5 : f32 to vector<2x512xf32>
    %8 = arith.maximumf %6, %7 : vector<2x512xf32>
    %9 = arith.truncf %8 : vector<2x512xf32> to vector<2x512xbf16>
    %c0_6 = arith.constant 0 : index
    %c0_7 = arith.constant 0 : index
    %10 = vector.load %arg5[%c0_6, %c0_7] : memref<2x512xbf16, #tpu.memory_space<vmem>>, vector<2x512xbf16>
    tpu.vector_store %arg5[%c0_6, %c0_7], %9 {strides = array<i32>} : memref<2x512xbf16, #tpu.memory_space<vmem>>, vector<2x512xbf16>,
    return
  }
  func.func @transform_0(%arg0: i32, %arg1: i32) -> (i32, i32) {
    %c0_i32 = arith.constant 0 : i32
    %c0_i32_0 = arith.constant 0 : i32
    return %arg0, %c0_i32 : i32, i32
  }
  func.func @transform_1(%arg0: i32, %arg1: i32) -> (i32, i32) {
    %c0_i32 = arith.constant 0 : i32
    %c0_i32_0 = arith.constant 0 : i32
    return %c0_i32, %arg1 : i32, i32
  }
  func.func @transform_2(%arg0: i32, %arg1: i32) -> (i32, i32) {
    %c0_i32 = arith.constant 0 : i32
    %c0_i32_0 = arith.constant 0 : i32
    return %c0_i32, %arg1 : i32, i32
  }
  func.func @transform_3(%arg0: i32, %arg1: i32) -> (i32, i32) {
    %c0_i32 = arith.constant 0 : i32
    return %arg0, %arg1 : i32, i32
  }
}

module attributes {stable_mosaic.version = 11 : i64} {
  func.func @kernel(%arg0: i32, %arg1: i32, %arg2: memref<16x64xbf16, #tpu.memory_space<vmem>>, %arg3: memref<64x512xbf16, #tpu.memory_space<vmem>>, %arg4: memref<16x512xbf16, #tpu.memory_space<vmem>>) attributes {dimension_semantics = [#tpu.dimension_semantics<parallel>, #tpu.dimension_semantics<parallel>], iteration_bounds = array<i64: 2, 1>, scalar_prefetch = 0 : i64, scratch_operands = 0 : i64, tpu.core_type = #tpu.core_type<tc>, window_params = [{transform_indices = @transform_0, window_bounds = array<i64: 16, 64>}, {transform_indices = @transform_1, window_bounds = array<i64: 64, 512>}, {transform_indices = @transform_2, window_bounds = array<i64: 16, 512>}]} {
    %c0 = arith.constant 0 : index
    %c0_0 = arith.constant 0 : index
    %0 = vector.load %arg2[%c0, %c0_0] : memref<16x64xbf16, #tpu.memory_space<vmem>>, vector<16x64xbf16>
    %c0_1 = arith.constant 0 : index
    %c0_2 = arith.constant 0 : index
    %1 = vector.load %arg3[%c0_1, %c0_2] : memref<64x512xbf16, #tpu.memory_space<vmem>>, vector<64x512xbf16>
    %cst = arith.constant dense<0.000000e+00> : vector<16x512xf32>
    %2 = tpu.matmul %0, %1, %cst {dimension_numbers = #tpu.dot_dimension_numbers<[1], [0], [0], [1], [0, 0, 1, 1], [], []>} : vector<16x64xbf16>, vector<64x512xbf16>, vector<16x512xf32> -> vector<16x512xf32>
    %3 = arith.truncf %2 : vector<16x512xf32> to vector<16x512xbf16>
    %c0_3 = arith.constant 0 : index
    %c0_4 = arith.constant 0 : index
    %4 = vector.load %arg4[%c0_3, %c0_4] : memref<16x512xbf16, #tpu.memory_space<vmem>>, vector<16x512xbf16>
    tpu.vector_store %arg4[%c0_3, %c0_4], %3 {strides = array<i32>} : memref<16x512xbf16, #tpu.memory_space<vmem>>, vector<16x512xbf16>,
    return
  }
  func.func @transform_0(%arg0: i32, %arg1: i32) -> (i32, i32) {
    %c0_i32 = arith.constant 0 : i32
    %c0_i32_0 = arith.constant 0 : i32
    return %arg0, %c0_i32 : i32, i32
  }
  func.func @transform_1(%arg0: i32, %arg1: i32) -> (i32, i32) {
    %c0_i32 = arith.constant 0 : i32
    %c0_i32_0 = arith.constant 0 : i32
    return %c0_i32, %arg1 : i32, i32
  }
  func.func @transform_2(%arg0: i32, %arg1: i32) -> (i32, i32) {
    %c0_i32 = arith.constant 0 : i32
    return %arg0, %arg1 : i32, i32
  }
}

module attributes {stable_mosaic.version = 11 : i64} {
  func.func @kernel(%arg0: i32, %arg1: memref<8x256xbf16, #tpu.memory_space<vmem>>, %arg2: memref<1x256xf32, #tpu.memory_space<vmem>>, %arg3: memref<1x256xf32, #tpu.memory_space<vmem>>) attributes {dimension_semantics = [#tpu.dimension_semantics<arbitrary>], iteration_bounds = array<i64: 2>, scalar_prefetch = 0 : i64, scratch_operands = 0 : i64, tpu.core_type = #tpu.core_type<tc>, window_params = [{transform_indices = @transform_0, window_bounds = array<i64: 8, 256>}, {pipeline_mode = #tpu.pipeline_mode<synchronous>, transform_indices = @transform_1, window_bounds = array<i64: 1, 256>}, {pipeline_mode = #tpu.pipeline_mode<synchronous>, transform_indices = @transform_2, window_bounds = array<i64: 1, 256>}]} {
    %c0_i32 = arith.constant 0 : i32
    %0 = arith.cmpi eq, %arg0, %c0_i32 : i32
    %1 = arith.extui %0 : i1 to i32
    %c0_i32_0 = arith.constant 0 : i32
    %2 = arith.cmpi ne, %1, %c0_i32_0 : i32
    scf.if %2 {
      %cst_11 = arith.constant 0.000000e+00 : f32
      %16 = vector.broadcast %cst_11 : f32 to vector<1x256xf32>
      %c0_12 = arith.constant 0 : index
      %c0_13 = arith.constant 0 : index
      %17 = vector.load %arg2[%c0_12, %c0_13] : memref<1x256xf32, #tpu.memory_space<vmem>>, vector<1x256xf32>
      tpu.vector_store %arg2[%c0_12, %c0_13], %16 {strides = array<i32>} : memref<1x256xf32, #tpu.memory_space<vmem>>, vector<1x256xf32>,
      %cst_14 = arith.constant 0.000000e+00 : f32
      %18 = vector.broadcast %cst_14 : f32 to vector<1x256xf32>
      %c0_15 = arith.constant 0 : index
      %c0_16 = arith.constant 0 : index
      %19 = vector.load %arg3[%c0_15, %c0_16] : memref<1x256xf32, #tpu.memory_space<vmem>>, vector<1x256xf32>
      tpu.vector_store %arg3[%c0_15, %c0_16], %18 {strides = array<i32>} : memref<1x256xf32, #tpu.memory_space<vmem>>, vector<1x256xf32>,
    } else {
    }
    %c0 = arith.constant 0 : index
    %c0_1 = arith.constant 0 : index
    %3 = vector.load %arg1[%c0, %c0_1] : memref<8x256xbf16, #tpu.memory_space<vmem>>, vector<8x256xbf16>
    %4 = arith.extf %3 : vector<8x256xbf16> to vector<8x256xf32>
    %c0_2 = arith.constant 0 : index
    %c0_3 = arith.constant 0 : index
    %5 = vector.load %arg2[%c0_2, %c0_3] : memref<1x256xf32, #tpu.memory_space<vmem>>, vector<1x256xf32>
    %cst = arith.constant dense<0.000000e+00> : vector<256xf32>
    %6 = vector.multi_reduction <add>, %4, %cst [0] : vector<8x256xf32> to vector<256xf32>
    %7 = vector.shape_cast %6 : vector<256xf32> to vector<1x256xf32>
    %8 = arith.addf %5, %7 : vector<1x256xf32>
    %c0_4 = arith.constant 0 : index
    %c0_5 = arith.constant 0 : index
    %9 = vector.load %arg2[%c0_4, %c0_5] : memref<1x256xf32, #tpu.memory_space<vmem>>, vector<1x256xf32>
    tpu.vector_store %arg2[%c0_4, %c0_5], %8 {strides = array<i32>} : memref<1x256xf32, #tpu.memory_space<vmem>>, vector<1x256xf32>,
    %c0_6 = arith.constant 0 : index
    %c0_7 = arith.constant 0 : index
    %10 = vector.load %arg3[%c0_6, %c0_7] : memref<1x256xf32, #tpu.memory_space<vmem>>, vector<1x256xf32>
    %11 = arith.mulf %4, %4 : vector<8x256xf32>
    %cst_8 = arith.constant dense<0.000000e+00> : vector<256xf32>
    %12 = vector.multi_reduction <add>, %11, %cst_8 [0] : vector<8x256xf32> to vector<256xf32>
    %13 = vector.shape_cast %12 : vector<256xf32> to vector<1x256xf32>
    %14 = arith.addf %10, %13 : vector<1x256xf32>
    %c0_9 = arith.constant 0 : index
    %c0_10 = arith.constant 0 : index
    %15 = vector.load %arg3[%c0_9, %c0_10] : memref<1x256xf32, #tpu.memory_space<vmem>>, vector<1x256xf32>
    tpu.vector_store %arg3[%c0_9, %c0_10], %14 {strides = array<i32>} : memref<1x256xf32, #tpu.memory_space<vmem>>, vector<1x256xf32>,
    return
  }
  func.func @transform_0(%arg0: i32) -> (i32, i32) {
    %c0_i32 = arith.constant 0 : i32
    %c0_i32_0 = arith.constant 0 : i32
    return %arg0, %c0_i32 : i32, i32
  }
  func.func @transform_1(%arg0: i32) -> (i32, i32) {
    %c0_i32 = arith.constant 0 : i32
    %c0_i32_0 = arith.constant 0 : i32
    %c0_i32_1 = arith.constant 0 : i32
    return %c0_i32, %c0_i32_0 : i32, i32
  }
  func.func @transform_2(%arg0: i32) -> (i32, i32) {
    %c0_i32 = arith.constant 0 : i32
    %c0_i32_0 = arith.constant 0 : i32
    %c0_i32_1 = arith.constant 0 : i32
    return %c0_i32, %c0_i32_0 : i32, i32
  }
}

module attributes {stable_mosaic.version = 11 : i64} {
  func.func @kernel(%arg0: i32, %arg1: i32, %arg2: memref<64x32xbf16, #tpu.memory_space<vmem>>, %arg3: memref<32x256xbf16, #tpu.memory_space<vmem>>, %arg4: memref<1x32xf32, #tpu.memory_space<vmem>>, %arg5: memref<1x32xf32, #tpu.memory_space<vmem>>, %arg6: memref<64x256xbf16, #tpu.memory_space<vmem>>) attributes {dimension_semantics = [#tpu.dimension_semantics<parallel>, #tpu.dimension_semantics<parallel>], iteration_bounds = array<i64: 2, 1>, scalar_prefetch = 0 : i64, scratch_operands = 0 : i64, tpu.core_type = #tpu.core_type<tc>, window_params = [{transform_indices = @transform_0, window_bounds = array<i64: 64, 32>}, {transform_indices = @transform_1, window_bounds = array<i64: 32, 256>}, {pipeline_mode = #tpu.pipeline_mode<synchronous>, transform_indices = @transform_2, window_bounds = array<i64: 1, 32>}, {pipeline_mode = #tpu.pipeline_mode<synchronous>, transform_indices = @transform_3, window_bounds = array<i64: 1, 32>}, {transform_indices = @transform_4, window_bounds = array<i64: 64, 256>}]} {
    %c0 = arith.constant 0 : index
    %c0_0 = arith.constant 0 : index
    %0 = vector.load %arg2[%c0, %c0_0] : memref<64x32xbf16, #tpu.memory_space<vmem>>, vector<64x32xbf16>
    %1 = arith.extf %0 : vector<64x32xbf16> to vector<64x32xf32>
    %c0_1 = arith.constant 0 : index
    %c0_2 = arith.constant 0 : index
    %2 = vector.load %arg4[%c0_1, %c0_2] : memref<1x32xf32, #tpu.memory_space<vmem>>, vector<1x32xf32>
    %3 = vector.broadcast %2 : vector<1x32xf32> to vector<64x32xf32>
    %4 = arith.mulf %1, %3 : vector<64x32xf32>
    %c0_3 = arith.constant 0 : index
    %c0_4 = arith.constant 0 : index
    %5 = vector.load %arg5[%c0_3, %c0_4] : memref<1x32xf32, #tpu.memory_space<vmem>>, vector<1x32xf32>
    %6 = vector.broadcast %5 : vector<1x32xf32> to vector<64x32xf32>
    %7 = arith.addf %4, %6 : vector<64x32xf32>
    %cst = arith.constant 0.000000e+00 : f32
    %8 = vector.broadcast %cst : f32 to vector<64x32xf32>
    %9 = arith.maximumf %7, %8 : vector<64x32xf32>
    %10 = arith.truncf %9 : vector<64x32xf32> to vector<64x32xbf16>
    %c0_5 = arith.constant 0 : index
    %c0_6 = arith.constant 0 : index
    %11 = vector.load %arg3[%c0_5, %c0_6] : memref<32x256xbf16, #tpu.memory_space<vmem>>, vector<32x256xbf16>
    %cst_7 = arith.constant dense<0.000000e+00> : vector<64x256xf32>
    %12 = tpu.matmul %10, %11, %cst_7 {dimension_numbers = #tpu.dot_dimension_numbers<[1], [0], [0], [1], [0, 0, 1, 1], [], []>} : vector<64x32xbf16>, vector<32x256xbf16>, vector<64x256xf32> -> vector<64x256xf32>
    %13 = arith.truncf %12 : vector<64x256xf32> to vector<64x256xbf16>
    %c0_8 = arith.constant 0 : index
    %c0_9 = arith.constant 0 : index
    %14 = vector.load %arg6[%c0_8, %c0_9] : memref<64x256xbf16, #tpu.memory_space<vmem>>, vector<64x256xbf16>
    tpu.vector_store %arg6[%c0_8, %c0_9], %13 {strides = array<i32>} : memref<64x256xbf16, #tpu.memory_space<vmem>>, vector<64x256xbf16>,
    return
  }
  func.func @transform_0(%arg0: i32, %arg1: i32) -> (i32, i32) {
    %c0_i32 = arith.constant 0 : i32
    %c0_i32_0 = arith.constant 0 : i32
    return %arg0, %c0_i32 : i32, i32
  }
  func.func @transform_1(%arg0: i32, %arg1: i32) -> (i32, i32) {
    %c0_i32 = arith.constant 0 : i32
    %c0_i32_0 = arith.constant 0 : i32
    return %c0_i32, %arg1 : i32, i32
  }
  func.func @transform_2(%arg0: i32, %arg1: i32) -> (i32, i32) {
    %c0_i32 = arith.constant 0 : i32
    %c0_i32_0 = arith.constant 0 : i32
    %c0_i32_1 = arith.constant 0 : i32
    return %c0_i32, %c0_i32_0 : i32, i32
  }
  func.func @transform_3(%arg0: i32, %arg1: i32) -> (i32, i32) {
    %c0_i32 = arith.constant 0 : i32
    %c0_i32_0 = arith.constant 0 : i32
    %c0_i32_1 = arith.constant 0 : i32
    return %c0_i32, %c0_i32_0 : i32, i32
  }
  func.func @transform_4(%arg0: i32, %arg1: i32) -> (i32, i32) {
    %c0_i32 = arith.constant 0 : i32
    return %arg0, %arg1 : i32, i32
  }
}

module attributes {stable_mosaic.version = 11 : i64} {
  func.func @kernel(%arg0: i32, %arg1: memref<16x256xbf16, #tpu.memory_space<vmem>>, %arg2: memref<1x256xf32, #tpu.memory_space<vmem>>, %arg3: memref<1x256xf32, #tpu.memory_space<vmem>>) attributes {dimension_semantics = [#tpu.dimension_semantics<arbitrary>], iteration_bounds = array<i64: 2>, scalar_prefetch = 0 : i64, scratch_operands = 0 : i64, tpu.core_type = #tpu.core_type<tc>, window_params = [{transform_indices = @transform_0, window_bounds = array<i64: 16, 256>}, {pipeline_mode = #tpu.pipeline_mode<synchronous>, transform_indices = @transform_1, window_bounds = array<i64: 1, 256>}, {pipeline_mode = #tpu.pipeline_mode<synchronous>, transform_indices = @transform_2, window_bounds = array<i64: 1, 256>}]} {
    %c0_i32 = arith.constant 0 : i32
    %0 = arith.cmpi eq, %arg0, %c0_i32 : i32
    %1 = arith.extui %0 : i1 to i32
    %c0_i32_0 = arith.constant 0 : i32
    %2 = arith.cmpi ne, %1, %c0_i32_0 : i32
    scf.if %2 {
      %cst_11 = arith.constant 0.000000e+00 : f32
      %16 = vector.broadcast %cst_11 : f32 to vector<1x256xf32>
      %c0_12 = arith.constant 0 : index
      %c0_13 = arith.constant 0 : index
      %17 = vector.load %arg2[%c0_12, %c0_13] : memref<1x256xf32, #tpu.memory_space<vmem>>, vector<1x256xf32>
      tpu.vector_store %arg2[%c0_12, %c0_13], %16 {strides = array<i32>} : memref<1x256xf32, #tpu.memory_space<vmem>>, vector<1x256xf32>,
      %cst_14 = arith.constant 0.000000e+00 : f32
      %18 = vector.broadcast %cst_14 : f32 to vector<1x256xf32>
      %c0_15 = arith.constant 0 : index
      %c0_16 = arith.constant 0 : index
      %19 = vector.load %arg3[%c0_15, %c0_16] : memref<1x256xf32, #tpu.memory_space<vmem>>, vector<1x256xf32>
      tpu.vector_store %arg3[%c0_15, %c0_16], %18 {strides = array<i32>} : memref<1x256xf32, #tpu.memory_space<vmem>>, vector<1x256xf32>,
    } else {
    }
    %c0 = arith.constant 0 : index
    %c0_1 = arith.constant 0 : index
    %3 = vector.load %arg1[%c0, %c0_1] : memref<16x256xbf16, #tpu.memory_space<vmem>>, vector<16x256xbf16>
    %4 = arith.extf %3 : vector<16x256xbf16> to vector<16x256xf32>
    %c0_2 = arith.constant 0 : index
    %c0_3 = arith.constant 0 : index
    %5 = vector.load %arg2[%c0_2, %c0_3] : memref<1x256xf32, #tpu.memory_space<vmem>>, vector<1x256xf32>
    %cst = arith.constant dense<0.000000e+00> : vector<256xf32>
    %6 = vector.multi_reduction <add>, %4, %cst [0] : vector<16x256xf32> to vector<256xf32>
    %7 = vector.shape_cast %6 : vector<256xf32> to vector<1x256xf32>
    %8 = arith.addf %5, %7 : vector<1x256xf32>
    %c0_4 = arith.constant 0 : index
    %c0_5 = arith.constant 0 : index
    %9 = vector.load %arg2[%c0_4, %c0_5] : memref<1x256xf32, #tpu.memory_space<vmem>>, vector<1x256xf32>
    tpu.vector_store %arg2[%c0_4, %c0_5], %8 {strides = array<i32>} : memref<1x256xf32, #tpu.memory_space<vmem>>, vector<1x256xf32>,
    %c0_6 = arith.constant 0 : index
    %c0_7 = arith.constant 0 : index
    %10 = vector.load %arg3[%c0_6, %c0_7] : memref<1x256xf32, #tpu.memory_space<vmem>>, vector<1x256xf32>
    %11 = arith.mulf %4, %4 : vector<16x256xf32>
    %cst_8 = arith.constant dense<0.000000e+00> : vector<256xf32>
    %12 = vector.multi_reduction <add>, %11, %cst_8 [0] : vector<16x256xf32> to vector<256xf32>
    %13 = vector.shape_cast %12 : vector<256xf32> to vector<1x256xf32>
    %14 = arith.addf %10, %13 : vector<1x256xf32>
    %c0_9 = arith.constant 0 : index
    %c0_10 = arith.constant 0 : index
    %15 = vector.load %arg3[%c0_9, %c0_10] : memref<1x256xf32, #tpu.memory_space<vmem>>, vector<1x256xf32>
    tpu.vector_store %arg3[%c0_9, %c0_10], %14 {strides = array<i32>} : memref<1x256xf32, #tpu.memory_space<vmem>>, vector<1x256xf32>,
    return
  }
  func.func @transform_0(%arg0: i32) -> (i32, i32) {
    %c0_i32 = arith.constant 0 : i32
    %c0_i32_0 = arith.constant 0 : i32
    return %arg0, %c0_i32 : i32, i32
  }
  func.func @transform_1(%arg0: i32) -> (i32, i32) {
    %c0_i32 = arith.constant 0 : i32
    %c0_i32_0 = arith.constant 0 : i32
    %c0_i32_1 = arith.constant 0 : i32
    return %c0_i32, %c0_i32_0 : i32, i32
  }
  func.func @transform_2(%arg0: i32) -> (i32, i32) {
    %c0_i32 = arith.constant 0 : i32
    %c0_i32_0 = arith.constant 0 : i32
    %c0_i32_1 = arith.constant 0 : i32
    return %c0_i32, %c0_i32_0 : i32, i32
  }
}

module attributes {stable_mosaic.version = 11 : i64} {
  func.func @kernel(%arg0: i32, %arg1: i32, %arg2: memref<256x16xbf16, #tpu.memory_space<vmem>>, %arg3: memref<16x128xbf16, #tpu.memory_space<vmem>>, %arg4: memref<1x16xf32, #tpu.memory_space<vmem>>, %arg5: memref<1x16xf32, #tpu.memory_space<vmem>>, %arg6: memref<256x128xbf16, #tpu.memory_space<vmem>>) attributes {dimension_semantics = [#tpu.dimension_semantics<parallel>, #tpu.dimension_semantics<parallel>], iteration_bounds = array<i64: 2, 1>, scalar_prefetch = 0 : i64, scratch_operands = 0 : i64, tpu.core_type = #tpu.core_type<tc>, window_params = [{transform_indices = @transform_0, window_bounds = array<i64: 256, 16>}, {transform_indices = @transform_1, window_bounds = array<i64: 16, 128>}, {pipeline_mode = #tpu.pipeline_mode<synchronous>, transform_indices = @transform_2, window_bounds = array<i64: 1, 16>}, {pipeline_mode = #tpu.pipeline_mode<synchronous>, transform_indices = @transform_3, window_bounds = array<i64: 1, 16>}, {transform_indices = @transform_4, window_bounds = array<i64: 256, 128>}]} {
    %c0 = arith.constant 0 : index
    %c0_0 = arith.constant 0 : index
    %0 = vector.load %arg2[%c0, %c0_0] : memref<256x16xbf16, #tpu.memory_space<vmem>>, vector<256x16xbf16>
    %1 = arith.extf %0 : vector<256x16xbf16> to vector<256x16xf32>
    %c0_1 = arith.constant 0 : index
    %c0_2 = arith.constant 0 : index
    %2 = vector.load %arg4[%c0_1, %c0_2] : memref<1x16xf32, #tpu.memory_space<vmem>>, vector<1x16xf32>
    %3 = vector.broadcast %2 : vector<1x16xf32> to vector<256x16xf32>
    %4 = arith.mulf %1, %3 : vector<256x16xf32>
    %c0_3 = arith.constant 0 : index
    %c0_4 = arith.constant 0 : index
    %5 = vector.load %arg5[%c0_3, %c0_4] : memref<1x16xf32, #tpu.memory_space<vmem>>, vector<1x16xf32>
    %6 = vector.broadcast %5 : vector<1x16xf32> to vector<256x16xf32>
    %7 = arith.addf %4, %6 : vector<256x16xf32>
    %cst = arith.constant 0.000000e+00 : f32
    %8 = vector.broadcast %cst : f32 to vector<256x16xf32>
    %9 = arith.maximumf %7, %8 : vector<256x16xf32>
    %10 = arith.truncf %9 : vector<256x16xf32> to vector<256x16xbf16>
    %c0_5 = arith.constant 0 : index
    %c0_6 = arith.constant 0 : index
    %11 = vector.load %arg3[%c0_5, %c0_6] : memref<16x128xbf16, #tpu.memory_space<vmem>>, vector<16x128xbf16>
    %cst_7 = arith.constant dense<0.000000e+00> : vector<256x128xf32>
    %12 = tpu.matmul %10, %11, %cst_7 {dimension_numbers = #tpu.dot_dimension_numbers<[1], [0], [0], [1], [0, 0, 1, 1], [], []>} : vector<256x16xbf16>, vector<16x128xbf16>, vector<256x128xf32> -> vector<256x128xf32>
    %13 = arith.truncf %12 : vector<256x128xf32> to vector<256x128xbf16>
    %c0_8 = arith.constant 0 : index
    %c0_9 = arith.constant 0 : index
    %14 = vector.load %arg6[%c0_8, %c0_9] : memref<256x128xbf16, #tpu.memory_space<vmem>>, vector<256x128xbf16>
    tpu.vector_store %arg6[%c0_8, %c0_9], %13 {strides = array<i32>} : memref<256x128xbf16, #tpu.memory_space<vmem>>, vector<256x128xbf16>,
    return
  }
  func.func @transform_0(%arg0: i32, %arg1: i32) -> (i32, i32) {
    %c0_i32 = arith.constant 0 : i32
    %c0_i32_0 = arith.constant 0 : i32
    return %arg0, %c0_i32 : i32, i32
  }
  func.func @transform_1(%arg0: i32, %arg1: i32) -> (i32, i32) {
    %c0_i32 = arith.constant 0 : i32
    %c0_i32_0 = arith.constant 0 : i32
    return %c0_i32, %arg1 : i32, i32
  }
  func.func @transform_2(%arg0: i32, %arg1: i32) -> (i32, i32) {
    %c0_i32 = arith.constant 0 : i32
    %c0_i32_0 = arith.constant 0 : i32
    %c0_i32_1 = arith.constant 0 : i32
    return %c0_i32, %c0_i32_0 : i32, i32
  }
  func.func @transform_3(%arg0: i32, %arg1: i32) -> (i32, i32) {
    %c0_i32 = arith.constant 0 : i32
    %c0_i32_0 = arith.constant 0 : i32
    %c0_i32_1 = arith.constant 0 : i32
    return %c0_i32, %c0_i32_0 : i32, i32
  }
  func.func @transform_4(%arg0: i32, %arg1: i32) -> (i32, i32) {
    %c0_i32 = arith.constant 0 : i32
    return %arg0, %arg1 : i32, i32
  }
}

module attributes {stable_mosaic.version = 11 : i64} {
  func.func @kernel(%arg0: i32, %arg1: memref<32x256xbf16, #tpu.memory_space<vmem>>, %arg2: memref<1x256xf32, #tpu.memory_space<vmem>>, %arg3: memref<1x256xf32, #tpu.memory_space<vmem>>) attributes {dimension_semantics = [#tpu.dimension_semantics<arbitrary>], iteration_bounds = array<i64: 2>, scalar_prefetch = 0 : i64, scratch_operands = 0 : i64, tpu.core_type = #tpu.core_type<tc>, window_params = [{transform_indices = @transform_0, window_bounds = array<i64: 32, 256>}, {pipeline_mode = #tpu.pipeline_mode<synchronous>, transform_indices = @transform_1, window_bounds = array<i64: 1, 256>}, {pipeline_mode = #tpu.pipeline_mode<synchronous>, transform_indices = @transform_2, window_bounds = array<i64: 1, 256>}]} {
    %c0_i32 = arith.constant 0 : i32
    %0 = arith.cmpi eq, %arg0, %c0_i32 : i32
    %1 = arith.extui %0 : i1 to i32
    %c0_i32_0 = arith.constant 0 : i32
    %2 = arith.cmpi ne, %1, %c0_i32_0 : i32
    scf.if %2 {
      %cst_11 = arith.constant 0.000000e+00 : f32
      %16 = vector.broadcast %cst_11 : f32 to vector<1x256xf32>
      %c0_12 = arith.constant 0 : index
      %c0_13 = arith.constant 0 : index
      %17 = vector.load %arg2[%c0_12, %c0_13] : memref<1x256xf32, #tpu.memory_space<vmem>>, vector<1x256xf32>
      tpu.vector_store %arg2[%c0_12, %c0_13], %16 {strides = array<i32>} : memref<1x256xf32, #tpu.memory_space<vmem>>, vector<1x256xf32>,
      %cst_14 = arith.constant 0.000000e+00 : f32
      %18 = vector.broadcast %cst_14 : f32 to vector<1x256xf32>
      %c0_15 = arith.constant 0 : index
      %c0_16 = arith.constant 0 : index
      %19 = vector.load %arg3[%c0_15, %c0_16] : memref<1x256xf32, #tpu.memory_space<vmem>>, vector<1x256xf32>
      tpu.vector_store %arg3[%c0_15, %c0_16], %18 {strides = array<i32>} : memref<1x256xf32, #tpu.memory_space<vmem>>, vector<1x256xf32>,
    } else {
    }
    %c0 = arith.constant 0 : index
    %c0_1 = arith.constant 0 : index
    %3 = vector.load %arg1[%c0, %c0_1] : memref<32x256xbf16, #tpu.memory_space<vmem>>, vector<32x256xbf16>
    %4 = arith.extf %3 : vector<32x256xbf16> to vector<32x256xf32>
    %c0_2 = arith.constant 0 : index
    %c0_3 = arith.constant 0 : index
    %5 = vector.load %arg2[%c0_2, %c0_3] : memref<1x256xf32, #tpu.memory_space<vmem>>, vector<1x256xf32>
    %cst = arith.constant dense<0.000000e+00> : vector<256xf32>
    %6 = vector.multi_reduction <add>, %4, %cst [0] : vector<32x256xf32> to vector<256xf32>
    %7 = vector.shape_cast %6 : vector<256xf32> to vector<1x256xf32>
    %8 = arith.addf %5, %7 : vector<1x256xf32>
    %c0_4 = arith.constant 0 : index
    %c0_5 = arith.constant 0 : index
    %9 = vector.load %arg2[%c0_4, %c0_5] : memref<1x256xf32, #tpu.memory_space<vmem>>, vector<1x256xf32>
    tpu.vector_store %arg2[%c0_4, %c0_5], %8 {strides = array<i32>} : memref<1x256xf32, #tpu.memory_space<vmem>>, vector<1x256xf32>,
    %c0_6 = arith.constant 0 : index
    %c0_7 = arith.constant 0 : index
    %10 = vector.load %arg3[%c0_6, %c0_7] : memref<1x256xf32, #tpu.memory_space<vmem>>, vector<1x256xf32>
    %11 = arith.mulf %4, %4 : vector<32x256xf32>
    %cst_8 = arith.constant dense<0.000000e+00> : vector<256xf32>
    %12 = vector.multi_reduction <add>, %11, %cst_8 [0] : vector<32x256xf32> to vector<256xf32>
    %13 = vector.shape_cast %12 : vector<256xf32> to vector<1x256xf32>
    %14 = arith.addf %10, %13 : vector<1x256xf32>
    %c0_9 = arith.constant 0 : index
    %c0_10 = arith.constant 0 : index
    %15 = vector.load %arg3[%c0_9, %c0_10] : memref<1x256xf32, #tpu.memory_space<vmem>>, vector<1x256xf32>
    tpu.vector_store %arg3[%c0_9, %c0_10], %14 {strides = array<i32>} : memref<1x256xf32, #tpu.memory_space<vmem>>, vector<1x256xf32>,
    return
  }
  func.func @transform_0(%arg0: i32) -> (i32, i32) {
    %c0_i32 = arith.constant 0 : i32
    %c0_i32_0 = arith.constant 0 : i32
    return %arg0, %c0_i32 : i32, i32
  }
  func.func @transform_1(%arg0: i32) -> (i32, i32) {
    %c0_i32 = arith.constant 0 : i32
    %c0_i32_0 = arith.constant 0 : i32
    %c0_i32_1 = arith.constant 0 : i32
    return %c0_i32, %c0_i32_0 : i32, i32
  }
  func.func @transform_2(%arg0: i32) -> (i32, i32) {
    %c0_i32 = arith.constant 0 : i32
    %c0_i32_0 = arith.constant 0 : i32
    %c0_i32_1 = arith.constant 0 : i32
    return %c0_i32, %c0_i32_0 : i32, i32
  }
}

module attributes {stable_mosaic.version = 11 : i64} {
  func.func @kernel(%arg0: i32, %arg1: i32, %arg2: memref<1024x8xbf16, #tpu.memory_space<vmem>>, %arg3: memref<8x128xbf16, #tpu.memory_space<vmem>>, %arg4: memref<1x8xf32, #tpu.memory_space<vmem>>, %arg5: memref<1x8xf32, #tpu.memory_space<vmem>>, %arg6: memref<1024x128xbf16, #tpu.memory_space<vmem>>) attributes {dimension_semantics = [#tpu.dimension_semantics<parallel>, #tpu.dimension_semantics<parallel>], iteration_bounds = array<i64: 2, 1>, scalar_prefetch = 0 : i64, scratch_operands = 0 : i64, tpu.core_type = #tpu.core_type<tc>, window_params = [{transform_indices = @transform_0, window_bounds = array<i64: 1024, 8>}, {transform_indices = @transform_1, window_bounds = array<i64: 8, 128>}, {pipeline_mode = #tpu.pipeline_mode<synchronous>, transform_indices = @transform_2, window_bounds = array<i64: 1, 8>}, {pipeline_mode = #tpu.pipeline_mode<synchronous>, transform_indices = @transform_3, window_bounds = array<i64: 1, 8>}, {transform_indices = @transform_4, window_bounds = array<i64: 1024, 128>}]} {
    %c0 = arith.constant 0 : index
    %c0_0 = arith.constant 0 : index
    %0 = vector.load %arg2[%c0, %c0_0] : memref<1024x8xbf16, #tpu.memory_space<vmem>>, vector<1024x8xbf16>
    %1 = arith.extf %0 : vector<1024x8xbf16> to vector<1024x8xf32>
    %c0_1 = arith.constant 0 : index
    %c0_2 = arith.constant 0 : index
    %2 = vector.load %arg4[%c0_1, %c0_2] : memref<1x8xf32, #tpu.memory_space<vmem>>, vector<1x8xf32>
    %3 = vector.broadcast %2 : vector<1x8xf32> to vector<1024x8xf32>
    %4 = arith.mulf %1, %3 : vector<1024x8xf32>
    %c0_3 = arith.constant 0 : index
    %c0_4 = arith.constant 0 : index
    %5 = vector.load %arg5[%c0_3, %c0_4] : memref<1x8xf32, #tpu.memory_space<vmem>>, vector<1x8xf32>
    %6 = vector.broadcast %5 : vector<1x8xf32> to vector<1024x8xf32>
    %7 = arith.addf %4, %6 : vector<1024x8xf32>
    %cst = arith.constant 0.000000e+00 : f32
    %8 = vector.broadcast %cst : f32 to vector<1024x8xf32>
    %9 = arith.maximumf %7, %8 : vector<1024x8xf32>
    %10 = arith.truncf %9 : vector<1024x8xf32> to vector<1024x8xbf16>
    %c0_5 = arith.constant 0 : index
    %c0_6 = arith.constant 0 : index
    %11 = vector.load %arg3[%c0_5, %c0_6] : memref<8x128xbf16, #tpu.memory_space<vmem>>, vector<8x128xbf16>
    %cst_7 = arith.constant dense<0.000000e+00> : vector<1024x128xf32>
    %12 = tpu.matmul %10, %11, %cst_7 {dimension_numbers = #tpu.dot_dimension_numbers<[1], [0], [0], [1], [0, 0, 1, 1], [], []>} : vector<1024x8xbf16>, vector<8x128xbf16>, vector<1024x128xf32> -> vector<1024x128xf32>
    %13 = arith.truncf %12 : vector<1024x128xf32> to vector<1024x128xbf16>
    %c0_8 = arith.constant 0 : index
    %c0_9 = arith.constant 0 : index
    %14 = vector.load %arg6[%c0_8, %c0_9] : memref<1024x128xbf16, #tpu.memory_space<vmem>>, vector<1024x128xbf16>
    tpu.vector_store %arg6[%c0_8, %c0_9], %13 {strides = array<i32>} : memref<1024x128xbf16, #tpu.memory_space<vmem>>, vector<1024x128xbf16>,
    return
  }
  func.func @transform_0(%arg0: i32, %arg1: i32) -> (i32, i32) {
    %c0_i32 = arith.constant 0 : i32
    %c0_i32_0 = arith.constant 0 : i32
    return %arg0, %c0_i32 : i32, i32
  }
  func.func @transform_1(%arg0: i32, %arg1: i32) -> (i32, i32) {
    %c0_i32 = arith.constant 0 : i32
    %c0_i32_0 = arith.constant 0 : i32
    return %c0_i32, %arg1 : i32, i32
  }
  func.func @transform_2(%arg0: i32, %arg1: i32) -> (i32, i32) {
    %c0_i32 = arith.constant 0 : i32
    %c0_i32_0 = arith.constant 0 : i32
    %c0_i32_1 = arith.constant 0 : i32
    return %c0_i32, %c0_i32_0 : i32, i32
  }
  func.func @transform_3(%arg0: i32, %arg1: i32) -> (i32, i32) {
    %c0_i32 = arith.constant 0 : i32
    %c0_i32_0 = arith.constant 0 : i32
    %c0_i32_1 = arith.constant 0 : i32
    return %c0_i32, %c0_i32_0 : i32, i32
  }
  func.func @transform_4(%arg0: i32, %arg1: i32) -> (i32, i32) {
    %c0_i32 = arith.constant 0 : i32
    return %arg0, %arg1 : i32, i32
  }
}

module attributes {stable_mosaic.version = 11 : i64} {
  func.func @kernel(%arg0: i32, %arg1: memref<64x512xbf16, #tpu.memory_space<vmem>>, %arg2: memref<1x512xf32, #tpu.memory_space<vmem>>, %arg3: memref<64x512xf32, #tpu.memory_space<vmem>>) attributes {dimension_semantics = [#tpu.dimension_semantics<parallel>], iteration_bounds = array<i64: 2>, scalar_prefetch = 0 : i64, scratch_operands = 0 : i64, tpu.core_type = #tpu.core_type<tc>, window_params = [{transform_indices = @transform_0, window_bounds = array<i64: 64, 512>}, {pipeline_mode = #tpu.pipeline_mode<synchronous>, transform_indices = @transform_1, window_bounds = array<i64: 1, 512>}, {transform_indices = @transform_2, window_bounds = array<i64: 64, 512>}]} {
    %c0 = arith.constant 0 : index
    %c0_0 = arith.constant 0 : index
    %0 = vector.load %arg1[%c0, %c0_0] : memref<64x512xbf16, #tpu.memory_space<vmem>>, vector<64x512xbf16>
    %1 = arith.extf %0 : vector<64x512xbf16> to vector<64x512xf32>
    %c0_1 = arith.constant 0 : index
    %c0_2 = arith.constant 0 : index
    %2 = vector.load %arg2[%c0_1, %c0_2] : memref<1x512xf32, #tpu.memory_space<vmem>>, vector<1x512xf32>
    %3 = vector.broadcast %2 : vector<1x512xf32> to vector<64x512xf32>
    %4 = arith.addf %1, %3 : vector<64x512xf32>
    %5 = math.tanh %4 : vector<64x512xf32>
    %c0_3 = arith.constant 0 : index
    %c0_4 = arith.constant 0 : index
    %6 = vector.load %arg3[%c0_3, %c0_4] : memref<64x512xf32, #tpu.memory_space<vmem>>, vector<64x512xf32>
    tpu.vector_store %arg3[%c0_3, %c0_4], %5 {strides = array<i32>} : memref<64x512xf32, #tpu.memory_space<vmem>>, vector<64x512xf32>,
    return
  }
  func.func @transform_0(%arg0: i32) -> (i32, i32) {
    %c0_i32 = arith.constant 0 : i32
    %c0_i32_0 = arith.constant 0 : i32
    return %arg0, %c0_i32 : i32, i32
  }
  func.func @transform_1(%arg0: i32) -> (i32, i32) {
    %c0_i32 = arith.constant 0 : i32
    %c0_i32_0 = arith.constant 0 : i32
    %c0_i32_1 = arith.constant 0 : i32
    return %c0_i32, %c0_i32_0 : i32, i32
  }
  func.func @transform_2(%arg0: i32) -> (i32, i32) {
    %c0_i32 = arith.constant 0 : i32
    %c0_i32_0 = arith.constant 0 : i32
    return %arg0, %c0_i32 : i32, i32
  }
}

</mosaic_0001>

<llo_original>
// kernel: generator_forward.9
$region0: #{generator_forward.9}
  #allocation0 [shape = 'u32[]', space=smem, size = 0x4, offset = 0x4, fixed_abs, tag = 'smem constant byte address 0x4 - core index']
  #allocation1 [shape = 'u32[144,128]{1,0:T(1,128)}', space=vmem, size = 0x12000, scoped, tag = 'internal scratch']
  %s0 = inlined_call_operand.hbm [shape: f32[2,32], index: 0, kind: input, shape index: {}]
  %s1 = inlined_call_operand.hbm [shape: bf16[32,1024], index: 1, kind: input, shape index: {}]
  %s2 = inlined_call_operand.hbm [shape: f32[1,1024], index: 2, kind: input, shape index: {}]
  %s3 = inlined_call_operand.vmem [shape: bf16[2,1024], index: 3, kind: output, shape index: {}]
  %s4 = sld [smem:[#allocation0]]
  $region57: #{generator_forward.9} parent=0
    _
  %s6 = ssub.s32 1, %s4
  %s7 = scalar_select 0, %s6, %s4
  $region1: #{generator_forward.9} parent=0
    #allocation2 [shape = 'u8[1024]{0}', space=vmem, size = 0x400, scoped, tag = 'input window, operand 0, single buffered']
    #allocation3 [shape = 's32[2]{0}', space=sflag, size = 0x8, scoped, tag = 'scoped memory for generator_forward.9']
    #allocation4 [shape = 'u8[65536]{0}', space=vmem, size = 0x10000, scoped, tag = 'input window, operand 1']
    #allocation5 [shape = 's32[2]{0}', space=sflag, size = 0x8, scoped, tag = 'scoped memory for generator_forward.9']
    #allocation6 [shape = 'u8[4096]{0}', space=vmem, size = 0x1000, scoped, tag = 'input window, operand 2']
    %8 = vsyncpa [#allocation3], 0
    %9 = vsyncpa [#allocation5], 0
    %s10 = scalar_lea.sflag [#allocation5], 1
    %11 = vsyncpa %s10, 0
    loop: start=0, step=1, limit=4
    $region2: #{generator_forward.9} parent=1 // loop_pre_header
      _
    $region3: #{generator_forward.9} parent=1 // loop_header
      %s13 = sphi 0, %s17
      %p14 = scmp.ge.s32.totalorder %s13, 4
      %s20 = sphi 0, %s32
      %s21 = sphi 0, %s28
      %s22 = sphi 0, %s20
      %s23 = sphi 0, %s21
      %s24 = sphi 0, %s22
      %s25 = sphi 0, %s23
      %s35 = sphi 0, %s37
      %s38 = sphi 0, %s35
      %s39 = sphi 0, %s38
      %s55 = sphi 0, %s39
      %s61 = sphi 0, %s63
      %s64 = sphi 0, %s61
      %s65 = sphi 0, %s64
      %s81 = sphi 0, %s65
      %s87 = sphi 0, %s89
      %s90 = sphi 0, %s87
      %s91 = sphi 0, %s90
      %s107 = sphi 0, %s91
      %s115 = sphi 0, %s117
      %s118 = sphi 0, %s115
      %s119 = sphi 0, %s118
      %s135 = sphi 0, %s119
    $region4: #{generator_forward.9} parent=1 // loop_header_branch
      %16 = sbr.rel (%p14) target = $region8
    $region5: #{generator_forward.9} parent=1 // loop_body
      %s18 = ssub.s32 %s13, 1
      %s19 = ssub.s32 %s13, 2
      %s26 = sadd.s32 1, %s21
      %p27 = scmp.ge.s32.totalorder %s26, 2
      %s28 = scalar_select %p27, 0, %s26
      %s29 = sadd.s32 1, %s20
      %s30 = scalar_select %p27, %s29, %s20
      %p31 = scmp.ge.s32.totalorder %s30, 1
      %s32 = scalar_select %p31, 0, %s30
      %s33 = ssub.s32 %s20, %s32
      %p34 = scmp.eq.s32.totalorder %s33, 0
      %s36 = sadd.s32 %s35, 1
      %s37 = scalar_select %p34, %s35, %s36
      %p40 = pneg %p34
      %p41 = scmp.eq.s32.totalorder %s13, 1
      %p42 = por %p40, %p41
      %p43 = scmp.ne.s32.totalorder %s35, %s38
      %p44 = scmp.eq.s32.totalorder %s13, 0
      %p45 = por %p43, %p44
      %p46 = scmp.ne.s32.totalorder %s35, %s38
      %p47 = scmp.eq.s32.totalorder %s18, 1
      %p48 = por %p46, %p47
      %p49 = scmp.ne.s32.totalorder %s38, %s39
      %p50 = scmp.eq.s32.totalorder %s18, 0
      %p51 = por %p49, %p50
      %p52 = scmp.ne.s32.totalorder %s38, %s39
      %p53 = scmp.eq.s32.totalorder %s19, 1
      %p54 = por %p52, %p53
      %p56 = scmp.ne.s32.totalorder %s39, %s55
      %p57 = scmp.eq.s32.totalorder %s19, 0
      %p58 = por %p56, %p57
      %s59 = ssub.s32 %s21, %s28
      %p60 = scmp.eq.s32.totalorder %s59, 0
      %s62 = sadd.s32 %s61, 1
      %s63 = scalar_select %p60, %s61, %s62
      %p66 = pneg %p60
      %p67 = scmp.eq.s32.totalorder %s13, 1
      %p68 = por %p66, %p67
      %p69 = scmp.ne.s32.totalorder %s61, %s64
      %p70 = scmp.eq.s32.totalorder %s13, 0
      %p71 = por %p69, %p70
      %p72 = scmp.ne.s32.totalorder %s61, %s64
      %p73 = scmp.eq.s32.totalorder %s18, 1
      %p74 = por %p72, %p73
      %p75 = scmp.ne.s32.totalorder %s64, %s65
      %p76 = scmp.eq.s32.totalorder %s18, 0
      %p77 = por %p75, %p76
      %p78 = scmp.ne.s32.totalorder %s64, %s65
      %p79 = scmp.eq.s32.totalorder %s19, 1
      %p80 = por %p78, %p79
      %p82 = scmp.ne.s32.totalorder %s65, %s81
      %p83 = scmp.eq.s32.totalorder %s19, 0
      %p84 = por %p82, %p83
      %s85 = ssub.s32 %s21, %s28
      %p86 = scmp.eq.s32.totalorder %s85, 0
      %s88 = sadd.s32 %s87, 1
      %s89 = scalar_select %p86, %s87, %s88
      %p92 = pneg %p86
      %p93 = scmp.eq.s32.totalorder %s13, 1
      %p94 = por %p92, %p93
      %p95 = scmp.ne.s32.totalorder %s87, %s90
      %p96 = scmp.eq.s32.totalorder %s13, 0
      %p97 = por %p95, %p96
      %p98 = scmp.ne.s32.totalorder %s87, %s90
      %p99 = scmp.eq.s32.totalorder %s18, 1
      %p100 = por %p98, %p99
      %p101 = scmp.ne.s32.totalorder %s90, %s91
      %p102 = scmp.eq.s32.totalorder %s18, 0
      %p103 = por %p101, %p102
      %p104 = scmp.ne.s32.totalorder %s90, %s91
      %p105 = scmp.eq.s32.totalorder %s19, 1
      %p106 = por %p104, %p105
      %p108 = scmp.ne.s32.totalorder %s91, %s107
      %p109 = scmp.eq.s32.totalorder %s19, 0
      %p110 = por %p108, %p109
      %s111 = ssub.s32 %s20, %s32
      %s112 = ssub.s32 %s21, %s28
      %s113 = sor.u32 %s111, %s112
      %p114 = scmp.eq.s32.totalorder %s113, 0
      %s116 = sadd.s32 %s115, 1
      %s117 = scalar_select %p114, %s115, %s116
      %p120 = pneg %p114
      %p121 = scmp.eq.s32.totalorder %s13, 1
      %p122 = por %p120, %p121
      %p123 = scmp.ne.s32.totalorder %s115, %s118
      %p124 = scmp.eq.s32.totalorder %s13, 0
      %p125 = por %p123, %p124
      %p126 = scmp.ne.s32.totalorder %s115, %s118
      %p127 = scmp.eq.s32.totalorder %s18, 1
      %p128 = por %p126, %p127
      %p129 = scmp.ne.s32.totalorder %s118, %s119
      %p130 = scmp.eq.s32.totalorder %s18, 0
      %p131 = por %p129, %p130
      %p132 = scmp.ne.s32.totalorder %s118, %s119
      %p133 = scmp.eq.s32.totalorder %s19, 1
      %p134 = por %p132, %p133
      %p136 = scmp.ne.s32.totalorder %s119, %s135
      %p137 = scmp.eq.s32.totalorder %s19, 0
      %p138 = por %p136, %p137
      %p139 = scmp.le.s32.totalorder 1, %s13
      %p140 = scmp.lt.s32.totalorder %s13, 3
      %p141 = pnand %p139, %p140
      %p142 = pneg %p141
      // Predicated region
      $region9: #{generator_forward.9} parent=5 // pred_check
        _
      $region10: #{generator_forward.9} parent=5 // pred_check_branch
        %144 = sbr.rel (%p141) target = $region12
      $region11: #{generator_forward.9} parent=5 // pred_region
        %s145 = ssub.s32 %s13, 1
        // Predicated region
        $region13: #{generator_forward.9} parent=11 // pred_check
          %p146 = pneg %p51
        $region14: #{generator_forward.9} parent=11 // pred_check_branch
          %148 = sbr.rel (%p146) target = $region16
        $region15: #{generator_forward.9} parent=11 // pred_region
          %s150 = ssub.s32 32, 32
          %151 = vsyncadd [#allocation3], %s150
          %s152 = smul.addr %s22, 32
          %s153 = scalar_lea.hbm %s0, %s152
          %s155 = sshll.u32 [#allocation2], 4
          %s156 = int_to_ptr.vmem [resolvable:$true] %s155
          %158 = dma.hbm_to_vmem [thread:$0]  %s153, 32, %s156, [#allocation3]
        $region16: #{generator_forward.9} parent=11 // pred_fallthru
          _
      $region12: #{generator_forward.9} parent=5 // pred_fallthru
        _
      %p159 = scmp.lt.s32.totalorder %s13, 2
      // Predicated region
      $region17: #{generator_forward.9} parent=5 // pred_check
        %p160 = pneg %p159
      $region18: #{generator_forward.9} parent=5 // pred_check_branch
        %162 = sbr.rel (%p160) target = $region20
      $region19: #{generator_forward.9} parent=5 // pred_region
        // Predicated region
        $region21: #{generator_forward.9} parent=19 // pred_check
          %p163 = pneg %p71
        $region22: #{generator_forward.9} parent=19 // pred_check_branch
          %165 = sbr.rel (%p163) target = $region24
        $region23: #{generator_forward.9} parent=19 // pred_region
          %s166 = sand.u32 %s13, 1
          %s167 = scalar_lea.sflag [#allocation5], %s166
          %s168 = sand.u32 %s61, 1
          %s169 = smul.addr %s168, 64
          %s170 = scalar_lea.vmem [#allocation4], %s169
          %s171 = smul.u32 4, %s21
          %s173 = ssub.s32 1024, 1024
          %174 = vsyncadd %s167, %s173
          %s175 = smul.addr %s171, 64
          %s176 = scalar_lea.hbm %s1, %s175
          %s177 = sshll.u32 %s170, 4
          %s178 = int_to_ptr.vmem [resolvable:$true] %s177
          %183 = dma.hbm_to_vmem [thread:$0]  %s176, 1024, %s178, %s167, 512, 256, 16
        $region24: #{generator_forward.9} parent=19 // pred_fallthru
          _
        // Predicated region
        $region25: #{generator_forward.9} parent=19 // pred_check
          %p184 = pneg %p97
        $region26: #{generator_forward.9} parent=19 // pred_check_branch
          %186 = sbr.rel (%p184) target = $region28
        $region27: #{generator_forward.9} parent=19 // pred_region
          %s187 = sand.u32 %s13, 1
          %s188 = scalar_lea.sflag [#allocation5], %s187
          %s189 = sand.u32 %s87, 1
          %s190 = smul.addr %s189, 4
          %s191 = scalar_lea.vmem [#allocation6], %s190
          %s192 = smul.u32 4, %s21
          %s194 = ssub.s32 64, 64
          %195 = vsyncadd %s188, %s194
          %s196 = smul.addr %s192, 16
          %s197 = scalar_lea.hbm %s2, %s196
          %s199 = sshll.u32 %s191, 4
          %s200 = int_to_ptr.vmem [resolvable:$true] %s199
          %202 = dma.hbm_to_vmem [thread:$0]  %s197, 64, %s200, %s188
        $region28: #{generator_forward.9} parent=19 // pred_fallthru
          _
      $region20: #{generator_forward.9} parent=5 // pred_fallthru
        _
      %p203 = scmp.le.s32.totalorder 1, %s13
      %p204 = scmp.lt.s32.totalorder %s13, 3
      %p205 = pnand %p203, %p204
      %p206 = pneg %p205
      // Predicated region
      $region29: #{generator_forward.9} parent=5 // pred_check
        _
      $region30: #{generator_forward.9} parent=5 // pred_check_branch
        %208 = sbr.rel (%p205) target = $region32
      $region31: #{generator_forward.9} parent=5 // pred_region
        %s209 = ssub.s32 %s13, 1
        // Predicated region
        $region33: #{generator_forward.9} parent=31 // pred_check
          %p210 = pneg %p51
        $region34: #{generator_forward.9} parent=31 // pred_check_branch
          %212 = sbr.rel (%p210) target = $region36
        $region35: #{generator_forward.9} parent=31 // pred_region
          %213 = dma.done [#allocation3], 32
        $region36: #{generator_forward.9} parent=31 // pred_fallthru
          _
        %s214 = sand.u32 %s18, 1
        %s215 = scalar_lea.sflag [#allocation5], %s214
        %s216 = sand.u32 %s64, 1
        %s217 = smul.addr %s216, 64
        %s218 = scalar_lea.vmem [#allocation4], %s217
        // Predicated region
        $region37: #{generator_forward.9} parent=31 // pred_check
          %p219 = pneg %p77
        $region38: #{generator_forward.9} parent=31 // pred_check_branch
          %221 = sbr.rel (%p219) target = $region40
        $region39: #{generator_forward.9} parent=31 // pred_region
          %222 = dma.done %s215, 1024
        $region40: #{generator_forward.9} parent=31 // pred_fallthru
          _
        %s223 = sand.u32 %s18, 1
        %s224 = scalar_lea.sflag [#allocation5], %s223
        %s225 = sand.u32 %s90, 1
        %s226 = smul.addr %s225, 4
        %s227 = scalar_lea.vmem [#allocation6], %s226
        // Predicated region
        $region41: #{generator_forward.9} parent=31 // pred_check
          %p228 = pneg %p103
        $region42: #{generator_forward.9} parent=31 // pred_check_branch
          %230 = sbr.rel (%p228) target = $region44
        $region43: #{generator_forward.9} parent=31 // pred_region
          %231 = dma.done %s224, 64
        $region44: #{generator_forward.9} parent=31 // pred_fallthru
          _
        %p232 = pneg %p51
        %p233 = pneg %p48
        %s234 = sand.u32 %s18, 1
        %s235 = scalar_lea.sflag [#allocation5], %s234
        %s236 = sand.u32 %s64, 1
        %s237 = smul.addr %s236, 64
        %s238 = scalar_lea.vmem [#allocation4], %s237
        %p239 = pneg %p77
        %p240 = pneg %p74
        %s241 = sand.u32 %s18, 1
        %s242 = scalar_lea.sflag [#allocation5], %s241
        %s243 = sand.u32 %s90, 1
        %s244 = smul.addr %s243, 4
        %s245 = scalar_lea.vmem [#allocation6], %s244
        %p246 = pneg %p103
        %p247 = pneg %p100
        %p248 = pneg %p131
        %p249 = pneg %p128
        %s250 = smul.u32 4, %s23
        %p251 = scmp.lt.s32.totalorder %s22, 0
        %s252 = scalar_select %p251, %s22, 0
        %p253 = scmp.lt.s32.totalorder %s250, 7
        %s254 = scalar_select %p253, %s250, 7
        %s255 = smul.addr %s252, 8
        %s256 = sadd.s32 %s254, %s255
        %s257 = scalar_lea.vmem %s3, %s256
        %s258 = smul.u32 4, %s23
        %s259 = smul.u32 4, %s23
        %s260 = smul.u32 4, %s23
        %p261 = scmp.lt.s32.totalorder %s22, 0
        %s262 = scalar_select %p261, %s22, 0
        %p263 = scmp.lt.s32.totalorder %s260, 7
        %s264 = scalar_select %p263, %s260, 7
        %s265 = smul.addr %s262, 8
        %s266 = sadd.s32 %s264, %s265
        %s267 = scalar_lea.vmem %s3, %s266
        %s268 = smul.u32 4, %s23
        %v270 = vld [vmem:[#allocation2] sm:$0x3]
        %v271 = vpack.c.bf16 %v270, %v270
        %v272 = vld [vmem:[%s218] sm:$0xff]
        %v273 = vld [vmem:[%s218 + $0x8] sm:$0xff]
        %v274 = vld [vmem:[%s218 + $0x10] sm:$0xff]
        %v275 = vld [vmem:[%s218 + $0x18] sm:$0xff]
        %v276 = vld [vmem:[%s218 + $0x20] sm:$0xff]
        %v277 = vld [vmem:[%s218 + $0x28] sm:$0xff]
        %v278 = vld [vmem:[%s218 + $0x30] sm:$0xff]
        %v279 = vld [vmem:[%s218 + $0x38] sm:$0xff]
        %v280 = vld [vmem:[%s227] sm:$0xf]
        %v282 = vlaneseq
        %v283 = vshrl.u32 %v282, 7
        %v284 = vsub.s32 0, %v283
        %v285 = vrot.slane %v280, %v284
        %v286 = vlaneseq
        %v287 = vshrl.u32 %v286, 7
        %v288 = vsub.s32 1, %v287
        %v289 = vrot.slane %v280, %v288
        %v290 = vlaneseq
        %v291 = vshrl.u32 %v290, 7
        %v292 = vsub.s32 2, %v291
        %v293 = vrot.slane %v280, %v292
        %v294 = vlaneseq
        %v295 = vshrl.u32 %v294, 7
        %v296 = vsub.s32 3, %v295
        %v297 = vrot.slane %v280, %v296
        %v310 = vunpack.c.l.b16 %v272
        %v311 = vunpack.c.h.b16 %v272
        %v312 = vunpack.c.l.b16 %v273
        %v313 = vunpack.c.h.b16 %v273
        %v314 = vunpack.c.l.b16 %v274
        %v315 = vunpack.c.h.b16 %v274
        %v316 = vunpack.c.l.b16 %v275
        %v317 = vunpack.c.h.b16 %v275
        %v318 = vunpack.c.l.b16 %v276
        %v319 = vunpack.c.h.b16 %v276
        %v320 = vunpack.c.l.b16 %v277
        %v321 = vunpack.c.h.b16 %v277
        %v322 = vunpack.c.l.b16 %v278
        %v323 = vunpack.c.h.b16 %v278
        %v324 = vunpack.c.l.b16 %v279
        %v325 = vunpack.c.h.b16 %v279
        %v326 = vpack.c.b16 %v314, %v310
        %v327 = vpack.c.b16 %v315, %v311
        %v328 = vpack.c.b16 %v316, %v312
        %v329 = vpack.c.b16 %v317, %v313
        %v330 = vpack.c.b16 %v322, %v318
        %v331 = vpack.c.b16 %v323, %v319
        %v332 = vpack.c.b16 %v324, %v320
        %v333 = vpack.c.b16 %v325, %v321
        %vm342 = vcmask 261120
        %v344 = vsel %vm342, %v271, 0
        %346 = vmatprep.subr.bf16.mxu0 %v327
        %347 = vmatpush1.bf16.msra.mxu0 %v326
        %348 = vmatprep.subr.bf16.mxu0 %v331
        %349 = vmatpush1.bf16.msra.mxu0 %v330
        %350 = vmatprep.subr.bf16.mxu0 0
        %351 = vmatpush1.bf16.msra.mxu0 0
        %352 = vmatprep.subr.bf16.mxu0 0
        %353 = vmatpush1.bf16.msra.mxu0 0
        %354 = vmatprep.subr.bf16.mxu0 0
        %355 = vmatpush1.bf16.msra.mxu0 0
        %356 = vmatprep.subr.bf16.mxu0 0
        %357 = vmatpush1.bf16.msra.mxu0 0
        %358 = vmatprep.subr.bf16.mxu0 0
        %359 = vmatpush1.bf16.msra.mxu0 0
        %360 = vmatprep.subr.bf16.mxu0 0
        %361 = vmatpush1.bf16.msra.mxu0 0
        %362 = vmatprep.subr.bf16.mxu0 0
        %363 = vmatpush1.bf16.msra.mxu0 0
        %364 = vmatprep.subr.bf16.mxu0 0
        %365 = vmatpush1.bf16.msra.mxu0 0
        %366 = vmatprep.subr.bf16.mxu0 0
        %367 = vmatpush1.bf16.msra.mxu0 0
        %368 = vmatprep.subr.bf16.mxu0 0
        %369 = vmatpush1.bf16.msra.mxu0 0
        %370 = vmatprep.subr.bf16.mxu0 0
        %371 = vmatpush1.bf16.msra.mxu0 0
        %372 = vmatprep.subr.bf16.mxu0 0
        %373 = vmatpush1.bf16.msra.mxu0 0
        %374 = vmatprep.subr.bf16.mxu0 0
        %375 = vmatpush1.bf16.msra.mxu0 0
        %376 = vmatprep.subr.bf16.mxu0 0
        %377 = vmatpush1.bf16.msra.mxu0 0
        %378 = vmatprep.mubr.bf16.mxu0 0
        %379 = vmatmul.mubr.bf16.gmra.mrb[0].mxu0 %v344
        %v380 = vpop.f32.mrb[0].mxu0
        %v381 = vadd.f32 %v285, %v380
        %v382 = vpop.f32.mrb[0].mxu0
        %v383 = vadd.f32 %v289, %v382
        %v384 = vpop.f32.mrb[0].mxu0
        %v385 = vpop.f32.mrb[0].mxu0
        %386 = vdwg.mxu0
        %387 = vmatprep.subr.bf16.mxu0 %v329
        %388 = vmatpush1.bf16.msra.mxu0 %v328
        %389 = vmatprep.subr.bf16.mxu0 %v333
        %390 = vmatpush1.bf16.msra.mxu0 %v332
        %391 = vmatprep.subr.bf16.mxu0 0
        %392 = vmatpush1.bf16.msra.mxu0 0
        %393 = vmatprep.subr.bf16.mxu0 0
        %394 = vmatpush1.bf16.msra.mxu0 0
        %395 = vmatprep.subr.bf16.mxu0 0
        %396 = vmatpush1.bf16.msra.mxu0 0
        %397 = vmatprep.subr.bf16.mxu0 0
        %398 = vmatpush1.bf16.msra.mxu0 0
        %399 = vmatprep.subr.bf16.mxu0 0
        %400 = vmatpush1.bf16.msra.mxu0 0
        %401 = vmatprep.subr.bf16.mxu0 0
        %402 = vmatpush1.bf16.msra.mxu0 0
        %403 = vmatprep.subr.bf16.mxu0 0
        %404 = vmatpush1.bf16.msra.mxu0 0
        %405 = vmatprep.subr.bf16.mxu0 0
        %406 = vmatpush1.bf16.msra.mxu0 0
        %407 = vmatprep.subr.bf16.mxu0 0
        %408 = vmatpush1.bf16.msra.mxu0 0
        %409 = vmatprep.subr.bf16.mxu0 0
        %410 = vmatpush1.bf16.msra.mxu0 0
        %411 = vmatprep.subr.bf16.mxu0 0
        %412 = vmatpush1.bf16.msra.mxu0 0
        %413 = vmatprep.subr.bf16.mxu0 0
        %414 = vmatpush1.bf16.msra.mxu0 0
        %415 = vmatprep.subr.bf16.mxu0 0
        %416 = vmatpush1.bf16.msra.mxu0 0
        %417 = vmatprep.subr.bf16.mxu0 0
        %418 = vmatpush1.bf16.msra.mxu0 0
        %419 = vmatprep.mubr.bf16.mxu0 0
        %420 = vmatmul.mubr.bf16.gmra.mrb[0].mxu0 %v344
        %v421 = vpop.f32.mrb[0].mxu0
        %v422 = vadd.f32 %v293, %v421
        %v423 = vpop.f32.mrb[0].mxu0
        %v424 = vadd.f32 %v297, %v423
        %v425 = vpop.f32.mrb[0].mxu0
        %v426 = vpop.f32.mrb[0].mxu0
        %427 = vdwg.mxu0
        %v428 = vmax.f32 %v381, 0.0
        %v429 = vmax.f32 %v383, 0.0
        %v430 = vmax.f32 %v422, 0.0
        %v431 = vmax.f32 %v424, 0.0
        %v432 = vpack.c.bf16 %v428, %v428
        %v433 = vpack.c.bf16 %v429, %v429
        %v434 = vpack.c.bf16 %v430, %v430
        %v435 = vpack.c.bf16 %v431, %v431
        %v440 = vcombine.low %v432, %v433
        %v441 = vcombine.low %v434, %v435
        %v443 = vunpack.c.l.s4 1966171168
        %v444 = vunpack.c.0.s8 %v443
        %v445 = vlaneseq
        %v446 = vshrl.u32 %v445, 7
        %v447 = vsub.s32 %v444, %v446
        %v448 = vrot.slane %v440, %v447
        %v450 = vunpack.c.l.s4 1966171168
        %v451 = vunpack.c.0.s8 %v450
        %v452 = vlaneseq
        %v453 = vshrl.u32 %v452, 7
        %v454 = vsub.s32 %v451, %v453
        %v455 = vrot.slane %v441, %v454
        %v456 = vcombine.low %v448, %v455
        %v458 = vunpack.c.l.s4 1966171168
        %v459 = vunpack.c.0.s8 %v458
        %v460 = vlaneseq
        %v461 = vshrl.u32 %v460, 7
        %v462 = vsub.s32 %v459, %v461
        %v463 = vrot.slane %v456, %v462
        %465 = vst [vmem:[%s267] sm:$0xf] %v463
        %s466 = smul.u32 4, %s23
        %p467 = scmp.lt.s32.totalorder %s22, 0
        %s468 = scalar_select %p467, %s22, 0
        %p469 = scmp.lt.s32.totalorder %s466, 7
        %s470 = scalar_select %p469, %s466, 7
        %s471 = smul.addr %s468, 8
        %s472 = sadd.s32 %s470, %s471
        %s473 = scalar_lea.vmem %s3, %s472
        // Predicated region
        $region45: #{generator_forward.9} parent=31 // pred_check
          %p474 = pneg %p128
        $region46: #{generator_forward.9} parent=31 // pred_check_branch
          %476 = sbr.rel (%p474) target = $region48
        $region47: #{generator_forward.9} parent=31 // pred_region
          %s477 = smul.u32 4, %s23
        $region48: #{generator_forward.9} parent=31 // pred_fallthru
          _
      $region32: #{generator_forward.9} parent=5 // pred_fallthru
        _
      %p478 = scmp.le.s32.totalorder 2, %s13
      // Predicated region
      $region49: #{generator_forward.9} parent=5 // pred_check
        %p479 = pneg %p478
      $region50: #{generator_forward.9} parent=5 // pred_check_branch
        %481 = sbr.rel (%p479) target = $region52
      $region51: #{generator_forward.9} parent=5 // pred_region
        %s482 = ssub.s32 %s13, 2
        // Predicated region
        $region53: #{generator_forward.9} parent=51 // pred_check
          %p483 = pneg %p134
        $region54: #{generator_forward.9} parent=51 // pred_check_branch
          %485 = sbr.rel (%p483) target = $region56
        $region55: #{generator_forward.9} parent=51 // pred_region
          %s486 = smul.u32 4, %s25
          %p487 = scmp.lt.s32.totalorder %s24, 0
          %s488 = scalar_select %p487, %s24, 0
          %p489 = scmp.lt.s32.totalorder %s486, 7
          %s490 = scalar_select %p489, %s486, 7
          %s491 = smul.addr %s488, 8
          %s492 = sadd.s32 %s490, %s491
          %s493 = scalar_lea.vmem %s3, %s492
        $region56: #{generator_forward.9} parent=51 // pred_fallthru
          _
      $region52: #{generator_forward.9} parent=5 // pred_fallthru
        _
    $region6: #{generator_forward.9} parent=1 // loop_footer
      %s17 = sadd.s32 1, %s13
    $region7: #{generator_forward.9} parent=1 // loop_footer_branch
      %12 = sbr.rel target = $region3
    $region8: #{generator_forward.9} parent=1 // loop_exit
      _
    %494 = vsyncpa [#allocation3], 1
    %s495 = scalar_lea.sflag [#allocation3], 1
    %496 = vsyncpa %s495, 1
    %497 = vsyncpa [#allocation5], 1
    %s498 = scalar_lea.sflag [#allocation5], 1
    %499 = vsyncpa %s498, 1

// kernel: generator_forward.10
$region0: #{generator_forward.10}
  #allocation0 [shape = 'u32[]', space=smem, size = 0x4, offset = 0x4, fixed_abs, tag = 'smem constant byte address 0x4 - core index']
  #allocation1 [shape = 'u32[144,128]{1,0:T(1,128)}', space=vmem, size = 0x12000, scoped, tag = 'internal scratch']
  %s0 = inlined_call_operand.vmem [shape: bf16[32,64], index: 0, kind: input, shape index: {}]
  %s1 = inlined_call_operand.hbm [shape: bf16[64,512], index: 1, kind: input, shape index: {}]
  %s2 = inlined_call_operand.vmem [shape: bf16[32,512], index: 2, kind: output, shape index: {}]
  %s3 = sld [smem:[#allocation0]]
  $region45: #{generator_forward.10} parent=0
    _
  %s5 = ssub.s32 1, %s3
  %s6 = scalar_select 0, %s5, %s3
  $region1: #{generator_forward.10} parent=0
    #allocation2 [shape = 'u8[65536]{0}', space=vmem, size = 0x10000, scoped, tag = 'input window, operand 1, single buffered']
    #allocation3 [shape = 's32[2]{0}', space=sflag, size = 0x8, scoped, tag = 'scoped memory for generator_forward.10']
    %7 = vsyncpa [#allocation3], 0
    loop: start=0, step=1, limit=4
    $region2: #{generator_forward.10} parent=1 // loop_pre_header
      _
    $region3: #{generator_forward.10} parent=1 // loop_header
      %s9 = sphi 0, %s13
      %p10 = scmp.ge.s32.totalorder %s9, 4
      %s16 = sphi 0, %s28
      %s17 = sphi 0, %s24
      %s18 = sphi 0, %s16
      %s19 = sphi 0, %s17
      %s20 = sphi 0, %s18
      %s21 = sphi 0, %s19
      %s31 = sphi 0, %s33
      %s34 = sphi 0, %s31
      %s35 = sphi 0, %s34
      %s51 = sphi 0, %s35
      %s57 = sphi 0, %s59
      %s60 = sphi 0, %s57
      %s61 = sphi 0, %s60
      %s77 = sphi 0, %s61
      %s85 = sphi 0, %s87
      %s88 = sphi 0, %s85
      %s89 = sphi 0, %s88
      %s105 = sphi 0, %s89
    $region4: #{generator_forward.10} parent=1 // loop_header_branch
      %12 = sbr.rel (%p10) target = $region8
    $region5: #{generator_forward.10} parent=1 // loop_body
      %s14 = ssub.s32 %s9, 1
      %s15 = ssub.s32 %s9, 2
      %s22 = sadd.s32 1, %s17
      %p23 = scmp.ge.s32.totalorder %s22, 1
      %s24 = scalar_select %p23, 0, %s22
      %s25 = sadd.s32 1, %s16
      %s26 = scalar_select %p23, %s25, %s16
      %p27 = scmp.ge.s32.totalorder %s26, 2
      %s28 = scalar_select %p27, 0, %s26
      %s29 = ssub.s32 %s16, %s28
      %p30 = scmp.eq.s32.totalorder %s29, 0
      %s32 = sadd.s32 %s31, 1
      %s33 = scalar_select %p30, %s31, %s32
      %p36 = pneg %p30
      %p37 = scmp.eq.s32.totalorder %s9, 1
      %p38 = por %p36, %p37
      %p39 = scmp.ne.s32.totalorder %s31, %s34
      %p40 = scmp.eq.s32.totalorder %s9, 0
      %p41 = por %p39, %p40
      %p42 = scmp.ne.s32.totalorder %s31, %s34
      %p43 = scmp.eq.s32.totalorder %s14, 1
      %p44 = por %p42, %p43
      %p45 = scmp.ne.s32.totalorder %s34, %s35
      %p46 = scmp.eq.s32.totalorder %s14, 0
      %p47 = por %p45, %p46
      %p48 = scmp.ne.s32.totalorder %s34, %s35
      %p49 = scmp.eq.s32.totalorder %s15, 1
      %p50 = por %p48, %p49
      %p52 = scmp.ne.s32.totalorder %s35, %s51
      %p53 = scmp.eq.s32.totalorder %s15, 0
      %p54 = por %p52, %p53
      %s55 = ssub.s32 %s17, %s24
      %p56 = scmp.eq.s32.totalorder %s55, 0
      %s58 = sadd.s32 %s57, 1
      %s59 = scalar_select %p56, %s57, %s58
      %p62 = pneg %p56
      %p63 = scmp.eq.s32.totalorder %s9, 1
      %p64 = por %p62, %p63
      %p65 = scmp.ne.s32.totalorder %s57, %s60
      %p66 = scmp.eq.s32.totalorder %s9, 0
      %p67 = por %p65, %p66
      %p68 = scmp.ne.s32.totalorder %s57, %s60
      %p69 = scmp.eq.s32.totalorder %s14, 1
      %p70 = por %p68, %p69
      %p71 = scmp.ne.s32.totalorder %s60, %s61
      %p72 = scmp.eq.s32.totalorder %s14, 0
      %p73 = por %p71, %p72
      %p74 = scmp.ne.s32.totalorder %s60, %s61
      %p75 = scmp.eq.s32.totalorder %s15, 1
      %p76 = por %p74, %p75
      %p78 = scmp.ne.s32.totalorder %s61, %s77
      %p79 = scmp.eq.s32.totalorder %s15, 0
      %p80 = por %p78, %p79
      %s81 = ssub.s32 %s16, %s28
      %s82 = ssub.s32 %s17, %s24
      %s83 = sor.u32 %s81, %s82
      %p84 = scmp.eq.s32.totalorder %s83, 0
      %s86 = sadd.s32 %s85, 1
      %s87 = scalar_select %p84, %s85, %s86
      %p90 = pneg %p84
      %p91 = scmp.eq.s32.totalorder %s9, 1
      %p92 = por %p90, %p91
      %p93 = scmp.ne.s32.totalorder %s85, %s88
      %p94 = scmp.eq.s32.totalorder %s9, 0
      %p95 = por %p93, %p94
      %p96 = scmp.ne.s32.totalorder %s85, %s88
      %p97 = scmp.eq.s32.totalorder %s14, 1
      %p98 = por %p96, %p97
      %p99 = scmp.ne.s32.totalorder %s88, %s89
      %p100 = scmp.eq.s32.totalorder %s14, 0
      %p101 = por %p99, %p100
      %p102 = scmp.ne.s32.totalorder %s88, %s89
      %p103 = scmp.eq.s32.totalorder %s15, 1
      %p104 = por %p102, %p103
      %p106 = scmp.ne.s32.totalorder %s89, %s105
      %p107 = scmp.eq.s32.totalorder %s15, 0
      %p108 = por %p106, %p107
      %p109 = scmp.le.s32.totalorder 1, %s9
      %p110 = scmp.lt.s32.totalorder %s9, 3
      %p111 = pnand %p109, %p110
      %p112 = pneg %p111
      // Predicated region
      $region9: #{generator_forward.10} parent=5 // pred_check
        _
      $region10: #{generator_forward.10} parent=5 // pred_check_branch
        %114 = sbr.rel (%p111) target = $region12
      $region11: #{generator_forward.10} parent=5 // pred_region
        %s115 = ssub.s32 %s9, 1
        // Predicated region
        $region13: #{generator_forward.10} parent=11 // pred_check
          %p116 = pneg %p73
        $region14: #{generator_forward.10} parent=11 // pred_check_branch
          %118 = sbr.rel (%p116) target = $region16
        $region15: #{generator_forward.10} parent=11 // pred_region
          %s119 = smul.u32 4, %s19
          %s121 = ssub.s32 2048, 2048
          %122 = vsyncadd [#allocation3], %s121
          %s123 = smul.addr %s119, 64
          %s124 = scalar_lea.hbm %s1, %s123
          %s125 = sshll.u32 [#allocation2], 4
          %s126 = int_to_ptr.vmem [resolvable:$true] %s125
          %131 = dma.hbm_to_vmem [thread:$0]  %s124, 2048, %s126, [#allocation3], 256, 256, 16
        $region16: #{generator_forward.10} parent=11 // pred_fallthru
          _
      $region12: #{generator_forward.10} parent=5 // pred_fallthru
        _
      %p132 = scmp.lt.s32.totalorder %s9, 2
      // Predicated region
      $region17: #{generator_forward.10} parent=5 // pred_check
        %p133 = pneg %p132
      $region18: #{generator_forward.10} parent=5 // pred_check_branch
        %135 = sbr.rel (%p133) target = $region20
      $region19: #{generator_forward.10} parent=5 // pred_region
        // Predicated region
        $region21: #{generator_forward.10} parent=19 // pred_check
          %p136 = pneg %p41
        $region22: #{generator_forward.10} parent=19 // pred_check_branch
          %138 = sbr.rel (%p136) target = $region24
        $region23: #{generator_forward.10} parent=19 // pred_region
          %s139 = smul.u32 2, %s16
          %p140 = scmp.lt.s32.totalorder %s139, 3
          %s141 = scalar_select %p140, %s139, 3
          %s142 = smul.addr %s141, 4
          %s143 = scalar_lea.vmem %s0, %s142
          %s144 = smul.u32 2, %s16
        $region24: #{generator_forward.10} parent=19 // pred_fallthru
          _
      $region20: #{generator_forward.10} parent=5 // pred_fallthru
        _
      %p145 = scmp.le.s32.totalorder 1, %s9
      %p146 = scmp.lt.s32.totalorder %s9, 3
      %p147 = pnand %p145, %p146
      %p148 = pneg %p147
      // Predicated region
      $region25: #{generator_forward.10} parent=5 // pred_check
        _
      $region26: #{generator_forward.10} parent=5 // pred_check_branch
        %150 = sbr.rel (%p147) target = $region28
      $region27: #{generator_forward.10} parent=5 // pred_region
        %s151 = ssub.s32 %s9, 1
        // Predicated region
        $region29: #{generator_forward.10} parent=27 // pred_check
          %p152 = pneg %p73
        $region30: #{generator_forward.10} parent=27 // pred_check_branch
          %154 = sbr.rel (%p152) target = $region32
        $region31: #{generator_forward.10} parent=27 // pred_region
          %155 = dma.done [#allocation3], 2048
        $region32: #{generator_forward.10} parent=27 // pred_fallthru
          _
        %s156 = smul.u32 2, %s18
        %p157 = scmp.lt.s32.totalorder %s156, 3
        %s158 = scalar_select %p157, %s156, 3
        %s159 = smul.addr %s158, 4
        %s160 = scalar_lea.vmem %s0, %s159
        %p161 = pneg %p47
        %p162 = pneg %p44
        %p163 = pneg %p73
        %p164 = pneg %p70
        %p165 = pneg %p101
        %p166 = pneg %p98
        %s167 = smul.u32 2, %s18
        %s168 = smul.u32 4, %s19
        %p169 = scmp.lt.s32.totalorder %s167, 3
        %s170 = scalar_select %p169, %s167, 3
        %p171 = scmp.lt.s32.totalorder %s168, 3
        %s172 = scalar_select %p171, %s168, 3
        %s173 = smul.addr %s170, 4
        %s174 = sadd.s32 %s172, %s173
        %s175 = smul.addr %s174, 4
        %s176 = scalar_lea.vmem %s2, %s175
        %s177 = smul.u32 2, %s18
        %p178 = scmp.lt.s32.totalorder %s177, 3
        %s179 = scalar_select %p178, %s177, 3
        %s180 = smul.addr %s179, 4
        %s181 = scalar_lea.vmem %s0, %s180
        %s182 = smul.u32 2, %s18
        %s183 = smul.u32 4, %s19
        %s184 = smul.u32 2, %s18
        %s185 = smul.u32 4, %s19
        %p186 = scmp.lt.s32.totalorder %s184, 3
        %s187 = scalar_select %p186, %s184, 3
        %p188 = scmp.lt.s32.totalorder %s185, 3
        %s189 = scalar_select %p188, %s185, 3
        %s190 = smul.addr %s187, 4
        %s191 = sadd.s32 %s189, %s190
        %s192 = smul.addr %s191, 4
        %s193 = scalar_lea.vmem %s2, %s192
        %s194 = smul.u32 2, %s18
        %s195 = smul.u32 4, %s19
        %v197 = vld [vmem:[%s181] sm:$0xf]
        %v198 = vld [vmem:[%s181 + $0x4] sm:$0xf]
        %v199 = vld [vmem:[#allocation2] sm:$0xff]
        %v200 = vld [vmem:[#allocation2 + $0x8] sm:$0xff]
        %v201 = vld [vmem:[#allocation2 + $0x10] sm:$0xff]
        %v202 = vld [vmem:[#allocation2 + $0x18] sm:$0xff]
        %v203 = vld [vmem:[#allocation2 + $0x20] sm:$0xff]
        %v204 = vld [vmem:[#allocation2 + $0x28] sm:$0xff]
        %v205 = vld [vmem:[#allocation2 + $0x30] sm:$0xff]
        %v206 = vld [vmem:[#allocation2 + $0x38] sm:$0xff]
        %v207 = vld [vmem:[#allocation2 + $0x40] sm:$0xff]
        %v208 = vld [vmem:[#allocation2 + $0x48] sm:$0xff]
        %v209 = vld [vmem:[#allocation2 + $0x50] sm:$0xff]
        %v210 = vld [vmem:[#allocation2 + $0x58] sm:$0xff]
        %v211 = vld [vmem:[#allocation2 + $0x60] sm:$0xff]
        %v212 = vld [vmem:[#allocation2 + $0x68] sm:$0xff]
        %v213 = vld [vmem:[#allocation2 + $0x70] sm:$0xff]
        %v214 = vld [vmem:[#allocation2 + $0x78] sm:$0xff]
        %v217 = vunpack.c.l.b16 %v197
        %v218 = vunpack.c.l.b16 %v198
        %v219 = vpack.c.b16 %v218, %v217
        %v236 = vunpack.c.l.b16 %v199
        %v237 = vunpack.c.h.b16 %v199
        %v238 = vunpack.c.l.b16 %v200
        %v239 = vunpack.c.h.b16 %v200
        %v240 = vunpack.c.l.b16 %v201
        %v241 = vunpack.c.h.b16 %v201
        %v242 = vunpack.c.l.b16 %v202
        %v243 = vunpack.c.h.b16 %v202
        %v244 = vunpack.c.l.b16 %v203
        %v245 = vunpack.c.h.b16 %v203
        %v246 = vunpack.c.l.b16 %v204
        %v247 = vunpack.c.h.b16 %v204
        %v248 = vunpack.c.l.b16 %v205
        %v249 = vunpack.c.h.b16 %v205
        %v250 = vunpack.c.l.b16 %v206
        %v251 = vunpack.c.h.b16 %v206
        %v252 = vunpack.c.l.b16 %v207
        %v253 = vunpack.c.h.b16 %v207
        %v254 = vunpack.c.l.b16 %v208
        %v255 = vunpack.c.h.b16 %v208
        %v256 = vunpack.c.l.b16 %v209
        %v257 = vunpack.c.h.b16 %v209
        %v258 = vunpack.c.l.b16 %v210
        %v259 = vunpack.c.h.b16 %v210
        %v260 = vunpack.c.l.b16 %v211
        %v261 = vunpack.c.h.b16 %v211
        %v262 = vunpack.c.l.b16 %v212
        %v263 = vunpack.c.h.b16 %v212
        %v264 = vunpack.c.l.b16 %v213
        %v265 = vunpack.c.h.b16 %v213
        %v266 = vunpack.c.l.b16 %v214
        %v267 = vunpack.c.h.b16 %v214
        %v268 = vpack.c.b16 %v240, %v236
        %v269 = vpack.c.b16 %v241, %v237
        %v270 = vpack.c.b16 %v242, %v238
        %v271 = vpack.c.b16 %v243, %v239
        %v272 = vpack.c.b16 %v248, %v244
        %v273 = vpack.c.b16 %v249, %v245
        %v274 = vpack.c.b16 %v250, %v246
        %v275 = vpack.c.b16 %v251, %v247
        %v276 = vpack.c.b16 %v256, %v252
        %v277 = vpack.c.b16 %v257, %v253
        %v278 = vpack.c.b16 %v258, %v254
        %v279 = vpack.c.b16 %v259, %v255
        %v280 = vpack.c.b16 %v264, %v260
        %v281 = vpack.c.b16 %v265, %v261
        %v282 = vpack.c.b16 %v266, %v262
        %v283 = vpack.c.b16 %v267, %v263
        %vm300 = vcmask 523264
        %v302 = vsel %vm300, %v219, 0
        %304 = vmatprep.subr.bf16.mxu0 %v269
        %305 = vmatpush1.bf16.msra.mxu0 %v268
        %306 = vmatprep.subr.bf16.mxu0 %v273
        %307 = vmatpush1.bf16.msra.mxu0 %v272
        %308 = vmatprep.subr.bf16.mxu0 %v277
        %309 = vmatpush1.bf16.msra.mxu0 %v276
        %310 = vmatprep.subr.bf16.mxu0 %v281
        %311 = vmatpush1.bf16.msra.mxu0 %v280
        %312 = vmatprep.subr.bf16.mxu0 0
        %313 = vmatpush1.bf16.msra.mxu0 0
        %314 = vmatprep.subr.bf16.mxu0 0
        %315 = vmatpush1.bf16.msra.mxu0 0
        %316 = vmatprep.subr.bf16.mxu0 0
        %317 = vmatpush1.bf16.msra.mxu0 0
        %318 = vmatprep.subr.bf16.mxu0 0
        %319 = vmatpush1.bf16.msra.mxu0 0
        %320 = vmatprep.subr.bf16.mxu0 0
        %321 = vmatpush1.bf16.msra.mxu0 0
        %322 = vmatprep.subr.bf16.mxu0 0
        %323 = vmatpush1.bf16.msra.mxu0 0
        %324 = vmatprep.subr.bf16.mxu0 0
        %325 = vmatpush1.bf16.msra.mxu0 0
        %326 = vmatprep.subr.bf16.mxu0 0
        %327 = vmatpush1.bf16.msra.mxu0 0
        %328 = vmatprep.subr.bf16.mxu0 0
        %329 = vmatpush1.bf16.msra.mxu0 0
        %330 = vmatprep.subr.bf16.mxu0 0
        %331 = vmatpush1.bf16.msra.mxu0 0
        %332 = vmatprep.subr.bf16.mxu0 0
        %333 = vmatpush1.bf16.msra.mxu0 0
        %334 = vmatprep.subr.bf16.mxu0 0
        %335 = vmatpush1.bf16.msra.mxu0 0
        %336 = vmatprep.mubr.bf16.mxu0 0
        %337 = vmatmul.mubr.bf16.gmra.mrb[0].mxu0 %v302
        %v338 = vpop.f32.mrb[0].mxu0
        %v339 = vadd.f32 0.0, %v338
        %v340 = vpop.f32.mrb[0].mxu0
        %v341 = vadd.f32 0.0, %v340
        %v342 = vpop.f32.mrb[0].mxu0
        %v343 = vadd.f32 0.0, %v342
        %v344 = vpop.f32.mrb[0].mxu0
        %v345 = vadd.f32 0.0, %v344
        %346 = vdwg.mxu0
        %347 = vmatprep.subr.bf16.mxu0 %v271
        %348 = vmatpush1.bf16.msra.mxu0 %v270
        %349 = vmatprep.subr.bf16.mxu0 %v275
        %350 = vmatpush1.bf16.msra.mxu0 %v274
        %351 = vmatprep.subr.bf16.mxu0 %v279
        %352 = vmatpush1.bf16.msra.mxu0 %v278
        %353 = vmatprep.subr.bf16.mxu0 %v283
        %354 = vmatpush1.bf16.msra.mxu0 %v282
        %355 = vmatprep.subr.bf16.mxu0 0
        %356 = vmatpush1.bf16.msra.mxu0 0
        %357 = vmatprep.subr.bf16.mxu0 0
        %358 = vmatpush1.bf16.msra.mxu0 0
        %359 = vmatprep.subr.bf16.mxu0 0
        %360 = vmatpush1.bf16.msra.mxu0 0
        %361 = vmatprep.subr.bf16.mxu0 0
        %362 = vmatpush1.bf16.msra.mxu0 0
        %363 = vmatprep.subr.bf16.mxu0 0
        %364 = vmatpush1.bf16.msra.mxu0 0
        %365 = vmatprep.subr.bf16.mxu0 0
        %366 = vmatpush1.bf16.msra.mxu0 0
        %367 = vmatprep.subr.bf16.mxu0 0
        %368 = vmatpush1.bf16.msra.mxu0 0
        %369 = vmatprep.subr.bf16.mxu0 0
        %370 = vmatpush1.bf16.msra.mxu0 0
        %371 = vmatprep.subr.bf16.mxu0 0
        %372 = vmatpush1.bf16.msra.mxu0 0
        %373 = vmatprep.subr.bf16.mxu0 0
        %374 = vmatpush1.bf16.msra.mxu0 0
        %375 = vmatprep.subr.bf16.mxu0 0
        %376 = vmatpush1.bf16.msra.mxu0 0
        %377 = vmatprep.subr.bf16.mxu0 0
        %378 = vmatpush1.bf16.msra.mxu0 0
        %379 = vmatprep.mubr.bf16.mxu0 0
        %380 = vmatmul.mubr.bf16.gmra.mrb[0].mxu0 %v302
        %v381 = vpop.f32.mrb[0].mxu0
        %v382 = vadd.f32 0.0, %v381
        %v383 = vpop.f32.mrb[0].mxu0
        %v384 = vadd.f32 0.0, %v383
        %v385 = vpop.f32.mrb[0].mxu0
        %v386 = vadd.f32 0.0, %v385
        %v387 = vpop.f32.mrb[0].mxu0
        %v388 = vadd.f32 0.0, %v387
        %389 = vdwg.mxu0
        %v390 = vpack.c.bf16 %v343, %v339
        %v391 = vpack.c.bf16 %v345, %v341
        %v392 = vpack.c.bf16 %v386, %v382
        %v393 = vpack.c.bf16 %v388, %v384
        %v398 = vunpack.c.l.b16 %v390
        %v399 = vunpack.c.l.b16 %v391
        %v400 = vunpack.c.l.b16 %v392
        %v401 = vunpack.c.l.b16 %v393
        %v402 = vunpack.c.h.b16 %v390
        %v403 = vunpack.c.h.b16 %v391
        %v404 = vunpack.c.h.b16 %v392
        %v405 = vunpack.c.h.b16 %v393
        %v406 = vpack.c.b16 %v399, %v398
        %v407 = vpack.c.b16 %v401, %v400
        %v408 = vpack.c.b16 %v403, %v402
        %v409 = vpack.c.b16 %v405, %v404
        %414 = vst [vmem:[%s193] sm:$0xff] %v406
        %415 = vst [vmem:[%s193 + $0x8] sm:$0xff] %v407
        %416 = vst [vmem:[%s193 + $0x10] sm:$0xff] %v408
        %417 = vst [vmem:[%s193 + $0x18] sm:$0xff] %v409
        %s418 = smul.u32 2, %s18
        %s419 = smul.u32 4, %s19
        %p420 = scmp.lt.s32.totalorder %s418, 3
        %s421 = scalar_select %p420, %s418, 3
        %p422 = scmp.lt.s32.totalorder %s419, 3
        %s423 = scalar_select %p422, %s419, 3
        %s424 = smul.addr %s421, 4
        %s425 = sadd.s32 %s423, %s424
        %s426 = smul.addr %s425, 4
        %s427 = scalar_lea.vmem %s2, %s426
        // Predicated region
        $region33: #{generator_forward.10} parent=27 // pred_check
          %p428 = pneg %p98
        $region34: #{generator_forward.10} parent=27 // pred_check_branch
          %430 = sbr.rel (%p428) target = $region36
        $region35: #{generator_forward.10} parent=27 // pred_region
          %s431 = smul.u32 2, %s18
          %s432 = smul.u32 4, %s19
        $region36: #{generator_forward.10} parent=27 // pred_fallthru
          _
      $region28: #{generator_forward.10} parent=5 // pred_fallthru
        _
      %p433 = scmp.le.s32.totalorder 2, %s9
      // Predicated region
      $region37: #{generator_forward.10} parent=5 // pred_check
        %p434 = pneg %p433
      $region38: #{generator_forward.10} parent=5 // pred_check_branch
        %436 = sbr.rel (%p434) target = $region40
      $region39: #{generator_forward.10} parent=5 // pred_region
        %s437 = ssub.s32 %s9, 2
        // Predicated region
        $region41: #{generator_forward.10} parent=39 // pred_check
          %p438 = pneg %p104
        $region42: #{generator_forward.10} parent=39 // pred_check_branch
          %440 = sbr.rel (%p438) target = $region44
        $region43: #{generator_forward.10} parent=39 // pred_region
          %s441 = smul.u32 2, %s20
          %s442 = smul.u32 4, %s21
          %p443 = scmp.lt.s32.totalorder %s441, 3
          %s444 = scalar_select %p443, %s441, 3
          %p445 = scmp.lt.s32.totalorder %s442, 3
          %s446 = scalar_select %p445, %s442, 3
          %s447 = smul.addr %s444, 4
          %s448 = sadd.s32 %s446, %s447
          %s449 = smul.addr %s448, 4
          %s450 = scalar_lea.vmem %s2, %s449
        $region44: #{generator_forward.10} parent=39 // pred_fallthru
          _
      $region40: #{generator_forward.10} parent=5 // pred_fallthru
        _
    $region6: #{generator_forward.10} parent=1 // loop_footer
      %s13 = sadd.s32 1, %s9
    $region7: #{generator_forward.10} parent=1 // loop_footer_branch
      %8 = sbr.rel target = $region3
    $region8: #{generator_forward.10} parent=1 // loop_exit
      _
    %451 = vsyncpa [#allocation3], 1
    %s452 = scalar_lea.sflag [#allocation3], 1
    %453 = vsyncpa %s452, 1

// kernel: generator_forward.11
$region0: #{generator_forward.11}
  #allocation0 [shape = 'u32[]', space=smem, size = 0x4, offset = 0x4, fixed_abs, tag = 'smem constant byte address 0x4 - core index']
  #allocation1 [shape = 'u32[144,128]{1,0:T(1,128)}', space=vmem, size = 0x12000, scoped, tag = 'internal scratch']
  %s0 = inlined_call_operand.vmem [shape: bf16[16,256], index: 0, kind: input, shape index: {}]
  %s1 = inlined_call_operand.vmem [shape: f32[1,256], index: 1, kind: output, shape index: {0}]
  %s2 = inlined_call_operand.vmem [shape: f32[1,256], index: 2, kind: output, shape index: {1}]
  %3 = xla_tuple %s1, %s2
  %s4 = sld [smem:[#allocation0]]
  $region49: #{generator_forward.11} parent=0
    _
  %s6 = ssub.s32 1, %s4
  %s7 = scalar_select 0, %s6, %s4
  loop: start=0, step=1, limit=4
  $region2: #{generator_forward.11} parent=0 // loop_pre_header
    _
  $region3: #{generator_forward.11} parent=0 // loop_header
    %s9 = sphi 0, %s13
    %p10 = scmp.ge.s32.totalorder %s9, 4
    %s19 = sphi 0, %s21
    %s22 = sphi 0, %s19
    %s23 = sphi 0, %s22
    %s39 = sphi 0, %s23
    %s43 = sphi 0, %s43
    %s45 = sphi 0, %s43
    %s46 = sphi 0, %s45
    %s60 = sphi 0, %s46
    %s64 = sphi 0, %s64
    %s66 = sphi 0, %s64
    %s67 = sphi 0, %s66
    %s81 = sphi 0, %s67
  $region4: #{generator_forward.11} parent=0 // loop_header_branch
    %12 = sbr.rel (%p10) target = $region8
  $region5: #{generator_forward.11} parent=0 // loop_body
    %s14 = ssub.s32 %s9, 1
    %s15 = ssub.s32 %s9, 2
    %s16 = sadd.s32 %s9, 1
    %s17 = ssub.s32 %s9, %s16
    %p18 = scmp.eq.s32.totalorder %s17, 0
    %s20 = sadd.s32 %s19, 1
    %s21 = scalar_select %p18, %s19, %s20
    %p24 = pneg %p18
    %p25 = scmp.eq.s32.totalorder %s9, 1
    %p26 = por %p24, %p25
    %p27 = scmp.ne.s32.totalorder %s19, %s22
    %p28 = scmp.eq.s32.totalorder %s9, 0
    %p29 = por %p27, %p28
    %p30 = scmp.ne.s32.totalorder %s19, %s22
    %p31 = scmp.eq.s32.totalorder %s14, 1
    %p32 = por %p30, %p31
    %p33 = scmp.ne.s32.totalorder %s22, %s23
    %p34 = scmp.eq.s32.totalorder %s14, 0
    %p35 = por %p33, %p34
    %p36 = scmp.ne.s32.totalorder %s22, %s23
    %p37 = scmp.eq.s32.totalorder %s15, 1
    %p38 = por %p36, %p37
    %p40 = scmp.ne.s32.totalorder %s23, %s39
    %p41 = scmp.eq.s32.totalorder %s15, 0
    %p42 = por %p40, %p41
    %s44 = sadd.s32 %s43, 1
    %p47 = scmp.eq.s32.totalorder %s9, 1
    %p48 = scmp.ne.s32.totalorder %s43, %s45
    %p49 = scmp.eq.s32.totalorder %s9, 0
    %p50 = por %p48, %p49
    %p51 = scmp.ne.s32.totalorder %s43, %s45
    %p52 = scmp.eq.s32.totalorder %s14, 1
    %p53 = por %p51, %p52
    %p54 = scmp.ne.s32.totalorder %s45, %s46
    %p55 = scmp.eq.s32.totalorder %s14, 0
    %p56 = por %p54, %p55
    %p57 = scmp.ne.s32.totalorder %s45, %s46
    %p58 = scmp.eq.s32.totalorder %s15, 1
    %p59 = por %p57, %p58
    %p61 = scmp.ne.s32.totalorder %s46, %s60
    %p62 = scmp.eq.s32.totalorder %s15, 0
    %p63 = por %p61, %p62
    %s65 = sadd.s32 %s64, 1
    %p68 = scmp.eq.s32.totalorder %s9, 1
    %p69 = scmp.ne.s32.totalorder %s64, %s66
    %p70 = scmp.eq.s32.totalorder %s9, 0
    %p71 = por %p69, %p70
    %p72 = scmp.ne.s32.totalorder %s64, %s66
    %p73 = scmp.eq.s32.totalorder %s14, 1
    %p74 = por %p72, %p73
    %p75 = scmp.ne.s32.totalorder %s66, %s67
    %p76 = scmp.eq.s32.totalorder %s14, 0
    %p77 = por %p75, %p76
    %p78 = scmp.ne.s32.totalorder %s66, %s67
    %p79 = scmp.eq.s32.totalorder %s15, 1
    %p80 = por %p78, %p79
    %p82 = scmp.ne.s32.totalorder %s67, %s81
    %p83 = scmp.eq.s32.totalorder %s15, 0
    %p84 = por %p82, %p83
    %p85 = scmp.le.s32.totalorder 1, %s9
    %p86 = scmp.lt.s32.totalorder %s9, 3
    %p87 = pnand %p85, %p86
    %p88 = pneg %p87
    // Predicated region
    $region9: #{generator_forward.11} parent=5 // pred_check
      _
    $region10: #{generator_forward.11} parent=5 // pred_check_branch
      %90 = sbr.rel (%p87) target = $region12
    $region11: #{generator_forward.11} parent=5 // pred_region
      %s91 = ssub.s32 %s9, 1
    $region12: #{generator_forward.11} parent=5 // pred_fallthru
      _
    %p92 = scmp.lt.s32.totalorder %s9, 2
    // Predicated region
    $region13: #{generator_forward.11} parent=5 // pred_check
      %p93 = pneg %p92
    $region14: #{generator_forward.11} parent=5 // pred_check_branch
      %95 = sbr.rel (%p93) target = $region16
    $region15: #{generator_forward.11} parent=5 // pred_region
      // Predicated region
      $region17: #{generator_forward.11} parent=15 // pred_check
        %p96 = pneg %p29
      $region18: #{generator_forward.11} parent=15 // pred_check_branch
        %98 = sbr.rel (%p96) target = $region20
      $region19: #{generator_forward.11} parent=15 // pred_region
        %p99 = scmp.lt.s32.totalorder %s9, 1
        %s100 = scalar_select %p99, %s9, 1
        %s101 = smul.addr %s100, 2
        %s102 = smul.addr %s101, 4
        %s103 = scalar_lea.vmem %s0, %s102
      $region20: #{generator_forward.11} parent=15 // pred_fallthru
        _
    $region16: #{generator_forward.11} parent=5 // pred_fallthru
      _
    %p104 = scmp.le.s32.totalorder 1, %s9
    %p105 = scmp.lt.s32.totalorder %s9, 3
    %p106 = pnand %p104, %p105
    %p107 = pneg %p106
    // Predicated region
    $region21: #{generator_forward.11} parent=5 // pred_check
      _
    $region22: #{generator_forward.11} parent=5 // pred_check_branch
      %109 = sbr.rel (%p106) target = $region24
    $region23: #{generator_forward.11} parent=5 // pred_region
      %s110 = ssub.s32 %s9, 1
      %p111 = scmp.lt.s32.totalorder %s14, 1
      %s112 = scalar_select %p111, %s14, 1
      %s113 = smul.addr %s112, 2
      %s114 = smul.addr %s113, 4
      %s115 = scalar_lea.vmem %s0, %s114
      %p116 = pneg %p35
      %p117 = pneg %p32
      %p118 = pneg %p56
      %p119 = pneg %p53
      %p120 = pneg %p77
      %p121 = pneg %p74
      %p122 = scmp.lt.s32.totalorder %s14, 1
      %s123 = scalar_select %p122, %s14, 1
      %s124 = smul.addr %s123, 2
      %s125 = smul.addr %s124, 4
      %s126 = scalar_lea.vmem %s0, %s125
      %p127 = scmp.eq.s32.totalorder %s14, 0
      // Predicated region
      $region25: #{generator_forward.11} parent=23 // pred_check
        %p128 = pneg %p127
      $region26: #{generator_forward.11} parent=23 // pred_check_branch
        %130 = sbr.rel (%p128) target = $region28
      $region27: #{generator_forward.11} parent=23 // pred_region
        %v131 = vlaneseq
        %vm132 = vcmp.ge.s32.totalorder %v131, 0
        %vm133 = vcmp.lt.s32.totalorder %v131, 256
        %vm134 = vmand %vm132, %vm133
        %135 = vst.msk [vmem:[%s1] sm:$0x3] %vm134, 0.0
        %136 = vst.msk [vmem:[%s2] sm:$0x3] %vm134, 0.0
      $region28: #{generator_forward.11} parent=23 // pred_fallthru
        _
      %v137 = vld [vmem:[%s126] sm:$0xff]
      %v138 = vunpack.c.l.bf16 %v137
      %v139 = vunpack.c.h.bf16 %v137
      %v140 = vld [vmem:[%s1] sm:$0x3]
      %v141 = vrot.slane %v138, 4
      %v142 = vadd.f32 %v138, %v141
      %v143 = vrot.slane %v142, 2
      %v144 = vadd.f32 %v142, %v143
      %v145 = vrot.slane %v144, 1
      %v146 = vadd.f32 %v144, %v145
      %v147 = vrot.slane %v139, 4
      %v148 = vadd.f32 %v139, %v147
      %v149 = vrot.slane %v148, 2
      %v150 = vadd.f32 %v148, %v149
      %v151 = vrot.slane %v150, 1
      %v152 = vadd.f32 %v150, %v151
      %v155 = vcombine.low %v146, %v152
      %v157 = vunpack.c.l.s4 1966171168
      %v158 = vunpack.c.0.s8 %v157
      %v159 = vlaneseq
      %v160 = vshrl.u32 %v159, 7
      %v161 = vsub.s32 %v158, %v160
      %v162 = vrot.slane %v155, %v161
      %v164 = vunpack.c.l.s4 1966171168
      %v165 = vunpack.c.0.s8 %v164
      %v166 = vlaneseq
      %v167 = vshrl.u32 %v166, 7
      %v168 = vsub.s32 %v165, %v167
      %v169 = vrot.slane %v162, %v168
      %v171 = vadd.f32 %v140, %v169
      %v172 = vlaneseq
      %vm173 = vcmp.ge.s32.totalorder %v172, 0
      %vm174 = vcmp.lt.s32.totalorder %v172, 256
      %vm175 = vmand %vm173, %vm174
      %176 = vst.msk [vmem:[%s1] sm:$0x3] %vm175, %v171
      %v177 = vld [vmem:[%s2] sm:$0x3]
      %v178 = vmul.f32 %v138, %v138
      %v179 = vmul.f32 %v139, %v139
      %v180 = vrot.slane %v178, 4
      %v181 = vadd.f32 %v178, %v180
      %v182 = vrot.slane %v181, 2
      %v183 = vadd.f32 %v181, %v182
      %v184 = vrot.slane %v183, 1
      %v185 = vadd.f32 %v183, %v184
      %v186 = vrot.slane %v179, 4
      %v187 = vadd.f32 %v179, %v186
      %v188 = vrot.slane %v187, 2
      %v189 = vadd.f32 %v187, %v188
      %v190 = vrot.slane %v189, 1
      %v191 = vadd.f32 %v189, %v190
      %v194 = vcombine.low %v185, %v191
      %v196 = vunpack.c.l.s4 1966171168
      %v197 = vunpack.c.0.s8 %v196
      %v198 = vlaneseq
      %v199 = vshrl.u32 %v198, 7
      %v200 = vsub.s32 %v197, %v199
      %v201 = vrot.slane %v194, %v200
      %v203 = vunpack.c.l.s4 1966171168
      %v204 = vunpack.c.0.s8 %v203
      %v205 = vlaneseq
      %v206 = vshrl.u32 %v205, 7
      %v207 = vsub.s32 %v204, %v206
      %v208 = vrot.slane %v201, %v207
      %v210 = vadd.f32 %v177, %v208
      %211 = vst.msk [vmem:[%s2] sm:$0x3] %vm175, %v210
      // Predicated region
      $region29: #{generator_forward.11} parent=23 // pred_check
        %p212 = pneg %p53
      $region30: #{generator_forward.11} parent=23 // pred_check_branch
        %214 = sbr.rel (%p212) target = $region32
      $region31: #{generator_forward.11} parent=23 // pred_region
        _
      $region32: #{generator_forward.11} parent=23 // pred_fallthru
        _
      // Predicated region
      $region33: #{generator_forward.11} parent=23 // pred_check
        %p215 = pneg %p74
      $region34: #{generator_forward.11} parent=23 // pred_check_branch
        %217 = sbr.rel (%p215) target = $region36
      $region35: #{generator_forward.11} parent=23 // pred_region
        _
      $region36: #{generator_forward.11} parent=23 // pred_fallthru
        _
      // Predicated region
      $region37: #{generator_forward.11} parent=23 // pred_check
        %p218 = pneg %p53
      $region38: #{generator_forward.11} parent=23 // pred_check_branch
        %220 = sbr.rel (%p218) target = $region40
      $region39: #{generator_forward.11} parent=23 // pred_region
        _
      $region40: #{generator_forward.11} parent=23 // pred_fallthru
        _
      // Predicated region
      $region41: #{generator_forward.11} parent=23 // pred_check
        %p221 = pneg %p74
      $region42: #{generator_forward.11} parent=23 // pred_check_branch
        %223 = sbr.rel (%p221) target = $region44
      $region43: #{generator_forward.11} parent=23 // pred_region
        _
      $region44: #{generator_forward.11} parent=23 // pred_fallthru
        _
    $region24: #{generator_forward.11} parent=5 // pred_fallthru
      _
    %p224 = scmp.le.s32.totalorder 2, %s9
    // Predicated region
    $region45: #{generator_forward.11} parent=5 // pred_check
      %p225 = pneg %p224
    $region46: #{generator_forward.11} parent=5 // pred_check_branch
      %227 = sbr.rel (%p225) target = $region48
    $region47: #{generator_forward.11} parent=5 // pred_region
      %s228 = ssub.s32 %s9, 2
    $region48: #{generator_forward.11} parent=5 // pred_fallthru
      _
  $region6: #{generator_forward.11} parent=0 // loop_footer
    %s13 = sadd.s32 1, %s9
  $region7: #{generator_forward.11} parent=0 // loop_footer_branch
    %8 = sbr.rel target = $region3
  $region8: #{generator_forward.11} parent=0 // loop_exit
    _

// kernel: generator_forward.12
$region0: #{generator_forward.12}
  #allocation0 [shape = 'u32[]', space=smem, size = 0x4, offset = 0x4, fixed_abs, tag = 'smem constant byte address 0x4 - core index']
  #allocation1 [shape = 'u32[144,128]{1,0:T(1,128)}', space=vmem, size = 0x12000, scoped, tag = 'internal scratch']
  %s0 = inlined_call_operand.vmem [shape: bf16[128,32], index: 0, kind: input, shape index: {}]
  %s1 = inlined_call_operand.vmem [shape: bf16[32,256], index: 1, kind: input, shape index: {}]
  %s2 = inlined_call_operand.vmem [shape: f32[1,32], index: 2, kind: input, shape index: {}]
  %s3 = inlined_call_operand.vmem [shape: f32[1,32], index: 3, kind: input, shape index: {}]
  %s4 = inlined_call_operand.vmem [shape: bf16[128,256], index: 4, kind: output, shape index: {}]
  %s5 = sld [smem:[#allocation0]]
  $region49: #{generator_forward.12} parent=0
    _
  %s7 = ssub.s32 1, %s5
  %s8 = scalar_select 0, %s7, %s5
  loop: start=0, step=1, limit=4
  $region2: #{generator_forward.12} parent=0 // loop_pre_header
    _
  $region3: #{generator_forward.12} parent=0 // loop_header
    %s10 = sphi 0, %s14
    %p11 = scmp.ge.s32.totalorder %s10, 4
    %s17 = sphi 0, %s29
    %s18 = sphi 0, %s25
    %s19 = sphi 0, %s17
    %s20 = sphi 0, %s18
    %s21 = sphi 0, %s19
    %s22 = sphi 0, %s20
    %s32 = sphi 0, %s34
    %s35 = sphi 0, %s32
    %s36 = sphi 0, %s35
    %s52 = sphi 0, %s36
    %s58 = sphi 0, %s60
    %s61 = sphi 0, %s58
    %s62 = sphi 0, %s61
    %s78 = sphi 0, %s62
    %s82 = sphi 0, %s82
    %s84 = sphi 0, %s82
    %s85 = sphi 0, %s84
    %s99 = sphi 0, %s85
    %s103 = sphi 0, %s103
    %s105 = sphi 0, %s103
    %s106 = sphi 0, %s105
    %s120 = sphi 0, %s106
    %s128 = sphi 0, %s130
    %s131 = sphi 0, %s128
    %s132 = sphi 0, %s131
    %s148 = sphi 0, %s132
  $region4: #{generator_forward.12} parent=0 // loop_header_branch
    %13 = sbr.rel (%p11) target = $region8
  $region5: #{generator_forward.12} parent=0 // loop_body
    %s15 = ssub.s32 %s10, 1
    %s16 = ssub.s32 %s10, 2
    %s23 = sadd.s32 1, %s18
    %p24 = scmp.ge.s32.totalorder %s23, 1
    %s25 = scalar_select %p24, 0, %s23
    %s26 = sadd.s32 1, %s17
    %s27 = scalar_select %p24, %s26, %s17
    %p28 = scmp.ge.s32.totalorder %s27, 2
    %s29 = scalar_select %p28, 0, %s27
    %s30 = ssub.s32 %s17, %s29
    %p31 = scmp.eq.s32.totalorder %s30, 0
    %s33 = sadd.s32 %s32, 1
    %s34 = scalar_select %p31, %s32, %s33
    %p37 = pneg %p31
    %p38 = scmp.eq.s32.totalorder %s10, 1
    %p39 = por %p37, %p38
    %p40 = scmp.ne.s32.totalorder %s32, %s35
    %p41 = scmp.eq.s32.totalorder %s10, 0
    %p42 = por %p40, %p41
    %p43 = scmp.ne.s32.totalorder %s32, %s35
    %p44 = scmp.eq.s32.totalorder %s15, 1
    %p45 = por %p43, %p44
    %p46 = scmp.ne.s32.totalorder %s35, %s36
    %p47 = scmp.eq.s32.totalorder %s15, 0
    %p48 = por %p46, %p47
    %p49 = scmp.ne.s32.totalorder %s35, %s36
    %p50 = scmp.eq.s32.totalorder %s16, 1
    %p51 = por %p49, %p50
    %p53 = scmp.ne.s32.totalorder %s36, %s52
    %p54 = scmp.eq.s32.totalorder %s16, 0
    %p55 = por %p53, %p54
    %s56 = ssub.s32 %s18, %s25
    %p57 = scmp.eq.s32.totalorder %s56, 0
    %s59 = sadd.s32 %s58, 1
    %s60 = scalar_select %p57, %s58, %s59
    %p63 = pneg %p57
    %p64 = scmp.eq.s32.totalorder %s10, 1
    %p65 = por %p63, %p64
    %p66 = scmp.ne.s32.totalorder %s58, %s61
    %p67 = scmp.eq.s32.totalorder %s10, 0
    %p68 = por %p66, %p67
    %p69 = scmp.ne.s32.totalorder %s58, %s61
    %p70 = scmp.eq.s32.totalorder %s15, 1
    %p71 = por %p69, %p70
    %p72 = scmp.ne.s32.totalorder %s61, %s62
    %p73 = scmp.eq.s32.totalorder %s15, 0
    %p74 = por %p72, %p73
    %p75 = scmp.ne.s32.totalorder %s61, %s62
    %p76 = scmp.eq.s32.totalorder %s16, 1
    %p77 = por %p75, %p76
    %p79 = scmp.ne.s32.totalorder %s62, %s78
    %p80 = scmp.eq.s32.totalorder %s16, 0
    %p81 = por %p79, %p80
    %s83 = sadd.s32 %s82, 1
    %p86 = scmp.eq.s32.totalorder %s10, 1
    %p87 = scmp.ne.s32.totalorder %s82, %s84
    %p88 = scmp.eq.s32.totalorder %s10, 0
    %p89 = por %p87, %p88
    %p90 = scmp.ne.s32.totalorder %s82, %s84
    %p91 = scmp.eq.s32.totalorder %s15, 1
    %p92 = por %p90, %p91
    %p93 = scmp.ne.s32.totalorder %s84, %s85
    %p94 = scmp.eq.s32.totalorder %s15, 0
    %p95 = por %p93, %p94
    %p96 = scmp.ne.s32.totalorder %s84, %s85
    %p97 = scmp.eq.s32.totalorder %s16, 1
    %p98 = por %p96, %p97
    %p100 = scmp.ne.s32.totalorder %s85, %s99
    %p101 = scmp.eq.s32.totalorder %s16, 0
    %p102 = por %p100, %p101
    %s104 = sadd.s32 %s103, 1
    %p107 = scmp.eq.s32.totalorder %s10, 1
    %p108 = scmp.ne.s32.totalorder %s103, %s105
    %p109 = scmp.eq.s32.totalorder %s10, 0
    %p110 = por %p108, %p109
    %p111 = scmp.ne.s32.totalorder %s103, %s105
    %p112 = scmp.eq.s32.totalorder %s15, 1
    %p113 = por %p111, %p112
    %p114 = scmp.ne.s32.totalorder %s105, %s106
    %p115 = scmp.eq.s32.totalorder %s15, 0
    %p116 = por %p114, %p115
    %p117 = scmp.ne.s32.totalorder %s105, %s106
    %p118 = scmp.eq.s32.totalorder %s16, 1
    %p119 = por %p117, %p118
    %p121 = scmp.ne.s32.totalorder %s106, %s120
    %p122 = scmp.eq.s32.totalorder %s16, 0
    %p123 = por %p121, %p122
    %s124 = ssub.s32 %s17, %s29
    %s125 = ssub.s32 %s18, %s25
    %s126 = sor.u32 %s124, %s125
    %p127 = scmp.eq.s32.totalorder %s126, 0
    %s129 = sadd.s32 %s128, 1
    %s130 = scalar_select %p127, %s128, %s129
    %p133 = pneg %p127
    %p134 = scmp.eq.s32.totalorder %s10, 1
    %p135 = por %p133, %p134
    %p136 = scmp.ne.s32.totalorder %s128, %s131
    %p137 = scmp.eq.s32.totalorder %s10, 0
    %p138 = por %p136, %p137
    %p139 = scmp.ne.s32.totalorder %s128, %s131
    %p140 = scmp.eq.s32.totalorder %s15, 1
    %p141 = por %p139, %p140
    %p142 = scmp.ne.s32.totalorder %s131, %s132
    %p143 = scmp.eq.s32.totalorder %s15, 0
    %p144 = por %p142, %p143
    %p145 = scmp.ne.s32.totalorder %s131, %s132
    %p146 = scmp.eq.s32.totalorder %s16, 1
    %p147 = por %p145, %p146
    %p149 = scmp.ne.s32.totalorder %s132, %s148
    %p150 = scmp.eq.s32.totalorder %s16, 0
    %p151 = por %p149, %p150
    %p152 = scmp.le.s32.totalorder 1, %s10
    %p153 = scmp.lt.s32.totalorder %s10, 3
    %p154 = pnand %p152, %p153
    %p155 = pneg %p154
    // Predicated region
    $region9: #{generator_forward.12} parent=5 // pred_check
      _
    $region10: #{generator_forward.12} parent=5 // pred_check_branch
      %157 = sbr.rel (%p154) target = $region12
    $region11: #{generator_forward.12} parent=5 // pred_region
      %s158 = ssub.s32 %s10, 1
      // Predicated region
      $region13: #{generator_forward.12} parent=11 // pred_check
        %p159 = pneg %p74
      $region14: #{generator_forward.12} parent=11 // pred_check_branch
        %161 = sbr.rel (%p159) target = $region16
      $region15: #{generator_forward.12} parent=11 // pred_region
        %s162 = smul.u32 2, %s20
        %p163 = scmp.lt.s32.totalorder %s162, 1
        %s164 = scalar_select %p163, %s162, 1
        %s165 = smul.addr %s164, 4
        %s166 = scalar_lea.vmem %s1, %s165
        %s167 = smul.u32 2, %s20
      $region16: #{generator_forward.12} parent=11 // pred_fallthru
        _
      // Predicated region
      $region17: #{generator_forward.12} parent=11 // pred_check
        %p168 = pneg %p95
      $region18: #{generator_forward.12} parent=11 // pred_check_branch
        %170 = sbr.rel (%p168) target = $region20
      $region19: #{generator_forward.12} parent=11 // pred_region
        _
      $region20: #{generator_forward.12} parent=11 // pred_fallthru
        _
      // Predicated region
      $region21: #{generator_forward.12} parent=11 // pred_check
        %p171 = pneg %p116
      $region22: #{generator_forward.12} parent=11 // pred_check_branch
        %173 = sbr.rel (%p171) target = $region24
      $region23: #{generator_forward.12} parent=11 // pred_region
        _
      $region24: #{generator_forward.12} parent=11 // pred_fallthru
        _
    $region12: #{generator_forward.12} parent=5 // pred_fallthru
      _
    %p174 = scmp.lt.s32.totalorder %s10, 2
    // Predicated region
    $region25: #{generator_forward.12} parent=5 // pred_check
      %p175 = pneg %p174
    $region26: #{generator_forward.12} parent=5 // pred_check_branch
      %177 = sbr.rel (%p175) target = $region28
    $region27: #{generator_forward.12} parent=5 // pred_region
      // Predicated region
      $region29: #{generator_forward.12} parent=27 // pred_check
        %p178 = pneg %p42
      $region30: #{generator_forward.12} parent=27 // pred_check_branch
        %180 = sbr.rel (%p178) target = $region32
      $region31: #{generator_forward.12} parent=27 // pred_region
        %s181 = smul.u32 8, %s17
        %p182 = scmp.lt.s32.totalorder %s181, 15
        %s183 = scalar_select %p182, %s181, 15
        %s184 = smul.addr %s183, 4
        %s185 = scalar_lea.vmem %s0, %s184
        %s186 = smul.u32 8, %s17
      $region32: #{generator_forward.12} parent=27 // pred_fallthru
        _
    $region28: #{generator_forward.12} parent=5 // pred_fallthru
      _
    %p187 = scmp.le.s32.totalorder 1, %s10
    %p188 = scmp.lt.s32.totalorder %s10, 3
    %p189 = pnand %p187, %p188
    %p190 = pneg %p189
    // Predicated region
    $region33: #{generator_forward.12} parent=5 // pred_check
      _
    $region34: #{generator_forward.12} parent=5 // pred_check_branch
      %192 = sbr.rel (%p189) target = $region36
    $region35: #{generator_forward.12} parent=5 // pred_region
      %s193 = ssub.s32 %s10, 1
      %s194 = smul.u32 8, %s19
      %p195 = scmp.lt.s32.totalorder %s194, 15
      %s196 = scalar_select %p195, %s194, 15
      %s197 = smul.addr %s196, 4
      %s198 = scalar_lea.vmem %s0, %s197
      %p199 = pneg %p48
      %p200 = pneg %p45
      %s201 = smul.u32 2, %s20
      %p202 = scmp.lt.s32.totalorder %s201, 1
      %s203 = scalar_select %p202, %s201, 1
      %s204 = smul.addr %s203, 4
      %s205 = scalar_lea.vmem %s1, %s204
      %p206 = pneg %p74
      %p207 = pneg %p71
      %p208 = pneg %p95
      %p209 = pneg %p92
      %p210 = pneg %p116
      %p211 = pneg %p113
      %p212 = pneg %p144
      %p213 = pneg %p141
      %s214 = smul.u32 8, %s19
      %s215 = smul.u32 2, %s20
      %p216 = scmp.lt.s32.totalorder %s214, 15
      %s217 = scalar_select %p216, %s214, 15
      %p218 = scmp.lt.s32.totalorder %s215, 1
      %s219 = scalar_select %p218, %s215, 1
      %s220 = smul.addr %s217, 2
      %s221 = sadd.s32 %s219, %s220
      %s222 = smul.addr %s221, 4
      %s223 = scalar_lea.vmem %s4, %s222
      %s224 = smul.u32 8, %s19
      %p225 = scmp.lt.s32.totalorder %s224, 15
      %s226 = scalar_select %p225, %s224, 15
      %s227 = smul.addr %s226, 4
      %s228 = scalar_lea.vmem %s0, %s227
      %s229 = smul.u32 8, %s19
      %s230 = smul.u32 2, %s20
      %p231 = scmp.lt.s32.totalorder %s230, 1
      %s232 = scalar_select %p231, %s230, 1
      %s233 = smul.addr %s232, 4
      %s234 = scalar_lea.vmem %s1, %s233
      %s235 = smul.u32 2, %s20
      %s236 = smul.u32 8, %s19
      %s237 = smul.u32 2, %s20
      %p238 = scmp.lt.s32.totalorder %s236, 15
      %s239 = scalar_select %p238, %s236, 15
      %p240 = scmp.lt.s32.totalorder %s237, 1
      %s241 = scalar_select %p240, %s237, 1
      %s242 = smul.addr %s239, 2
      %s243 = sadd.s32 %s241, %s242
      %s244 = smul.addr %s243, 4
      %s245 = scalar_lea.vmem %s4, %s244
      %s246 = smul.u32 8, %s19
      %s247 = smul.u32 2, %s20
      %v249 = vld [vmem:[%s228] sm:$0xf]
      %v250 = vld [vmem:[%s228 + $0x4] sm:$0xf]
      %v251 = vld [vmem:[%s228 + $0x8] sm:$0xf]
      %v252 = vld [vmem:[%s228 + $0xc] sm:$0xf]
      %v253 = vld [vmem:[%s228 + $0x10] sm:$0xf]
      %v254 = vld [vmem:[%s228 + $0x14] sm:$0xf]
      %v255 = vld [vmem:[%s228 + $0x18] sm:$0xf]
      %v256 = vld [vmem:[%s228 + $0x1c] sm:$0xf]
      %v257 = vunpack.c.l.bf16 %v249
      %v258 = vunpack.c.l.bf16 %v250
      %v259 = vunpack.c.l.bf16 %v251
      %v260 = vunpack.c.l.bf16 %v252
      %v261 = vunpack.c.l.bf16 %v253
      %v262 = vunpack.c.l.bf16 %v254
      %v263 = vunpack.c.l.bf16 %v255
      %v264 = vunpack.c.l.bf16 %v256
      %v265 = vld [vmem:[%s2] sm:$0x1]
      %v267 = vlaneseq
      %v268 = vshrl.u32 %v267, 7
      %v269 = vsub.s32 0, %v268
      %v270 = vrot.slane %v265, %v269
      %v272 = vmul.f32 %v257, %v270
      %v273 = vmul.f32 %v258, %v270
      %v274 = vmul.f32 %v259, %v270
      %v275 = vmul.f32 %v260, %v270
      %v276 = vmul.f32 %v261, %v270
      %v277 = vmul.f32 %v262, %v270
      %v278 = vmul.f32 %v263, %v270
      %v279 = vmul.f32 %v264, %v270
      %v280 = vld [vmem:[%s3] sm:$0x1]
      %v282 = vlaneseq
      %v283 = vshrl.u32 %v282, 7
      %v284 = vsub.s32 0, %v283
      %v285 = vrot.slane %v280, %v284
      %v287 = vadd.f32 %v272, %v285
      %v288 = vadd.f32 %v273, %v285
      %v289 = vadd.f32 %v274, %v285
      %v290 = vadd.f32 %v275, %v285
      %v291 = vadd.f32 %v276, %v285
      %v292 = vadd.f32 %v277, %v285
      %v293 = vadd.f32 %v278, %v285
      %v294 = vadd.f32 %v279, %v285
      %v295 = vmax.f32 %v287, 0.0
      %v296 = vmax.f32 %v288, 0.0
      %v297 = vmax.f32 %v289, 0.0
      %v298 = vmax.f32 %v290, 0.0
      %v299 = vmax.f32 %v291, 0.0
      %v300 = vmax.f32 %v292, 0.0
      %v301 = vmax.f32 %v293, 0.0
      %v302 = vmax.f32 %v294, 0.0
      %v303 = vpack.c.bf16 %v296, %v295
      %v304 = vpack.c.bf16 %v298, %v297
      %v305 = vpack.c.bf16 %v300, %v299
      %v306 = vpack.c.bf16 %v302, %v301
      %v307 = vld [vmem:[%s234] sm:$0xff]
      %v308 = vld [vmem:[%s234 + $0x8] sm:$0xff]
      %v309 = vld [vmem:[%s234 + $0x10] sm:$0xff]
      %v310 = vld [vmem:[%s234 + $0x18] sm:$0xff]
      %v315 = vunpack.c.l.b16 %v307
      %v316 = vunpack.c.h.b16 %v307
      %v317 = vunpack.c.l.b16 %v308
      %v318 = vunpack.c.h.b16 %v308
      %v319 = vunpack.c.l.b16 %v309
      %v320 = vunpack.c.h.b16 %v309
      %v321 = vunpack.c.l.b16 %v310
      %v322 = vunpack.c.h.b16 %v310
      %v323 = vpack.c.b16 %v317, %v315
      %v324 = vpack.c.b16 %v318, %v316
      %v325 = vpack.c.b16 %v321, %v319
      %v326 = vpack.c.b16 %v322, %v320
      %vm331 = vcmask 261120
      %v333 = vsel %vm331, %v303, 0
      %v336 = vsel %vm331, %v304, 0
      %v339 = vsel %vm331, %v305, 0
      %v342 = vsel %vm331, %v306, 0
      %344 = vmatprep.subr.bf16.mxu0 %v324
      %345 = vmatpush1.bf16.msra.mxu0 %v323
      %346 = vmatprep.subr.bf16.mxu0 %v326
      %347 = vmatpush1.bf16.msra.mxu0 %v325
      %348 = vmatprep.subr.bf16.mxu0 0
      %349 = vmatpush1.bf16.msra.mxu0 0
      %350 = vmatprep.subr.bf16.mxu0 0
      %351 = vmatpush1.bf16.msra.mxu0 0
      %352 = vmatprep.subr.bf16.mxu0 0
      %353 = vmatpush1.bf16.msra.mxu0 0
      %354 = vmatprep.subr.bf16.mxu0 0
      %355 = vmatpush1.bf16.msra.mxu0 0
      %356 = vmatprep.subr.bf16.mxu0 0
      %357 = vmatpush1.bf16.msra.mxu0 0
      %358 = vmatprep.subr.bf16.mxu0 0
      %359 = vmatpush1.bf16.msra.mxu0 0
      %360 = vmatprep.subr.bf16.mxu0 0
      %361 = vmatpush1.bf16.msra.mxu0 0
      %362 = vmatprep.subr.bf16.mxu0 0
      %363 = vmatpush1.bf16.msra.mxu0 0
      %364 = vmatprep.subr.bf16.mxu0 0
      %365 = vmatpush1.bf16.msra.mxu0 0
      %366 = vmatprep.subr.bf16.mxu0 0
      %367 = vmatpush1.bf16.msra.mxu0 0
      %368 = vmatprep.subr.bf16.mxu0 0
      %369 = vmatpush1.bf16.msra.mxu0 0
      %370 = vmatprep.subr.bf16.mxu0 0
      %371 = vmatpush1.bf16.msra.mxu0 0
      %372 = vmatprep.subr.bf16.mxu0 0
      %373 = vmatpush1.bf16.msra.mxu0 0
      %374 = vmatprep.subr.bf16.mxu0 0
      %375 = vmatpush1.bf16.msra.mxu0 0
      %376 = vmatprep.mubr.bf16.mxu0 0
      %377 = vmatmul.mubr.bf16.gmra.mrb[0].mxu0 %v333
      %v378 = vpop.f32.mrb[0].mxu0
      %v379 = vadd.f32 0.0, %v378
      %v380 = vpop.f32.mrb[0].mxu0
      %v381 = vadd.f32 0.0, %v380
      %v382 = vpop.f32.mrb[0].mxu0
      %v383 = vadd.f32 0.0, %v382
      %v384 = vpop.f32.mrb[0].mxu0
      %v385 = vadd.f32 0.0, %v384
      %386 = vmatprep.mubr.bf16.mxu0 0
      %387 = vmatmul.mubr.bf16.gmra.mrb[0].mxu0 %v336
      %v388 = vpop.f32.mrb[0].mxu0
      %v389 = vadd.f32 0.0, %v388
      %v390 = vpop.f32.mrb[0].mxu0
      %v391 = vadd.f32 0.0, %v390
      %v392 = vpop.f32.mrb[0].mxu0
      %v393 = vadd.f32 0.0, %v392
      %v394 = vpop.f32.mrb[0].mxu0
      %v395 = vadd.f32 0.0, %v394
      %396 = vmatprep.mubr.bf16.mxu0 0
      %397 = vmatmul.mubr.bf16.gmra.mrb[0].mxu0 %v339
      %v398 = vpop.f32.mrb[0].mxu0
      %v399 = vadd.f32 0.0, %v398
      %v400 = vpop.f32.mrb[0].mxu0
      %v401 = vadd.f32 0.0, %v400
      %v402 = vpop.f32.mrb[0].mxu0
      %v403 = vadd.f32 0.0, %v402
      %v404 = vpop.f32.mrb[0].mxu0
      %v405 = vadd.f32 0.0, %v404
      %406 = vmatprep.mubr.bf16.mxu0 0
      %407 = vmatmul.mubr.bf16.gmra.mrb[0].mxu0 %v342
      %v408 = vpop.f32.mrb[0].mxu0
      %v409 = vadd.f32 0.0, %v408
      %v410 = vpop.f32.mrb[0].mxu0
      %v411 = vadd.f32 0.0, %v410
      %v412 = vpop.f32.mrb[0].mxu0
      %v413 = vadd.f32 0.0, %v412
      %v414 = vpop.f32.mrb[0].mxu0
      %v415 = vadd.f32 0.0, %v414
      %416 = vdwg.mxu0
      %v417 = vpack.c.bf16 %v383, %v379
      %v418 = vpack.c.bf16 %v385, %v381
      %v419 = vpack.c.bf16 %v393, %v389
      %v420 = vpack.c.bf16 %v395, %v391
      %v421 = vpack.c.bf16 %v403, %v399
      %v422 = vpack.c.bf16 %v405, %v401
      %v423 = vpack.c.bf16 %v413, %v409
      %v424 = vpack.c.bf16 %v415, %v411
      %v433 = vunpack.c.l.b16 %v417
      %v434 = vunpack.c.l.b16 %v418
      %v435 = vunpack.c.h.b16 %v417
      %v436 = vunpack.c.h.b16 %v418
      %v437 = vunpack.c.l.b16 %v419
      %v438 = vunpack.c.l.b16 %v420
      %v439 = vunpack.c.h.b16 %v419
      %v440 = vunpack.c.h.b16 %v420
      %v441 = vunpack.c.l.b16 %v421
      %v442 = vunpack.c.l.b16 %v422
      %v443 = vunpack.c.h.b16 %v421
      %v444 = vunpack.c.h.b16 %v422
      %v445 = vunpack.c.l.b16 %v423
      %v446 = vunpack.c.l.b16 %v424
      %v447 = vunpack.c.h.b16 %v423
      %v448 = vunpack.c.h.b16 %v424
      %v449 = vpack.c.b16 %v434, %v433
      %v450 = vpack.c.b16 %v436, %v435
      %v451 = vpack.c.b16 %v438, %v437
      %v452 = vpack.c.b16 %v440, %v439
      %v453 = vpack.c.b16 %v442, %v441
      %v454 = vpack.c.b16 %v444, %v443
      %v455 = vpack.c.b16 %v446, %v445
      %v456 = vpack.c.b16 %v448, %v447
      %465 = vst [vmem:[%s245] sm:$0xff] %v449
      %466 = vst [vmem:[%s245 + $0x8] sm:$0xff] %v450
      %467 = vst [vmem:[%s245 + $0x10] sm:$0xff] %v451
      %468 = vst [vmem:[%s245 + $0x18] sm:$0xff] %v452
      %469 = vst [vmem:[%s245 + $0x20] sm:$0xff] %v453
      %470 = vst [vmem:[%s245 + $0x28] sm:$0xff] %v454
      %471 = vst [vmem:[%s245 + $0x30] sm:$0xff] %v455
      %472 = vst [vmem:[%s245 + $0x38] sm:$0xff] %v456
      %s473 = smul.u32 8, %s19
      %s474 = smul.u32 2, %s20
      %p475 = scmp.lt.s32.totalorder %s473, 15
      %s476 = scalar_select %p475, %s473, 15
      %p477 = scmp.lt.s32.totalorder %s474, 1
      %s478 = scalar_select %p477, %s474, 1
      %s479 = smul.addr %s476, 2
      %s480 = sadd.s32 %s478, %s479
      %s481 = smul.addr %s480, 4
      %s482 = scalar_lea.vmem %s4, %s481
      // Predicated region
      $region37: #{generator_forward.12} parent=35 // pred_check
        %p483 = pneg %p141
      $region38: #{generator_forward.12} parent=35 // pred_check_branch
        %485 = sbr.rel (%p483) target = $region40
      $region39: #{generator_forward.12} parent=35 // pred_region
        %s486 = smul.u32 8, %s19
        %s487 = smul.u32 2, %s20
      $region40: #{generator_forward.12} parent=35 // pred_fallthru
        _
    $region36: #{generator_forward.12} parent=5 // pred_fallthru
      _
    %p488 = scmp.le.s32.totalorder 2, %s10
    // Predicated region
    $region41: #{generator_forward.12} parent=5 // pred_check
      %p489 = pneg %p488
    $region42: #{generator_forward.12} parent=5 // pred_check_branch
      %491 = sbr.rel (%p489) target = $region44
    $region43: #{generator_forward.12} parent=5 // pred_region
      %s492 = ssub.s32 %s10, 2
      // Predicated region
      $region45: #{generator_forward.12} parent=43 // pred_check
        %p493 = pneg %p147
      $region46: #{generator_forward.12} parent=43 // pred_check_branch
        %495 = sbr.rel (%p493) target = $region48
      $region47: #{generator_forward.12} parent=43 // pred_region
        %s496 = smul.u32 8, %s21
        %s497 = smul.u32 2, %s22
        %p498 = scmp.lt.s32.totalorder %s496, 15
        %s499 = scalar_select %p498, %s496, 15
        %p500 = scmp.lt.s32.totalorder %s497, 1
        %s501 = scalar_select %p500, %s497, 1
        %s502 = smul.addr %s499, 2
        %s503 = sadd.s32 %s501, %s502
        %s504 = smul.addr %s503, 4
        %s505 = scalar_lea.vmem %s4, %s504
      $region48: #{generator_forward.12} parent=43 // pred_fallthru
        _
    $region44: #{generator_forward.12} parent=5 // pred_fallthru
      _
  $region6: #{generator_forward.12} parent=0 // loop_footer
    %s14 = sadd.s32 1, %s10
  $region7: #{generator_forward.12} parent=0 // loop_footer_branch
    %9 = sbr.rel target = $region3
  $region8: #{generator_forward.12} parent=0 // loop_exit
    _

// kernel: generator_forward.13
$region0: #{generator_forward.13}
  #allocation0 [shape = 'u32[]', space=smem, size = 0x4, offset = 0x4, fixed_abs, tag = 'smem constant byte address 0x4 - core index']
  #allocation1 [shape = 'u32[144,128]{1,0:T(1,128)}', space=vmem, size = 0x12000, scoped, tag = 'internal scratch']
  %s0 = inlined_call_operand.vmem [shape: bf16[32,256], index: 0, kind: input, shape index: {}]
  %s1 = inlined_call_operand.vmem [shape: f32[1,256], index: 1, kind: output, shape index: {0}]
  %s2 = inlined_call_operand.vmem [shape: f32[1,256], index: 2, kind: output, shape index: {1}]
  %3 = xla_tuple %s1, %s2
  %s4 = sld [smem:[#allocation0]]
  $region49: #{generator_forward.13} parent=0
    _
  %s6 = ssub.s32 1, %s4
  %s7 = scalar_select 0, %s6, %s4
  loop: start=0, step=1, limit=4
  $region2: #{generator_forward.13} parent=0 // loop_pre_header
    _
  $region3: #{generator_forward.13} parent=0 // loop_header
    %s9 = sphi 0, %s13
    %p10 = scmp.ge.s32.totalorder %s9, 4
    %s19 = sphi 0, %s21
    %s22 = sphi 0, %s19
    %s23 = sphi 0, %s22
    %s39 = sphi 0, %s23
    %s43 = sphi 0, %s43
    %s45 = sphi 0, %s43
    %s46 = sphi 0, %s45
    %s60 = sphi 0, %s46
    %s64 = sphi 0, %s64
    %s66 = sphi 0, %s64
    %s67 = sphi 0, %s66
    %s81 = sphi 0, %s67
  $region4: #{generator_forward.13} parent=0 // loop_header_branch
    %12 = sbr.rel (%p10) target = $region8
  $region5: #{generator_forward.13} parent=0 // loop_body
    %s14 = ssub.s32 %s9, 1
    %s15 = ssub.s32 %s9, 2
    %s16 = sadd.s32 %s9, 1
    %s17 = ssub.s32 %s9, %s16
    %p18 = scmp.eq.s32.totalorder %s17, 0
    %s20 = sadd.s32 %s19, 1
    %s21 = scalar_select %p18, %s19, %s20
    %p24 = pneg %p18
    %p25 = scmp.eq.s32.totalorder %s9, 1
    %p26 = por %p24, %p25
    %p27 = scmp.ne.s32.totalorder %s19, %s22
    %p28 = scmp.eq.s32.totalorder %s9, 0
    %p29 = por %p27, %p28
    %p30 = scmp.ne.s32.totalorder %s19, %s22
    %p31 = scmp.eq.s32.totalorder %s14, 1
    %p32 = por %p30, %p31
    %p33 = scmp.ne.s32.totalorder %s22, %s23
    %p34 = scmp.eq.s32.totalorder %s14, 0
    %p35 = por %p33, %p34
    %p36 = scmp.ne.s32.totalorder %s22, %s23
    %p37 = scmp.eq.s32.totalorder %s15, 1
    %p38 = por %p36, %p37
    %p40 = scmp.ne.s32.totalorder %s23, %s39
    %p41 = scmp.eq.s32.totalorder %s15, 0
    %p42 = por %p40, %p41
    %s44 = sadd.s32 %s43, 1
    %p47 = scmp.eq.s32.totalorder %s9, 1
    %p48 = scmp.ne.s32.totalorder %s43, %s45
    %p49 = scmp.eq.s32.totalorder %s9, 0
    %p50 = por %p48, %p49
    %p51 = scmp.ne.s32.totalorder %s43, %s45
    %p52 = scmp.eq.s32.totalorder %s14, 1
    %p53 = por %p51, %p52
    %p54 = scmp.ne.s32.totalorder %s45, %s46
    %p55 = scmp.eq.s32.totalorder %s14, 0
    %p56 = por %p54, %p55
    %p57 = scmp.ne.s32.totalorder %s45, %s46
    %p58 = scmp.eq.s32.totalorder %s15, 1
    %p59 = por %p57, %p58
    %p61 = scmp.ne.s32.totalorder %s46, %s60
    %p62 = scmp.eq.s32.totalorder %s15, 0
    %p63 = por %p61, %p62
    %s65 = sadd.s32 %s64, 1
    %p68 = scmp.eq.s32.totalorder %s9, 1
    %p69 = scmp.ne.s32.totalorder %s64, %s66
    %p70 = scmp.eq.s32.totalorder %s9, 0
    %p71 = por %p69, %p70
    %p72 = scmp.ne.s32.totalorder %s64, %s66
    %p73 = scmp.eq.s32.totalorder %s14, 1
    %p74 = por %p72, %p73
    %p75 = scmp.ne.s32.totalorder %s66, %s67
    %p76 = scmp.eq.s32.totalorder %s14, 0
    %p77 = por %p75, %p76
    %p78 = scmp.ne.s32.totalorder %s66, %s67
    %p79 = scmp.eq.s32.totalorder %s15, 1
    %p80 = por %p78, %p79
    %p82 = scmp.ne.s32.totalorder %s67, %s81
    %p83 = scmp.eq.s32.totalorder %s15, 0
    %p84 = por %p82, %p83
    %p85 = scmp.le.s32.totalorder 1, %s9
    %p86 = scmp.lt.s32.totalorder %s9, 3
    %p87 = pnand %p85, %p86
    %p88 = pneg %p87
    // Predicated region
    $region9: #{generator_forward.13} parent=5 // pred_check
      _
    $region10: #{generator_forward.13} parent=5 // pred_check_branch
      %90 = sbr.rel (%p87) target = $region12
    $region11: #{generator_forward.13} parent=5 // pred_region
      %s91 = ssub.s32 %s9, 1
    $region12: #{generator_forward.13} parent=5 // pred_fallthru
      _
    %p92 = scmp.lt.s32.totalorder %s9, 2
    // Predicated region
    $region13: #{generator_forward.13} parent=5 // pred_check
      %p93 = pneg %p92
    $region14: #{generator_forward.13} parent=5 // pred_check_branch
      %95 = sbr.rel (%p93) target = $region16
    $region15: #{generator_forward.13} parent=5 // pred_region
      // Predicated region
      $region17: #{generator_forward.13} parent=15 // pred_check
        %p96 = pneg %p29
      $region18: #{generator_forward.13} parent=15 // pred_check_branch
        %98 = sbr.rel (%p96) target = $region20
      $region19: #{generator_forward.13} parent=15 // pred_region
        %s99 = smul.u32 2, %s9
        %p100 = scmp.lt.s32.totalorder %s99, 3
        %s101 = scalar_select %p100, %s99, 3
        %s102 = smul.addr %s101, 2
        %s103 = smul.addr %s102, 4
        %s104 = scalar_lea.vmem %s0, %s103
        %s105 = smul.u32 2, %s9
      $region20: #{generator_forward.13} parent=15 // pred_fallthru
        _
    $region16: #{generator_forward.13} parent=5 // pred_fallthru
      _
    %p106 = scmp.le.s32.totalorder 1, %s9
    %p107 = scmp.lt.s32.totalorder %s9, 3
    %p108 = pnand %p106, %p107
    %p109 = pneg %p108
    // Predicated region
    $region21: #{generator_forward.13} parent=5 // pred_check
      _
    $region22: #{generator_forward.13} parent=5 // pred_check_branch
      %111 = sbr.rel (%p108) target = $region24
    $region23: #{generator_forward.13} parent=5 // pred_region
      %s112 = ssub.s32 %s9, 1
      %s113 = smul.u32 2, %s14
      %p114 = scmp.lt.s32.totalorder %s113, 3
      %s115 = scalar_select %p114, %s113, 3
      %s116 = smul.addr %s115, 2
      %s117 = smul.addr %s116, 4
      %s118 = scalar_lea.vmem %s0, %s117
      %p119 = pneg %p35
      %p120 = pneg %p32
      %p121 = pneg %p56
      %p122 = pneg %p53
      %p123 = pneg %p77
      %p124 = pneg %p74
      %s125 = smul.u32 2, %s14
      %p126 = scmp.lt.s32.totalorder %s125, 3
      %s127 = scalar_select %p126, %s125, 3
      %s128 = smul.addr %s127, 2
      %s129 = smul.addr %s128, 4
      %s130 = scalar_lea.vmem %s0, %s129
      %s131 = smul.u32 2, %s14
      %p132 = scmp.eq.s32.totalorder %s14, 0
      // Predicated region
      $region25: #{generator_forward.13} parent=23 // pred_check
        %p133 = pneg %p132
      $region26: #{generator_forward.13} parent=23 // pred_check_branch
        %135 = sbr.rel (%p133) target = $region28
      $region27: #{generator_forward.13} parent=23 // pred_region
        %v136 = vlaneseq
        %vm137 = vcmp.ge.s32.totalorder %v136, 0
        %vm138 = vcmp.lt.s32.totalorder %v136, 256
        %vm139 = vmand %vm137, %vm138
        %140 = vst.msk [vmem:[%s1] sm:$0x3] %vm139, 0.0
        %141 = vst.msk [vmem:[%s2] sm:$0x3] %vm139, 0.0
      $region28: #{generator_forward.13} parent=23 // pred_fallthru
        _
      %v142 = vld [vmem:[%s130] sm:$0xff]
      %v143 = vld [vmem:[%s130 + $0x8] sm:$0xff]
      %v144 = vunpack.c.l.bf16 %v142
      %v145 = vunpack.c.h.bf16 %v142
      %v146 = vunpack.c.l.bf16 %v143
      %v147 = vunpack.c.h.bf16 %v143
      %v148 = vld [vmem:[%s1] sm:$0x3]
      %v149 = vadd.f32 %v144, %v146
      %v150 = vrot.slane %v149, 4
      %v151 = vadd.f32 %v149, %v150
      %v152 = vrot.slane %v151, 2
      %v153 = vadd.f32 %v151, %v152
      %v154 = vrot.slane %v153, 1
      %v155 = vadd.f32 %v153, %v154
      %v156 = vadd.f32 %v145, %v147
      %v157 = vrot.slane %v156, 4
      %v158 = vadd.f32 %v156, %v157
      %v159 = vrot.slane %v158, 2
      %v160 = vadd.f32 %v158, %v159
      %v161 = vrot.slane %v160, 1
      %v162 = vadd.f32 %v160, %v161
      %v165 = vcombine.low %v155, %v162
      %v167 = vunpack.c.l.s4 1966171168
      %v168 = vunpack.c.0.s8 %v167
      %v169 = vlaneseq
      %v170 = vshrl.u32 %v169, 7
      %v171 = vsub.s32 %v168, %v170
      %v172 = vrot.slane %v165, %v171
      %v174 = vunpack.c.l.s4 1966171168
      %v175 = vunpack.c.0.s8 %v174
      %v176 = vlaneseq
      %v177 = vshrl.u32 %v176, 7
      %v178 = vsub.s32 %v175, %v177
      %v179 = vrot.slane %v172, %v178
      %v181 = vadd.f32 %v148, %v179
      %v182 = vlaneseq
      %vm183 = vcmp.ge.s32.totalorder %v182, 0
      %vm184 = vcmp.lt.s32.totalorder %v182, 256
      %vm185 = vmand %vm183, %vm184
      %186 = vst.msk [vmem:[%s1] sm:$0x3] %vm185, %v181
      %v187 = vld [vmem:[%s2] sm:$0x3]
      %v188 = vmul.f32 %v144, %v144
      %v189 = vmul.f32 %v145, %v145
      %v190 = vmul.f32 %v146, %v146
      %v191 = vmul.f32 %v147, %v147
      %v192 = vadd.f32 %v188, %v190
      %v193 = vrot.slane %v192, 4
      %v194 = vadd.f32 %v192, %v193
      %v195 = vrot.slane %v194, 2
      %v196 = vadd.f32 %v194, %v195
      %v197 = vrot.slane %v196, 1
      %v198 = vadd.f32 %v196, %v197
      %v199 = vadd.f32 %v189, %v191
      %v200 = vrot.slane %v199, 4
      %v201 = vadd.f32 %v199, %v200
      %v202 = vrot.slane %v201, 2
      %v203 = vadd.f32 %v201, %v202
      %v204 = vrot.slane %v203, 1
      %v205 = vadd.f32 %v203, %v204
      %v208 = vcombine.low %v198, %v205
      %v210 = vunpack.c.l.s4 1966171168
      %v211 = vunpack.c.0.s8 %v210
      %v212 = vlaneseq
      %v213 = vshrl.u32 %v212, 7
      %v214 = vsub.s32 %v211, %v213
      %v215 = vrot.slane %v208, %v214
      %v217 = vunpack.c.l.s4 1966171168
      %v218 = vunpack.c.0.s8 %v217
      %v219 = vlaneseq
      %v220 = vshrl.u32 %v219, 7
      %v221 = vsub.s32 %v218, %v220
      %v222 = vrot.slane %v215, %v221
      %v224 = vadd.f32 %v187, %v222
      %225 = vst.msk [vmem:[%s2] sm:$0x3] %vm185, %v224
      // Predicated region
      $region29: #{generator_forward.13} parent=23 // pred_check
        %p226 = pneg %p53
      $region30: #{generator_forward.13} parent=23 // pred_check_branch
        %228 = sbr.rel (%p226) target = $region32
      $region31: #{generator_forward.13} parent=23 // pred_region
        _
      $region32: #{generator_forward.13} parent=23 // pred_fallthru
        _
      // Predicated region
      $region33: #{generator_forward.13} parent=23 // pred_check
        %p229 = pneg %p74
      $region34: #{generator_forward.13} parent=23 // pred_check_branch
        %231 = sbr.rel (%p229) target = $region36
      $region35: #{generator_forward.13} parent=23 // pred_region
        _
      $region36: #{generator_forward.13} parent=23 // pred_fallthru
        _
      // Predicated region
      $region37: #{generator_forward.13} parent=23 // pred_check
        %p232 = pneg %p53
      $region38: #{generator_forward.13} parent=23 // pred_check_branch
        %234 = sbr.rel (%p232) target = $region40
      $region39: #{generator_forward.13} parent=23 // pred_region
        _
      $region40: #{generator_forward.13} parent=23 // pred_fallthru
        _
      // Predicated region
      $region41: #{generator_forward.13} parent=23 // pred_check
        %p235 = pneg %p74
      $region42: #{generator_forward.13} parent=23 // pred_check_branch
        %237 = sbr.rel (%p235) target = $region44
      $region43: #{generator_forward.13} parent=23 // pred_region
        _
      $region44: #{generator_forward.13} parent=23 // pred_fallthru
        _
    $region24: #{generator_forward.13} parent=5 // pred_fallthru
      _
    %p238 = scmp.le.s32.totalorder 2, %s9
    // Predicated region
    $region45: #{generator_forward.13} parent=5 // pred_check
      %p239 = pneg %p238
    $region46: #{generator_forward.13} parent=5 // pred_check_branch
      %241 = sbr.rel (%p239) target = $region48
    $region47: #{generator_forward.13} parent=5 // pred_region
      %s242 = ssub.s32 %s9, 2
    $region48: #{generator_forward.13} parent=5 // pred_fallthru
      _
  $region6: #{generator_forward.13} parent=0 // loop_footer
    %s13 = sadd.s32 1, %s9
  $region7: #{generator_forward.13} parent=0 // loop_footer_branch
    %8 = sbr.rel target = $region3
  $region8: #{generator_forward.13} parent=0 // loop_exit
    _

// kernel: generator_forward.14
$region0: #{generator_forward.14}
  #allocation0 [shape = 'u32[]', space=smem, size = 0x4, offset = 0x4, fixed_abs, tag = 'smem constant byte address 0x4 - core index']
  #allocation1 [shape = 'u32[144,128]{1,0:T(1,128)}', space=vmem, size = 0x12000, scoped, tag = 'internal scratch']
  %s0 = inlined_call_operand.vmem [shape: bf16[512,16], index: 0, kind: input, shape index: {}]
  %s1 = inlined_call_operand.vmem [shape: bf16[16,128], index: 1, kind: input, shape index: {}]
  %s2 = inlined_call_operand.vmem [shape: f32[1,16], index: 2, kind: input, shape index: {}]
  %s3 = inlined_call_operand.vmem [shape: f32[1,16], index: 3, kind: input, shape index: {}]
  %s4 = inlined_call_operand.vmem [shape: bf16[512,128], index: 4, kind: output, shape index: {}]
  %s5 = sld [smem:[#allocation0]]
  $region49: #{generator_forward.14} parent=0
    _
  %s7 = ssub.s32 1, %s5
  %s8 = scalar_select 0, %s7, %s5
  loop: start=0, step=1, limit=4
  $region2: #{generator_forward.14} parent=0 // loop_pre_header
    _
  $region3: #{generator_forward.14} parent=0 // loop_header
    %s10 = sphi 0, %s14
    %p11 = scmp.ge.s32.totalorder %s10, 4
    %s17 = sphi 0, %s29
    %s18 = sphi 0, %s25
    %s19 = sphi 0, %s17
    %s20 = sphi 0, %s18
    %s21 = sphi 0, %s19
    %s22 = sphi 0, %s20
    %s32 = sphi 0, %s34
    %s35 = sphi 0, %s32
    %s36 = sphi 0, %s35
    %s52 = sphi 0, %s36
    %s58 = sphi 0, %s60
    %s61 = sphi 0, %s58
    %s62 = sphi 0, %s61
    %s78 = sphi 0, %s62
    %s82 = sphi 0, %s82
    %s84 = sphi 0, %s82
    %s85 = sphi 0, %s84
    %s99 = sphi 0, %s85
    %s103 = sphi 0, %s103
    %s105 = sphi 0, %s103
    %s106 = sphi 0, %s105
    %s120 = sphi 0, %s106
    %s128 = sphi 0, %s130
    %s131 = sphi 0, %s128
    %s132 = sphi 0, %s131
    %s148 = sphi 0, %s132
  $region4: #{generator_forward.14} parent=0 // loop_header_branch
    %13 = sbr.rel (%p11) target = $region8
  $region5: #{generator_forward.14} parent=0 // loop_body
    %s15 = ssub.s32 %s10, 1
    %s16 = ssub.s32 %s10, 2
    %s23 = sadd.s32 1, %s18
    %p24 = scmp.ge.s32.totalorder %s23, 1
    %s25 = scalar_select %p24, 0, %s23
    %s26 = sadd.s32 1, %s17
    %s27 = scalar_select %p24, %s26, %s17
    %p28 = scmp.ge.s32.totalorder %s27, 2
    %s29 = scalar_select %p28, 0, %s27
    %s30 = ssub.s32 %s17, %s29
    %p31 = scmp.eq.s32.totalorder %s30, 0
    %s33 = sadd.s32 %s32, 1
    %s34 = scalar_select %p31, %s32, %s33
    %p37 = pneg %p31
    %p38 = scmp.eq.s32.totalorder %s10, 1
    %p39 = por %p37, %p38
    %p40 = scmp.ne.s32.totalorder %s32, %s35
    %p41 = scmp.eq.s32.totalorder %s10, 0
    %p42 = por %p40, %p41
    %p43 = scmp.ne.s32.totalorder %s32, %s35
    %p44 = scmp.eq.s32.totalorder %s15, 1
    %p45 = por %p43, %p44
    %p46 = scmp.ne.s32.totalorder %s35, %s36
    %p47 = scmp.eq.s32.totalorder %s15, 0
    %p48 = por %p46, %p47
    %p49 = scmp.ne.s32.totalorder %s35, %s36
    %p50 = scmp.eq.s32.totalorder %s16, 1
    %p51 = por %p49, %p50
    %p53 = scmp.ne.s32.totalorder %s36, %s52
    %p54 = scmp.eq.s32.totalorder %s16, 0
    %p55 = por %p53, %p54
    %s56 = ssub.s32 %s18, %s25
    %p57 = scmp.eq.s32.totalorder %s56, 0
    %s59 = sadd.s32 %s58, 1
    %s60 = scalar_select %p57, %s58, %s59
    %p63 = pneg %p57
    %p64 = scmp.eq.s32.totalorder %s10, 1
    %p65 = por %p63, %p64
    %p66 = scmp.ne.s32.totalorder %s58, %s61
    %p67 = scmp.eq.s32.totalorder %s10, 0
    %p68 = por %p66, %p67
    %p69 = scmp.ne.s32.totalorder %s58, %s61
    %p70 = scmp.eq.s32.totalorder %s15, 1
    %p71 = por %p69, %p70
    %p72 = scmp.ne.s32.totalorder %s61, %s62
    %p73 = scmp.eq.s32.totalorder %s15, 0
    %p74 = por %p72, %p73
    %p75 = scmp.ne.s32.totalorder %s61, %s62
    %p76 = scmp.eq.s32.totalorder %s16, 1
    %p77 = por %p75, %p76
    %p79 = scmp.ne.s32.totalorder %s62, %s78
    %p80 = scmp.eq.s32.totalorder %s16, 0
    %p81 = por %p79, %p80
    %s83 = sadd.s32 %s82, 1
    %p86 = scmp.eq.s32.totalorder %s10, 1
    %p87 = scmp.ne.s32.totalorder %s82, %s84
    %p88 = scmp.eq.s32.totalorder %s10, 0
    %p89 = por %p87, %p88
    %p90 = scmp.ne.s32.totalorder %s82, %s84
    %p91 = scmp.eq.s32.totalorder %s15, 1
    %p92 = por %p90, %p91
    %p93 = scmp.ne.s32.totalorder %s84, %s85
    %p94 = scmp.eq.s32.totalorder %s15, 0
    %p95 = por %p93, %p94
    %p96 = scmp.ne.s32.totalorder %s84, %s85
    %p97 = scmp.eq.s32.totalorder %s16, 1
    %p98 = por %p96, %p97
    %p100 = scmp.ne.s32.totalorder %s85, %s99
    %p101 = scmp.eq.s32.totalorder %s16, 0
    %p102 = por %p100, %p101
    %s104 = sadd.s32 %s103, 1
    %p107 = scmp.eq.s32.totalorder %s10, 1
    %p108 = scmp.ne.s32.totalorder %s103, %s105
    %p109 = scmp.eq.s32.totalorder %s10, 0
    %p110 = por %p108, %p109
    %p111 = scmp.ne.s32.totalorder %s103, %s105
    %p112 = scmp.eq.s32.totalorder %s15, 1
    %p113 = por %p111, %p112
    %p114 = scmp.ne.s32.totalorder %s105, %s106
    %p115 = scmp.eq.s32.totalorder %s15, 0
    %p116 = por %p114, %p115
    %p117 = scmp.ne.s32.totalorder %s105, %s106
    %p118 = scmp.eq.s32.totalorder %s16, 1
    %p119 = por %p117, %p118
    %p121 = scmp.ne.s32.totalorder %s106, %s120
    %p122 = scmp.eq.s32.totalorder %s16, 0
    %p123 = por %p121, %p122
    %s124 = ssub.s32 %s17, %s29
    %s125 = ssub.s32 %s18, %s25
    %s126 = sor.u32 %s124, %s125
    %p127 = scmp.eq.s32.totalorder %s126, 0
    %s129 = sadd.s32 %s128, 1
    %s130 = scalar_select %p127, %s128, %s129
    %p133 = pneg %p127
    %p134 = scmp.eq.s32.totalorder %s10, 1
    %p135 = por %p133, %p134
    %p136 = scmp.ne.s32.totalorder %s128, %s131
    %p137 = scmp.eq.s32.totalorder %s10, 0
    %p138 = por %p136, %p137
    %p139 = scmp.ne.s32.totalorder %s128, %s131
    %p140 = scmp.eq.s32.totalorder %s15, 1
    %p141 = por %p139, %p140
    %p142 = scmp.ne.s32.totalorder %s131, %s132
    %p143 = scmp.eq.s32.totalorder %s15, 0
    %p144 = por %p142, %p143
    %p145 = scmp.ne.s32.totalorder %s131, %s132
    %p146 = scmp.eq.s32.totalorder %s16, 1
    %p147 = por %p145, %p146
    %p149 = scmp.ne.s32.totalorder %s132, %s148
    %p150 = scmp.eq.s32.totalorder %s16, 0
    %p151 = por %p149, %p150
    %p152 = scmp.le.s32.totalorder 1, %s10
    %p153 = scmp.lt.s32.totalorder %s10, 3
    %p154 = pnand %p152, %p153
    %p155 = pneg %p154
    // Predicated region
    $region9: #{generator_forward.14} parent=5 // pred_check
      _
    $region10: #{generator_forward.14} parent=5 // pred_check_branch
      %157 = sbr.rel (%p154) target = $region12
    $region11: #{generator_forward.14} parent=5 // pred_region
      %s158 = ssub.s32 %s10, 1
      // Predicated region
      $region13: #{generator_forward.14} parent=11 // pred_check
        %p159 = pneg %p74
      $region14: #{generator_forward.14} parent=11 // pred_check_branch
        %161 = sbr.rel (%p159) target = $region16
      $region15: #{generator_forward.14} parent=11 // pred_region
        %p162 = scmp.lt.s32.totalorder %s20, 0
        %s163 = scalar_select %p162, %s20, 0
        %s164 = smul.addr %s163, 4
        %s165 = scalar_lea.vmem %s1, %s164
      $region16: #{generator_forward.14} parent=11 // pred_fallthru
        _
      // Predicated region
      $region17: #{generator_forward.14} parent=11 // pred_check
        %p166 = pneg %p95
      $region18: #{generator_forward.14} parent=11 // pred_check_branch
        %168 = sbr.rel (%p166) target = $region20
      $region19: #{generator_forward.14} parent=11 // pred_region
        _
      $region20: #{generator_forward.14} parent=11 // pred_fallthru
        _
      // Predicated region
      $region21: #{generator_forward.14} parent=11 // pred_check
        %p169 = pneg %p116
      $region22: #{generator_forward.14} parent=11 // pred_check_branch
        %171 = sbr.rel (%p169) target = $region24
      $region23: #{generator_forward.14} parent=11 // pred_region
        _
      $region24: #{generator_forward.14} parent=11 // pred_fallthru
        _
    $region12: #{generator_forward.14} parent=5 // pred_fallthru
      _
    %p172 = scmp.lt.s32.totalorder %s10, 2
    // Predicated region
    $region25: #{generator_forward.14} parent=5 // pred_check
      %p173 = pneg %p172
    $region26: #{generator_forward.14} parent=5 // pred_check_branch
      %175 = sbr.rel (%p173) target = $region28
    $region27: #{generator_forward.14} parent=5 // pred_region
      // Predicated region
      $region29: #{generator_forward.14} parent=27 // pred_check
        %p176 = pneg %p42
      $region30: #{generator_forward.14} parent=27 // pred_check_branch
        %178 = sbr.rel (%p176) target = $region32
      $region31: #{generator_forward.14} parent=27 // pred_region
        %s179 = smul.u32 32, %s17
        %p180 = scmp.lt.s32.totalorder %s179, 63
        %s181 = scalar_select %p180, %s179, 63
        %s182 = smul.addr %s181, 4
        %s183 = scalar_lea.vmem %s0, %s182
        %s184 = smul.u32 32, %s17
      $region32: #{generator_forward.14} parent=27 // pred_fallthru
        _
    $region28: #{generator_forward.14} parent=5 // pred_fallthru
      _
    %p185 = scmp.le.s32.totalorder 1, %s10
    %p186 = scmp.lt.s32.totalorder %s10, 3
    %p187 = pnand %p185, %p186
    %p188 = pneg %p187
    // Predicated region
    $region33: #{generator_forward.14} parent=5 // pred_check
      _
    $region34: #{generator_forward.14} parent=5 // pred_check_branch
      %190 = sbr.rel (%p187) target = $region36
    $region35: #{generator_forward.14} parent=5 // pred_region
      %s191 = ssub.s32 %s10, 1
      %s192 = smul.u32 32, %s19
      %p193 = scmp.lt.s32.totalorder %s192, 63
      %s194 = scalar_select %p193, %s192, 63
      %s195 = smul.addr %s194, 4
      %s196 = scalar_lea.vmem %s0, %s195
      %p197 = pneg %p48
      %p198 = pneg %p45
      %p199 = scmp.lt.s32.totalorder %s20, 0
      %s200 = scalar_select %p199, %s20, 0
      %s201 = smul.addr %s200, 4
      %s202 = scalar_lea.vmem %s1, %s201
      %p203 = pneg %p74
      %p204 = pneg %p71
      %p205 = pneg %p95
      %p206 = pneg %p92
      %p207 = pneg %p116
      %p208 = pneg %p113
      %p209 = pneg %p144
      %p210 = pneg %p141
      %s211 = smul.u32 32, %s19
      %p212 = scmp.lt.s32.totalorder %s211, 63
      %s213 = scalar_select %p212, %s211, 63
      %p214 = scmp.lt.s32.totalorder %s20, 0
      %s215 = scalar_select %p214, %s20, 0
      %s216 = sadd.s32 %s215, %s213
      %s217 = smul.addr %s216, 4
      %s218 = scalar_lea.vmem %s4, %s217
      %s219 = smul.u32 32, %s19
      %p220 = scmp.lt.s32.totalorder %s219, 63
      %s221 = scalar_select %p220, %s219, 63
      %s222 = smul.addr %s221, 4
      %s223 = scalar_lea.vmem %s0, %s222
      %s224 = smul.u32 32, %s19
      %p225 = scmp.lt.s32.totalorder %s20, 0
      %s226 = scalar_select %p225, %s20, 0
      %s227 = smul.addr %s226, 4
      %s228 = scalar_lea.vmem %s1, %s227
      %s229 = smul.u32 32, %s19
      %p230 = scmp.lt.s32.totalorder %s229, 63
      %s231 = scalar_select %p230, %s229, 63
      %p232 = scmp.lt.s32.totalorder %s20, 0
      %s233 = scalar_select %p232, %s20, 0
      %s234 = sadd.s32 %s233, %s231
      %s235 = smul.addr %s234, 4
      %s236 = scalar_lea.vmem %s4, %s235
      %s237 = smul.u32 32, %s19
      %v239 = vld [vmem:[%s223] sm:$0xf]
      %v240 = vld [vmem:[%s223 + $0x4] sm:$0xf]
      %v241 = vld [vmem:[%s223 + $0x8] sm:$0xf]
      %v242 = vld [vmem:[%s223 + $0xc] sm:$0xf]
      %v243 = vld [vmem:[%s223 + $0x10] sm:$0xf]
      %v244 = vld [vmem:[%s223 + $0x14] sm:$0xf]
      %v245 = vld [vmem:[%s223 + $0x18] sm:$0xf]
      %v246 = vld [vmem:[%s223 + $0x1c] sm:$0xf]
      %v247 = vld [vmem:[%s223 + $0x20] sm:$0xf]
      %v248 = vld [vmem:[%s223 + $0x24] sm:$0xf]
      %v249 = vld [vmem:[%s223 + $0x28] sm:$0xf]
      %v250 = vld [vmem:[%s223 + $0x2c] sm:$0xf]
      %v251 = vld [vmem:[%s223 + $0x30] sm:$0xf]
      %v252 = vld [vmem:[%s223 + $0x34] sm:$0xf]
      %v253 = vld [vmem:[%s223 + $0x38] sm:$0xf]
      %v254 = vld [vmem:[%s223 + $0x3c] sm:$0xf]
      %v255 = vld [vmem:[%s223 + $0x40] sm:$0xf]
      %v256 = vld [vmem:[%s223 + $0x44] sm:$0xf]
      %v257 = vld [vmem:[%s223 + $0x48] sm:$0xf]
      %v258 = vld [vmem:[%s223 + $0x4c] sm:$0xf]
      %v259 = vld [vmem:[%s223 + $0x50] sm:$0xf]
      %v260 = vld [vmem:[%s223 + $0x54] sm:$0xf]
      %v261 = vld [vmem:[%s223 + $0x58] sm:$0xf]
      %v262 = vld [vmem:[%s223 + $0x5c] sm:$0xf]
      %v263 = vld [vmem:[%s223 + $0x60] sm:$0xf]
      %v264 = vld [vmem:[%s223 + $0x64] sm:$0xf]
      %v265 = vld [vmem:[%s223 + $0x68] sm:$0xf]
      %v266 = vld [vmem:[%s223 + $0x6c] sm:$0xf]
      %v267 = vld [vmem:[%s223 + $0x70] sm:$0xf]
      %v268 = vld [vmem:[%s223 + $0x74] sm:$0xf]
      %v269 = vld [vmem:[%s223 + $0x78] sm:$0xf]
      %v270 = vld [vmem:[%s223 + $0x7c] sm:$0xf]
      %v271 = vunpack.c.l.bf16 %v239
      %v272 = vunpack.c.l.bf16 %v240
      %v273 = vunpack.c.l.bf16 %v241
      %v274 = vunpack.c.l.bf16 %v242
      %v275 = vunpack.c.l.bf16 %v243
      %v276 = vunpack.c.l.bf16 %v244
      %v277 = vunpack.c.l.bf16 %v245
      %v278 = vunpack.c.l.bf16 %v246
      %v279 = vunpack.c.l.bf16 %v247
      %v280 = vunpack.c.l.bf16 %v248
      %v281 = vunpack.c.l.bf16 %v249
      %v282 = vunpack.c.l.bf16 %v250
      %v283 = vunpack.c.l.bf16 %v251
      %v284 = vunpack.c.l.bf16 %v252
      %v285 = vunpack.c.l.bf16 %v253
      %v286 = vunpack.c.l.bf16 %v254
      %v287 = vunpack.c.l.bf16 %v255
      %v288 = vunpack.c.l.bf16 %v256
      %v289 = vunpack.c.l.bf16 %v257
      %v290 = vunpack.c.l.bf16 %v258
      %v291 = vunpack.c.l.bf16 %v259
      %v292 = vunpack.c.l.bf16 %v260
      %v293 = vunpack.c.l.bf16 %v261
      %v294 = vunpack.c.l.bf16 %v262
      %v295 = vunpack.c.l.bf16 %v263
      %v296 = vunpack.c.l.bf16 %v264
      %v297 = vunpack.c.l.bf16 %v265
      %v298 = vunpack.c.l.bf16 %v266
      %v299 = vunpack.c.l.bf16 %v267
      %v300 = vunpack.c.l.bf16 %v268
      %v301 = vunpack.c.l.bf16 %v269
      %v302 = vunpack.c.l.bf16 %v270
      %v303 = vld [vmem:[%s2] sm:$0x1]
      %v305 = vlaneseq
      %v306 = vshrl.u32 %v305, 7
      %v307 = vsub.s32 0, %v306
      %v308 = vrot.slane %v303, %v307
      %v310 = vmul.f32 %v271, %v308
      %v311 = vmul.f32 %v272, %v308
      %v312 = vmul.f32 %v273, %v308
      %v313 = vmul.f32 %v274, %v308
      %v314 = vmul.f32 %v275, %v308
      %v315 = vmul.f32 %v276, %v308
      %v316 = vmul.f32 %v277, %v308
      %v317 = vmul.f32 %v278, %v308
      %v318 = vmul.f32 %v279, %v308
      %v319 = vmul.f32 %v280, %v308
      %v320 = vmul.f32 %v281, %v308
      %v321 = vmul.f32 %v282, %v308
      %v322 = vmul.f32 %v283, %v308
      %v323 = vmul.f32 %v284, %v308
      %v324 = vmul.f32 %v285, %v308
      %v325 = vmul.f32 %v286, %v308
      %v326 = vmul.f32 %v287, %v308
      %v327 = vmul.f32 %v288, %v308
      %v328 = vmul.f32 %v289, %v308
      %v329 = vmul.f32 %v290, %v308
      %v330 = vmul.f32 %v291, %v308
      %v331 = vmul.f32 %v292, %v308
      %v332 = vmul.f32 %v293, %v308
      %v333 = vmul.f32 %v294, %v308
      %v334 = vmul.f32 %v295, %v308
      %v335 = vmul.f32 %v296, %v308
      %v336 = vmul.f32 %v297, %v308
      %v337 = vmul.f32 %v298, %v308
      %v338 = vmul.f32 %v299, %v308
      %v339 = vmul.f32 %v300, %v308
      %v340 = vmul.f32 %v301, %v308
      %v341 = vmul.f32 %v302, %v308
      %v342 = vld [vmem:[%s3] sm:$0x1]
      %v344 = vlaneseq
      %v345 = vshrl.u32 %v344, 7
      %v346 = vsub.s32 0, %v345
      %v347 = vrot.slane %v342, %v346
      %v349 = vadd.f32 %v310, %v347
      %v350 = vadd.f32 %v311, %v347
      %v351 = vadd.f32 %v312, %v347
      %v352 = vadd.f32 %v313, %v347
      %v353 = vadd.f32 %v314, %v347
      %v354 = vadd.f32 %v315, %v347
      %v355 = vadd.f32 %v316, %v347
      %v356 = vadd.f32 %v317, %v347
      %v357 = vadd.f32 %v318, %v347
      %v358 = vadd.f32 %v319, %v347
      %v359 = vadd.f32 %v320, %v347
      %v360 = vadd.f32 %v321, %v347
      %v361 = vadd.f32 %v322, %v347
      %v362 = vadd.f32 %v323, %v347
      %v363 = vadd.f32 %v324, %v347
      %v364 = vadd.f32 %v325, %v347
      %v365 = vadd.f32 %v326, %v347
      %v366 = vadd.f32 %v327, %v347
      %v367 = vadd.f32 %v328, %v347
      %v368 = vadd.f32 %v329, %v347
      %v369 = vadd.f32 %v330, %v347
      %v370 = vadd.f32 %v331, %v347
      %v371 = vadd.f32 %v332, %v347
      %v372 = vadd.f32 %v333, %v347
      %v373 = vadd.f32 %v334, %v347
      %v374 = vadd.f32 %v335, %v347
      %v375 = vadd.f32 %v336, %v347
      %v376 = vadd.f32 %v337, %v347
      %v377 = vadd.f32 %v338, %v347
      %v378 = vadd.f32 %v339, %v347
      %v379 = vadd.f32 %v340, %v347
      %v380 = vadd.f32 %v341, %v347
      %v381 = vmax.f32 %v349, 0.0
      %v382 = vmax.f32 %v350, 0.0
      %v383 = vmax.f32 %v351, 0.0
      %v384 = vmax.f32 %v352, 0.0
      %v385 = vmax.f32 %v353, 0.0
      %v386 = vmax.f32 %v354, 0.0
      %v387 = vmax.f32 %v355, 0.0
      %v388 = vmax.f32 %v356, 0.0
      %v389 = vmax.f32 %v357, 0.0
      %v390 = vmax.f32 %v358, 0.0
      %v391 = vmax.f32 %v359, 0.0
      %v392 = vmax.f32 %v360, 0.0
      %v393 = vmax.f32 %v361, 0.0
      %v394 = vmax.f32 %v362, 0.0
      %v395 = vmax.f32 %v363, 0.0
      %v396 = vmax.f32 %v364, 0.0
      %v397 = vmax.f32 %v365, 0.0
      %v398 = vmax.f32 %v366, 0.0
      %v399 = vmax.f32 %v367, 0.0
      %v400 = vmax.f32 %v368, 0.0
      %v401 = vmax.f32 %v369, 0.0
      %v402 = vmax.f32 %v370, 0.0
      %v403 = vmax.f32 %v371, 0.0
      %v404 = vmax.f32 %v372, 0.0
      %v405 = vmax.f32 %v373, 0.0
      %v406 = vmax.f32 %v374, 0.0
      %v407 = vmax.f32 %v375, 0.0
      %v408 = vmax.f32 %v376, 0.0
      %v409 = vmax.f32 %v377, 0.0
      %v410 = vmax.f32 %v378, 0.0
      %v411 = vmax.f32 %v379, 0.0
      %v412 = vmax.f32 %v380, 0.0
      %v413 = vpack.c.bf16 %v382, %v381
      %v414 = vpack.c.bf16 %v384, %v383
      %v415 = vpack.c.bf16 %v386, %v385
      %v416 = vpack.c.bf16 %v388, %v387
      %v417 = vpack.c.bf16 %v390, %v389
      %v418 = vpack.c.bf16 %v392, %v391
      %v419 = vpack.c.bf16 %v394, %v393
      %v420 = vpack.c.bf16 %v396, %v395
      %v421 = vpack.c.bf16 %v398, %v397
      %v422 = vpack.c.bf16 %v400, %v399
      %v423 = vpack.c.bf16 %v402, %v401
      %v424 = vpack.c.bf16 %v404, %v403
      %v425 = vpack.c.bf16 %v406, %v405
      %v426 = vpack.c.bf16 %v408, %v407
      %v427 = vpack.c.bf16 %v410, %v409
      %v428 = vpack.c.bf16 %v412, %v411
      %v429 = vld [vmem:[%s228] sm:$0xf]
      %v430 = vld [vmem:[%s228 + $0x4] sm:$0xf]
      %v433 = vunpack.c.l.b16 %v429
      %v434 = vunpack.c.l.b16 %v430
      %v435 = vpack.c.b16 %v434, %v433
      %vm437 = vcmask 130048
      %v439 = vsel %vm437, %v413, 0
      %v442 = vsel %vm437, %v414, 0
      %v445 = vsel %vm437, %v415, 0
      %v448 = vsel %vm437, %v416, 0
      %v451 = vsel %vm437, %v417, 0
      %v454 = vsel %vm437, %v418, 0
      %v457 = vsel %vm437, %v419, 0
      %v460 = vsel %vm437, %v420, 0
      %v463 = vsel %vm437, %v421, 0
      %v466 = vsel %vm437, %v422, 0
      %v469 = vsel %vm437, %v423, 0
      %v472 = vsel %vm437, %v424, 0
      %v475 = vsel %vm437, %v425, 0
      %v478 = vsel %vm437, %v426, 0
      %v481 = vsel %vm437, %v427, 0
      %v484 = vsel %vm437, %v428, 0
      %486 = vmatprep.subr.bf16.mxu0 0
      %487 = vmatpush1.bf16.msra.mxu0 %v435
      %488 = vmatprep.subr.bf16.mxu0 0
      %489 = vmatpush1.bf16.msra.mxu0 0
      %490 = vmatprep.subr.bf16.mxu0 0
      %491 = vmatpush1.bf16.msra.mxu0 0
      %492 = vmatprep.subr.bf16.mxu0 0
      %493 = vmatpush1.bf16.msra.mxu0 0
      %494 = vmatprep.subr.bf16.mxu0 0
      %495 = vmatpush1.bf16.msra.mxu0 0
      %496 = vmatprep.subr.bf16.mxu0 0
      %497 = vmatpush1.bf16.msra.mxu0 0
      %498 = vmatprep.subr.bf16.mxu0 0
      %499 = vmatpush1.bf16.msra.mxu0 0
      %500 = vmatprep.subr.bf16.mxu0 0
      %501 = vmatpush1.bf16.msra.mxu0 0
      %502 = vmatprep.subr.bf16.mxu0 0
      %503 = vmatpush1.bf16.msra.mxu0 0
      %504 = vmatprep.subr.bf16.mxu0 0
      %505 = vmatpush1.bf16.msra.mxu0 0
      %506 = vmatprep.subr.bf16.mxu0 0
      %507 = vmatpush1.bf16.msra.mxu0 0
      %508 = vmatprep.subr.bf16.mxu0 0
      %509 = vmatpush1.bf16.msra.mxu0 0
      %510 = vmatprep.subr.bf16.mxu0 0
      %511 = vmatpush1.bf16.msra.mxu0 0
      %512 = vmatprep.subr.bf16.mxu0 0
      %513 = vmatpush1.bf16.msra.mxu0 0
      %514 = vmatprep.subr.bf16.mxu0 0
      %515 = vmatpush1.bf16.msra.mxu0 0
      %516 = vmatprep.subr.bf16.mxu0 0
      %517 = vmatpush1.bf16.msra.mxu0 0
      %518 = vmatprep.mubr.bf16.mxu0 0
      %519 = vmatmul.mubr.bf16.gmra.mrb[0].mxu0 %v439
      %v520 = vpop.f32.mrb[0].mxu0
      %v521 = vadd.f32 0.0, %v520
      %v522 = vpop.f32.mrb[0].mxu0
      %v523 = vpop.f32.mrb[0].mxu0
      %v524 = vadd.f32 0.0, %v523
      %v525 = vpop.f32.mrb[0].mxu0
      %526 = vmatprep.mubr.bf16.mxu0 0
      %527 = vmatmul.mubr.bf16.gmra.mrb[0].mxu0 %v442
      %v528 = vpop.f32.mrb[0].mxu0
      %v529 = vadd.f32 0.0, %v528
      %v530 = vpop.f32.mrb[0].mxu0
      %v531 = vpop.f32.mrb[0].mxu0
      %v532 = vadd.f32 0.0, %v531
      %v533 = vpop.f32.mrb[0].mxu0
      %534 = vmatprep.mubr.bf16.mxu0 0
      %535 = vmatmul.mubr.bf16.gmra.mrb[0].mxu0 %v445
      %v536 = vpop.f32.mrb[0].mxu0
      %v537 = vadd.f32 0.0, %v536
      %v538 = vpop.f32.mrb[0].mxu0
      %v539 = vpop.f32.mrb[0].mxu0
      %v540 = vadd.f32 0.0, %v539
      %v541 = vpop.f32.mrb[0].mxu0
      %542 = vmatprep.mubr.bf16.mxu0 0
      %543 = vmatmul.mubr.bf16.gmra.mrb[0].mxu0 %v448
      %v544 = vpop.f32.mrb[0].mxu0
      %v545 = vadd.f32 0.0, %v544
      %v546 = vpop.f32.mrb[0].mxu0
      %v547 = vpop.f32.mrb[0].mxu0
      %v548 = vadd.f32 0.0, %v547
      %v549 = vpop.f32.mrb[0].mxu0
      %550 = vmatprep.mubr.bf16.mxu0 0
      %551 = vmatmul.mubr.bf16.gmra.mrb[0].mxu0 %v451
      %v552 = vpop.f32.mrb[0].mxu0
      %v553 = vadd.f32 0.0, %v552
      %v554 = vpop.f32.mrb[0].mxu0
      %v555 = vpop.f32.mrb[0].mxu0
      %v556 = vadd.f32 0.0, %v555
      %v557 = vpop.f32.mrb[0].mxu0
      %558 = vmatprep.mubr.bf16.mxu0 0
      %559 = vmatmul.mubr.bf16.gmra.mrb[0].mxu0 %v454
      %v560 = vpop.f32.mrb[0].mxu0
      %v561 = vadd.f32 0.0, %v560
      %v562 = vpop.f32.mrb[0].mxu0
      %v563 = vpop.f32.mrb[0].mxu0
      %v564 = vadd.f32 0.0, %v563
      %v565 = vpop.f32.mrb[0].mxu0
      %566 = vmatprep.mubr.bf16.mxu0 0
      %567 = vmatmul.mubr.bf16.gmra.mrb[0].mxu0 %v457
      %v568 = vpop.f32.mrb[0].mxu0
      %v569 = vadd.f32 0.0, %v568
      %v570 = vpop.f32.mrb[0].mxu0
      %v571 = vpop.f32.mrb[0].mxu0
      %v572 = vadd.f32 0.0, %v571
      %v573 = vpop.f32.mrb[0].mxu0
      %574 = vmatprep.mubr.bf16.mxu0 0
      %575 = vmatmul.mubr.bf16.gmra.mrb[0].mxu0 %v460
      %v576 = vpop.f32.mrb[0].mxu0
      %v577 = vadd.f32 0.0, %v576
      %v578 = vpop.f32.mrb[0].mxu0
      %v579 = vpop.f32.mrb[0].mxu0
      %v580 = vadd.f32 0.0, %v579
      %v581 = vpop.f32.mrb[0].mxu0
      %582 = vmatprep.mubr.bf16.mxu0 0
      %583 = vmatmul.mubr.bf16.gmra.mrb[0].mxu0 %v463
      %v584 = vpop.f32.mrb[0].mxu0
      %v585 = vadd.f32 0.0, %v584
      %v586 = vpop.f32.mrb[0].mxu0
      %v587 = vpop.f32.mrb[0].mxu0
      %v588 = vadd.f32 0.0, %v587
      %v589 = vpop.f32.mrb[0].mxu0
      %590 = vmatprep.mubr.bf16.mxu0 0
      %591 = vmatmul.mubr.bf16.gmra.mrb[0].mxu0 %v466
      %v592 = vpop.f32.mrb[0].mxu0
      %v593 = vadd.f32 0.0, %v592
      %v594 = vpop.f32.mrb[0].mxu0
      %v595 = vpop.f32.mrb[0].mxu0
      %v596 = vadd.f32 0.0, %v595
      %v597 = vpop.f32.mrb[0].mxu0
      %598 = vmatprep.mubr.bf16.mxu0 0
      %599 = vmatmul.mubr.bf16.gmra.mrb[0].mxu0 %v469
      %v600 = vpop.f32.mrb[0].mxu0
      %v601 = vadd.f32 0.0, %v600
      %v602 = vpop.f32.mrb[0].mxu0
      %v603 = vpop.f32.mrb[0].mxu0
      %v604 = vadd.f32 0.0, %v603
      %v605 = vpop.f32.mrb[0].mxu0
      %606 = vmatprep.mubr.bf16.mxu0 0
      %607 = vmatmul.mubr.bf16.gmra.mrb[0].mxu0 %v472
      %v608 = vpop.f32.mrb[0].mxu0
      %v609 = vadd.f32 0.0, %v608
      %v610 = vpop.f32.mrb[0].mxu0
      %v611 = vpop.f32.mrb[0].mxu0
      %v612 = vadd.f32 0.0, %v611
      %v613 = vpop.f32.mrb[0].mxu0
      %614 = vmatprep.mubr.bf16.mxu0 0
      %615 = vmatmul.mubr.bf16.gmra.mrb[0].mxu0 %v475
      %v616 = vpop.f32.mrb[0].mxu0
      %v617 = vadd.f32 0.0, %v616
      %v618 = vpop.f32.mrb[0].mxu0
      %v619 = vpop.f32.mrb[0].mxu0
      %v620 = vadd.f32 0.0, %v619
      %v621 = vpop.f32.mrb[0].mxu0
      %622 = vmatprep.mubr.bf16.mxu0 0
      %623 = vmatmul.mubr.bf16.gmra.mrb[0].mxu0 %v478
      %v624 = vpop.f32.mrb[0].mxu0
      %v625 = vadd.f32 0.0, %v624
      %v626 = vpop.f32.mrb[0].mxu0
      %v627 = vpop.f32.mrb[0].mxu0
      %v628 = vadd.f32 0.0, %v627
      %v629 = vpop.f32.mrb[0].mxu0
      %630 = vmatprep.mubr.bf16.mxu0 0
      %631 = vmatmul.mubr.bf16.gmra.mrb[0].mxu0 %v481
      %v632 = vpop.f32.mrb[0].mxu0
      %v633 = vadd.f32 0.0, %v632
      %v634 = vpop.f32.mrb[0].mxu0
      %v635 = vpop.f32.mrb[0].mxu0
      %v636 = vadd.f32 0.0, %v635
      %v637 = vpop.f32.mrb[0].mxu0
      %638 = vmatprep.mubr.bf16.mxu0 0
      %639 = vmatmul.mubr.bf16.gmra.mrb[0].mxu0 %v484
      %v640 = vpop.f32.mrb[0].mxu0
      %v641 = vadd.f32 0.0, %v640
      %v642 = vpop.f32.mrb[0].mxu0
      %v643 = vpop.f32.mrb[0].mxu0
      %v644 = vadd.f32 0.0, %v643
      %v645 = vpop.f32.mrb[0].mxu0
      %646 = vdwg.mxu0
      %v647 = vpack.c.bf16 %v524, %v521
      %v648 = vpack.c.bf16 %v532, %v529
      %v649 = vpack.c.bf16 %v540, %v537
      %v650 = vpack.c.bf16 %v548, %v545
      %v651 = vpack.c.bf16 %v556, %v553
      %v652 = vpack.c.bf16 %v564, %v561
      %v653 = vpack.c.bf16 %v572, %v569
      %v654 = vpack.c.bf16 %v580, %v577
      %v655 = vpack.c.bf16 %v588, %v585
      %v656 = vpack.c.bf16 %v596, %v593
      %v657 = vpack.c.bf16 %v604, %v601
      %v658 = vpack.c.bf16 %v612, %v609
      %v659 = vpack.c.bf16 %v620, %v617
      %v660 = vpack.c.bf16 %v628, %v625
      %v661 = vpack.c.bf16 %v636, %v633
      %v662 = vpack.c.bf16 %v644, %v641
      %v679 = vunpack.c.l.b16 %v647
      %v680 = vunpack.c.h.b16 %v647
      %v681 = vunpack.c.l.b16 %v648
      %v682 = vunpack.c.h.b16 %v648
      %v683 = vunpack.c.l.b16 %v649
      %v684 = vunpack.c.h.b16 %v649
      %v685 = vunpack.c.l.b16 %v650
      %v686 = vunpack.c.h.b16 %v650
      %v687 = vunpack.c.l.b16 %v651
      %v688 = vunpack.c.h.b16 %v651
      %v689 = vunpack.c.l.b16 %v652
      %v690 = vunpack.c.h.b16 %v652
      %v691 = vunpack.c.l.b16 %v653
      %v692 = vunpack.c.h.b16 %v653
      %v693 = vunpack.c.l.b16 %v654
      %v694 = vunpack.c.h.b16 %v654
      %v695 = vunpack.c.l.b16 %v655
      %v696 = vunpack.c.h.b16 %v655
      %v697 = vunpack.c.l.b16 %v656
      %v698 = vunpack.c.h.b16 %v656
      %v699 = vunpack.c.l.b16 %v657
      %v700 = vunpack.c.h.b16 %v657
      %v701 = vunpack.c.l.b16 %v658
      %v702 = vunpack.c.h.b16 %v658
      %v703 = vunpack.c.l.b16 %v659
      %v704 = vunpack.c.h.b16 %v659
      %v705 = vunpack.c.l.b16 %v660
      %v706 = vunpack.c.h.b16 %v660
      %v707 = vunpack.c.l.b16 %v661
      %v708 = vunpack.c.h.b16 %v661
      %v709 = vunpack.c.l.b16 %v662
      %v710 = vunpack.c.h.b16 %v662
      %v711 = vpack.c.b16 %v679, %v679
      %v712 = vpack.c.b16 %v680, %v680
      %v713 = vpack.c.b16 %v681, %v681
      %v714 = vpack.c.b16 %v682, %v682
      %v715 = vpack.c.b16 %v683, %v683
      %v716 = vpack.c.b16 %v684, %v684
      %v717 = vpack.c.b16 %v685, %v685
      %v718 = vpack.c.b16 %v686, %v686
      %v719 = vpack.c.b16 %v687, %v687
      %v720 = vpack.c.b16 %v688, %v688
      %v721 = vpack.c.b16 %v689, %v689
      %v722 = vpack.c.b16 %v690, %v690
      %v723 = vpack.c.b16 %v691, %v691
      %v724 = vpack.c.b16 %v692, %v692
      %v725 = vpack.c.b16 %v693, %v693
      %v726 = vpack.c.b16 %v694, %v694
      %v727 = vpack.c.b16 %v695, %v695
      %v728 = vpack.c.b16 %v696, %v696
      %v729 = vpack.c.b16 %v697, %v697
      %v730 = vpack.c.b16 %v698, %v698
      %v731 = vpack.c.b16 %v699, %v699
      %v732 = vpack.c.b16 %v700, %v700
      %v733 = vpack.c.b16 %v701, %v701
      %v734 = vpack.c.b16 %v702, %v702
      %v735 = vpack.c.b16 %v703, %v703
      %v736 = vpack.c.b16 %v704, %v704
      %v737 = vpack.c.b16 %v705, %v705
      %v738 = vpack.c.b16 %v706, %v706
      %v739 = vpack.c.b16 %v707, %v707
      %v740 = vpack.c.b16 %v708, %v708
      %v741 = vpack.c.b16 %v709, %v709
      %v742 = vpack.c.b16 %v710, %v710
      %775 = vst [vmem:[%s236] sm:$0xf] %v711
      %776 = vst [vmem:[%s236 + $0x4] sm:$0xf] %v712
      %777 = vst [vmem:[%s236 + $0x8] sm:$0xf] %v713
      %778 = vst [vmem:[%s236 + $0xc] sm:$0xf] %v714
      %779 = vst [vmem:[%s236 + $0x10] sm:$0xf] %v715
      %780 = vst [vmem:[%s236 + $0x14] sm:$0xf] %v716
      %781 = vst [vmem:[%s236 + $0x18] sm:$0xf] %v717
      %782 = vst [vmem:[%s236 + $0x1c] sm:$0xf] %v718
      %783 = vst [vmem:[%s236 + $0x20] sm:$0xf] %v719
      %784 = vst [vmem:[%s236 + $0x24] sm:$0xf] %v720
      %785 = vst [vmem:[%s236 + $0x28] sm:$0xf] %v721
      %786 = vst [vmem:[%s236 + $0x2c] sm:$0xf] %v722
      %787 = vst [vmem:[%s236 + $0x30] sm:$0xf] %v723
      %788 = vst [vmem:[%s236 + $0x34] sm:$0xf] %v724
      %789 = vst [vmem:[%s236 + $0x38] sm:$0xf] %v725
      %790 = vst [vmem:[%s236 + $0x3c] sm:$0xf] %v726
      %791 = vst [vmem:[%s236 + $0x40] sm:$0xf] %v727
      %792 = vst [vmem:[%s236 + $0x44] sm:$0xf] %v728
      %793 = vst [vmem:[%s236 + $0x48] sm:$0xf] %v729
      %794 = vst [vmem:[%s236 + $0x4c] sm:$0xf] %v730
      %795 = vst [vmem:[%s236 + $0x50] sm:$0xf] %v731
      %796 = vst [vmem:[%s236 + $0x54] sm:$0xf] %v732
      %797 = vst [vmem:[%s236 + $0x58] sm:$0xf] %v733
      %798 = vst [vmem:[%s236 + $0x5c] sm:$0xf] %v734
      %799 = vst [vmem:[%s236 + $0x60] sm:$0xf] %v735
      %800 = vst [vmem:[%s236 + $0x64] sm:$0xf] %v736
      %801 = vst [vmem:[%s236 + $0x68] sm:$0xf] %v737
      %802 = vst [vmem:[%s236 + $0x6c] sm:$0xf] %v738
      %803 = vst [vmem:[%s236 + $0x70] sm:$0xf] %v739
      %804 = vst [vmem:[%s236 + $0x74] sm:$0xf] %v740
      %805 = vst [vmem:[%s236 + $0x78] sm:$0xf] %v741
      %806 = vst [vmem:[%s236 + $0x7c] sm:$0xf] %v742
      %s807 = smul.u32 32, %s19
      %p808 = scmp.lt.s32.totalorder %s807, 63
      %s809 = scalar_select %p808, %s807, 63
      %p810 = scmp.lt.s32.totalorder %s20, 0
      %s811 = scalar_select %p810, %s20, 0
      %s812 = sadd.s32 %s811, %s809
      %s813 = smul.addr %s812, 4
      %s814 = scalar_lea.vmem %s4, %s813
      // Predicated region
      $region37: #{generator_forward.14} parent=35 // pred_check
        %p815 = pneg %p141
      $region38: #{generator_forward.14} parent=35 // pred_check_branch
        %817 = sbr.rel (%p815) target = $region40
      $region39: #{generator_forward.14} parent=35 // pred_region
        %s818 = smul.u32 32, %s19
      $region40: #{generator_forward.14} parent=35 // pred_fallthru
        _
    $region36: #{generator_forward.14} parent=5 // pred_fallthru
      _
    %p819 = scmp.le.s32.totalorder 2, %s10
    // Predicated region
    $region41: #{generator_forward.14} parent=5 // pred_check
      %p820 = pneg %p819
    $region42: #{generator_forward.14} parent=5 // pred_check_branch
      %822 = sbr.rel (%p820) target = $region44
    $region43: #{generator_forward.14} parent=5 // pred_region
      %s823 = ssub.s32 %s10, 2
      // Predicated region
      $region45: #{generator_forward.14} parent=43 // pred_check
        %p824 = pneg %p147
      $region46: #{generator_forward.14} parent=43 // pred_check_branch
        %826 = sbr.rel (%p824) target = $region48
      $region47: #{generator_forward.14} parent=43 // pred_region
        %s827 = smul.u32 32, %s21
        %p828 = scmp.lt.s32.totalorder %s827, 63
        %s829 = scalar_select %p828, %s827, 63
        %p830 = scmp.lt.s32.totalorder %s22, 0
        %s831 = scalar_select %p830, %s22, 0
        %s832 = sadd.s32 %s831, %s829
        %s833 = smul.addr %s832, 4
        %s834 = scalar_lea.vmem %s4, %s833
      $region48: #{generator_forward.14} parent=43 // pred_fallthru
        _
    $region44: #{generator_forward.14} parent=5 // pred_fallthru
      _
  $region6: #{generator_forward.14} parent=0 // loop_footer
    %s14 = sadd.s32 1, %s10
  $region7: #{generator_forward.14} parent=0 // loop_footer_branch
    %9 = sbr.rel target = $region3
  $region8: #{generator_forward.14} parent=0 // loop_exit
    _

// kernel: generator_forward.15
$region0: #{generator_forward.15}
  #allocation0 [shape = 'u32[]', space=smem, size = 0x4, offset = 0x4, fixed_abs, tag = 'smem constant byte address 0x4 - core index']
  #allocation1 [shape = 'u32[144,128]{1,0:T(1,128)}', space=vmem, size = 0x12000, scoped, tag = 'internal scratch']
  %s0 = inlined_call_operand.vmem [shape: bf16[64,256], index: 0, kind: input, shape index: {}]
  %s1 = inlined_call_operand.vmem [shape: f32[1,256], index: 1, kind: output, shape index: {0}]
  %s2 = inlined_call_operand.vmem [shape: f32[1,256], index: 2, kind: output, shape index: {1}]
  %3 = xla_tuple %s1, %s2
  %s4 = sld [smem:[#allocation0]]
  $region49: #{generator_forward.15} parent=0
    _
  %s6 = ssub.s32 1, %s4
  %s7 = scalar_select 0, %s6, %s4
  loop: start=0, step=1, limit=4
  $region2: #{generator_forward.15} parent=0 // loop_pre_header
    _
  $region3: #{generator_forward.15} parent=0 // loop_header
    %s9 = sphi 0, %s13
    %p10 = scmp.ge.s32.totalorder %s9, 4
    %s19 = sphi 0, %s21
    %s22 = sphi 0, %s19
    %s23 = sphi 0, %s22
    %s39 = sphi 0, %s23
    %s43 = sphi 0, %s43
    %s45 = sphi 0, %s43
    %s46 = sphi 0, %s45
    %s60 = sphi 0, %s46
    %s64 = sphi 0, %s64
    %s66 = sphi 0, %s64
    %s67 = sphi 0, %s66
    %s81 = sphi 0, %s67
  $region4: #{generator_forward.15} parent=0 // loop_header_branch
    %12 = sbr.rel (%p10) target = $region8
  $region5: #{generator_forward.15} parent=0 // loop_body
    %s14 = ssub.s32 %s9, 1
    %s15 = ssub.s32 %s9, 2
    %s16 = sadd.s32 %s9, 1
    %s17 = ssub.s32 %s9, %s16
    %p18 = scmp.eq.s32.totalorder %s17, 0
    %s20 = sadd.s32 %s19, 1
    %s21 = scalar_select %p18, %s19, %s20
    %p24 = pneg %p18
    %p25 = scmp.eq.s32.totalorder %s9, 1
    %p26 = por %p24, %p25
    %p27 = scmp.ne.s32.totalorder %s19, %s22
    %p28 = scmp.eq.s32.totalorder %s9, 0
    %p29 = por %p27, %p28
    %p30 = scmp.ne.s32.totalorder %s19, %s22
    %p31 = scmp.eq.s32.totalorder %s14, 1
    %p32 = por %p30, %p31
    %p33 = scmp.ne.s32.totalorder %s22, %s23
    %p34 = scmp.eq.s32.totalorder %s14, 0
    %p35 = por %p33, %p34
    %p36 = scmp.ne.s32.totalorder %s22, %s23
    %p37 = scmp.eq.s32.totalorder %s15, 1
    %p38 = por %p36, %p37
    %p40 = scmp.ne.s32.totalorder %s23, %s39
    %p41 = scmp.eq.s32.totalorder %s15, 0
    %p42 = por %p40, %p41
    %s44 = sadd.s32 %s43, 1
    %p47 = scmp.eq.s32.totalorder %s9, 1
    %p48 = scmp.ne.s32.totalorder %s43, %s45
    %p49 = scmp.eq.s32.totalorder %s9, 0
    %p50 = por %p48, %p49
    %p51 = scmp.ne.s32.totalorder %s43, %s45
    %p52 = scmp.eq.s32.totalorder %s14, 1
    %p53 = por %p51, %p52
    %p54 = scmp.ne.s32.totalorder %s45, %s46
    %p55 = scmp.eq.s32.totalorder %s14, 0
    %p56 = por %p54, %p55
    %p57 = scmp.ne.s32.totalorder %s45, %s46
    %p58 = scmp.eq.s32.totalorder %s15, 1
    %p59 = por %p57, %p58
    %p61 = scmp.ne.s32.totalorder %s46, %s60
    %p62 = scmp.eq.s32.totalorder %s15, 0
    %p63 = por %p61, %p62
    %s65 = sadd.s32 %s64, 1
    %p68 = scmp.eq.s32.totalorder %s9, 1
    %p69 = scmp.ne.s32.totalorder %s64, %s66
    %p70 = scmp.eq.s32.totalorder %s9, 0
    %p71 = por %p69, %p70
    %p72 = scmp.ne.s32.totalorder %s64, %s66
    %p73 = scmp.eq.s32.totalorder %s14, 1
    %p74 = por %p72, %p73
    %p75 = scmp.ne.s32.totalorder %s66, %s67
    %p76 = scmp.eq.s32.totalorder %s14, 0
    %p77 = por %p75, %p76
    %p78 = scmp.ne.s32.totalorder %s66, %s67
    %p79 = scmp.eq.s32.totalorder %s15, 1
    %p80 = por %p78, %p79
    %p82 = scmp.ne.s32.totalorder %s67, %s81
    %p83 = scmp.eq.s32.totalorder %s15, 0
    %p84 = por %p82, %p83
    %p85 = scmp.le.s32.totalorder 1, %s9
    %p86 = scmp.lt.s32.totalorder %s9, 3
    %p87 = pnand %p85, %p86
    %p88 = pneg %p87
    // Predicated region
    $region9: #{generator_forward.15} parent=5 // pred_check
      _
    $region10: #{generator_forward.15} parent=5 // pred_check_branch
      %90 = sbr.rel (%p87) target = $region12
    $region11: #{generator_forward.15} parent=5 // pred_region
      %s91 = ssub.s32 %s9, 1
    $region12: #{generator_forward.15} parent=5 // pred_fallthru
      _
    %p92 = scmp.lt.s32.totalorder %s9, 2
    // Predicated region
    $region13: #{generator_forward.15} parent=5 // pred_check
      %p93 = pneg %p92
    $region14: #{generator_forward.15} parent=5 // pred_check_branch
      %95 = sbr.rel (%p93) target = $region16
    $region15: #{generator_forward.15} parent=5 // pred_region
      // Predicated region
      $region17: #{generator_forward.15} parent=15 // pred_check
        %p96 = pneg %p29
      $region18: #{generator_forward.15} parent=15 // pred_check_branch
        %98 = sbr.rel (%p96) target = $region20
      $region19: #{generator_forward.15} parent=15 // pred_region
        %s99 = smul.u32 4, %s9
        %p100 = scmp.lt.s32.totalorder %s99, 7
        %s101 = scalar_select %p100, %s99, 7
        %s102 = smul.addr %s101, 2
        %s103 = smul.addr %s102, 4
        %s104 = scalar_lea.vmem %s0, %s103
        %s105 = smul.u32 4, %s9
      $region20: #{generator_forward.15} parent=15 // pred_fallthru
        _
    $region16: #{generator_forward.15} parent=5 // pred_fallthru
      _
    %p106 = scmp.le.s32.totalorder 1, %s9
    %p107 = scmp.lt.s32.totalorder %s9, 3
    %p108 = pnand %p106, %p107
    %p109 = pneg %p108
    // Predicated region
    $region21: #{generator_forward.15} parent=5 // pred_check
      _
    $region22: #{generator_forward.15} parent=5 // pred_check_branch
      %111 = sbr.rel (%p108) target = $region24
    $region23: #{generator_forward.15} parent=5 // pred_region
      %s112 = ssub.s32 %s9, 1
      %s113 = smul.u32 4, %s14
      %p114 = scmp.lt.s32.totalorder %s113, 7
      %s115 = scalar_select %p114, %s113, 7
      %s116 = smul.addr %s115, 2
      %s117 = smul.addr %s116, 4
      %s118 = scalar_lea.vmem %s0, %s117
      %p119 = pneg %p35
      %p120 = pneg %p32
      %p121 = pneg %p56
      %p122 = pneg %p53
      %p123 = pneg %p77
      %p124 = pneg %p74
      %s125 = smul.u32 4, %s14
      %p126 = scmp.lt.s32.totalorder %s125, 7
      %s127 = scalar_select %p126, %s125, 7
      %s128 = smul.addr %s127, 2
      %s129 = smul.addr %s128, 4
      %s130 = scalar_lea.vmem %s0, %s129
      %s131 = smul.u32 4, %s14
      %p132 = scmp.eq.s32.totalorder %s14, 0
      // Predicated region
      $region25: #{generator_forward.15} parent=23 // pred_check
        %p133 = pneg %p132
      $region26: #{generator_forward.15} parent=23 // pred_check_branch
        %135 = sbr.rel (%p133) target = $region28
      $region27: #{generator_forward.15} parent=23 // pred_region
        %v136 = vlaneseq
        %vm137 = vcmp.ge.s32.totalorder %v136, 0
        %vm138 = vcmp.lt.s32.totalorder %v136, 256
        %vm139 = vmand %vm137, %vm138
        %140 = vst.msk [vmem:[%s1] sm:$0x3] %vm139, 0.0
        %141 = vst.msk [vmem:[%s2] sm:$0x3] %vm139, 0.0
      $region28: #{generator_forward.15} parent=23 // pred_fallthru
        _
      %v142 = vld [vmem:[%s130] sm:$0xff]
      %v143 = vld [vmem:[%s130 + $0x8] sm:$0xff]
      %v144 = vld [vmem:[%s130 + $0x10] sm:$0xff]
      %v145 = vld [vmem:[%s130 + $0x18] sm:$0xff]
      %v146 = vunpack.c.l.bf16 %v142
      %v147 = vunpack.c.h.bf16 %v142
      %v148 = vunpack.c.l.bf16 %v143
      %v149 = vunpack.c.h.bf16 %v143
      %v150 = vunpack.c.l.bf16 %v144
      %v151 = vunpack.c.h.bf16 %v144
      %v152 = vunpack.c.l.bf16 %v145
      %v153 = vunpack.c.h.bf16 %v145
      %v154 = vld [vmem:[%s1] sm:$0x3]
      %v155 = vadd.f32 %v146, %v148
      %v156 = vadd.f32 %v155, %v150
      %v157 = vadd.f32 %v156, %v152
      %v158 = vrot.slane %v157, 4
      %v159 = vadd.f32 %v157, %v158
      %v160 = vrot.slane %v159, 2
      %v161 = vadd.f32 %v159, %v160
      %v162 = vrot.slane %v161, 1
      %v163 = vadd.f32 %v161, %v162
      %v164 = vadd.f32 %v147, %v149
      %v165 = vadd.f32 %v164, %v151
      %v166 = vadd.f32 %v165, %v153
      %v167 = vrot.slane %v166, 4
      %v168 = vadd.f32 %v166, %v167
      %v169 = vrot.slane %v168, 2
      %v170 = vadd.f32 %v168, %v169
      %v171 = vrot.slane %v170, 1
      %v172 = vadd.f32 %v170, %v171
      %v175 = vcombine.low %v163, %v172
      %v177 = vunpack.c.l.s4 1966171168
      %v178 = vunpack.c.0.s8 %v177
      %v179 = vlaneseq
      %v180 = vshrl.u32 %v179, 7
      %v181 = vsub.s32 %v178, %v180
      %v182 = vrot.slane %v175, %v181
      %v184 = vunpack.c.l.s4 1966171168
      %v185 = vunpack.c.0.s8 %v184
      %v186 = vlaneseq
      %v187 = vshrl.u32 %v186, 7
      %v188 = vsub.s32 %v185, %v187
      %v189 = vrot.slane %v182, %v188
      %v191 = vadd.f32 %v154, %v189
      %v192 = vlaneseq
      %vm193 = vcmp.ge.s32.totalorder %v192, 0
      %vm194 = vcmp.lt.s32.totalorder %v192, 256
      %vm195 = vmand %vm193, %vm194
      %196 = vst.msk [vmem:[%s1] sm:$0x3] %vm195, %v191
      %v197 = vld [vmem:[%s2] sm:$0x3]
      %v198 = vmul.f32 %v146, %v146
      %v199 = vmul.f32 %v147, %v147
      %v200 = vmul.f32 %v148, %v148
      %v201 = vmul.f32 %v149, %v149
      %v202 = vmul.f32 %v150, %v150
      %v203 = vmul.f32 %v151, %v151
      %v204 = vmul.f32 %v152, %v152
      %v205 = vmul.f32 %v153, %v153
      %v206 = vadd.f32 %v198, %v200
      %v207 = vadd.f32 %v206, %v202
      %v208 = vadd.f32 %v207, %v204
      %v209 = vrot.slane %v208, 4
      %v210 = vadd.f32 %v208, %v209
      %v211 = vrot.slane %v210, 2
      %v212 = vadd.f32 %v210, %v211
      %v213 = vrot.slane %v212, 1
      %v214 = vadd.f32 %v212, %v213
      %v215 = vadd.f32 %v199, %v201
      %v216 = vadd.f32 %v215, %v203
      %v217 = vadd.f32 %v216, %v205
      %v218 = vrot.slane %v217, 4
      %v219 = vadd.f32 %v217, %v218
      %v220 = vrot.slane %v219, 2
      %v221 = vadd.f32 %v219, %v220
      %v222 = vrot.slane %v221, 1
      %v223 = vadd.f32 %v221, %v222
      %v226 = vcombine.low %v214, %v223
      %v228 = vunpack.c.l.s4 1966171168
      %v229 = vunpack.c.0.s8 %v228
      %v230 = vlaneseq
      %v231 = vshrl.u32 %v230, 7
      %v232 = vsub.s32 %v229, %v231
      %v233 = vrot.slane %v226, %v232
      %v235 = vunpack.c.l.s4 1966171168
      %v236 = vunpack.c.0.s8 %v235
      %v237 = vlaneseq
      %v238 = vshrl.u32 %v237, 7
      %v239 = vsub.s32 %v236, %v238
      %v240 = vrot.slane %v233, %v239
      %v242 = vadd.f32 %v197, %v240
      %243 = vst.msk [vmem:[%s2] sm:$0x3] %vm195, %v242
      // Predicated region
      $region29: #{generator_forward.15} parent=23 // pred_check
        %p244 = pneg %p53
      $region30: #{generator_forward.15} parent=23 // pred_check_branch
        %246 = sbr.rel (%p244) target = $region32
      $region31: #{generator_forward.15} parent=23 // pred_region
        _
      $region32: #{generator_forward.15} parent=23 // pred_fallthru
        _
      // Predicated region
      $region33: #{generator_forward.15} parent=23 // pred_check
        %p247 = pneg %p74
      $region34: #{generator_forward.15} parent=23 // pred_check_branch
        %249 = sbr.rel (%p247) target = $region36
      $region35: #{generator_forward.15} parent=23 // pred_region
        _
      $region36: #{generator_forward.15} parent=23 // pred_fallthru
        _
      // Predicated region
      $region37: #{generator_forward.15} parent=23 // pred_check
        %p250 = pneg %p53
      $region38: #{generator_forward.15} parent=23 // pred_check_branch
        %252 = sbr.rel (%p250) target = $region40
      $region39: #{generator_forward.15} parent=23 // pred_region
        _
      $region40: #{generator_forward.15} parent=23 // pred_fallthru
        _
      // Predicated region
      $region41: #{generator_forward.15} parent=23 // pred_check
        %p253 = pneg %p74
      $region42: #{generator_forward.15} parent=23 // pred_check_branch
        %255 = sbr.rel (%p253) target = $region44
      $region43: #{generator_forward.15} parent=23 // pred_region
        _
      $region44: #{generator_forward.15} parent=23 // pred_fallthru
        _
    $region24: #{generator_forward.15} parent=5 // pred_fallthru
      _
    %p256 = scmp.le.s32.totalorder 2, %s9
    // Predicated region
    $region45: #{generator_forward.15} parent=5 // pred_check
      %p257 = pneg %p256
    $region46: #{generator_forward.15} parent=5 // pred_check_branch
      %259 = sbr.rel (%p257) target = $region48
    $region47: #{generator_forward.15} parent=5 // pred_region
      %s260 = ssub.s32 %s9, 2
    $region48: #{generator_forward.15} parent=5 // pred_fallthru
      _
  $region6: #{generator_forward.15} parent=0 // loop_footer
    %s13 = sadd.s32 1, %s9
  $region7: #{generator_forward.15} parent=0 // loop_footer_branch
    %8 = sbr.rel target = $region3
  $region8: #{generator_forward.15} parent=0 // loop_exit
    _

// kernel: generator_forward.16
$region0: #{generator_forward.16}
  #allocation0 [shape = 'u32[]', space=smem, size = 0x4, offset = 0x4, fixed_abs, tag = 'smem constant byte address 0x4 - core index']
  #allocation1 [shape = 'u32[144,128]{1,0:T(1,128)}', space=vmem, size = 0x12000, scoped, tag = 'internal scratch']
  %s0 = inlined_call_operand.vmem [shape: bf16[2048,8], index: 0, kind: input, shape index: {}]
  %s1 = inlined_call_operand.vmem [shape: bf16[8,128], index: 1, kind: input, shape index: {}]
  %s2 = inlined_call_operand.vmem [shape: f32[1,8], index: 2, kind: input, shape index: {}]
  %s3 = inlined_call_operand.vmem [shape: f32[1,8], index: 3, kind: input, shape index: {}]
  %s4 = inlined_call_operand.vmem [shape: bf16[2048,128], index: 4, kind: output, shape index: {}]
  %s5 = sld [smem:[#allocation0]]
  $region49: #{generator_forward.16} parent=0
    _
  %s7 = ssub.s32 1, %s5
  %s8 = scalar_select 0, %s7, %s5
  loop: start=0, step=1, limit=4
  $region2: #{generator_forward.16} parent=0 // loop_pre_header
    _
  $region3: #{generator_forward.16} parent=0 // loop_header
    %s10 = sphi 0, %s14
    %p11 = scmp.ge.s32.totalorder %s10, 4
    %s17 = sphi 0, %s29
    %s18 = sphi 0, %s25
    %s19 = sphi 0, %s17
    %s20 = sphi 0, %s18
    %s21 = sphi 0, %s19
    %s22 = sphi 0, %s20
    %s32 = sphi 0, %s34
    %s35 = sphi 0, %s32
    %s36 = sphi 0, %s35
    %s52 = sphi 0, %s36
    %s58 = sphi 0, %s60
    %s61 = sphi 0, %s58
    %s62 = sphi 0, %s61
    %s78 = sphi 0, %s62
    %s82 = sphi 0, %s82
    %s84 = sphi 0, %s82
    %s85 = sphi 0, %s84
    %s99 = sphi 0, %s85
    %s103 = sphi 0, %s103
    %s105 = sphi 0, %s103
    %s106 = sphi 0, %s105
    %s120 = sphi 0, %s106
    %s128 = sphi 0, %s130
    %s131 = sphi 0, %s128
    %s132 = sphi 0, %s131
    %s148 = sphi 0, %s132
  $region4: #{generator_forward.16} parent=0 // loop_header_branch
    %13 = sbr.rel (%p11) target = $region8
  $region5: #{generator_forward.16} parent=0 // loop_body
    %s15 = ssub.s32 %s10, 1
    %s16 = ssub.s32 %s10, 2
    %s23 = sadd.s32 1, %s18
    %p24 = scmp.ge.s32.totalorder %s23, 1
    %s25 = scalar_select %p24, 0, %s23
    %s26 = sadd.s32 1, %s17
    %s27 = scalar_select %p24, %s26, %s17
    %p28 = scmp.ge.s32.totalorder %s27, 2
    %s29 = scalar_select %p28, 0, %s27
    %s30 = ssub.s32 %s17, %s29
    %p31 = scmp.eq.s32.totalorder %s30, 0
    %s33 = sadd.s32 %s32, 1
    %s34 = scalar_select %p31, %s32, %s33
    %p37 = pneg %p31
    %p38 = scmp.eq.s32.totalorder %s10, 1
    %p39 = por %p37, %p38
    %p40 = scmp.ne.s32.totalorder %s32, %s35
    %p41 = scmp.eq.s32.totalorder %s10, 0
    %p42 = por %p40, %p41
    %p43 = scmp.ne.s32.totalorder %s32, %s35
    %p44 = scmp.eq.s32.totalorder %s15, 1
    %p45 = por %p43, %p44
    %p46 = scmp.ne.s32.totalorder %s35, %s36
    %p47 = scmp.eq.s32.totalorder %s15, 0
    %p48 = por %p46, %p47
    %p49 = scmp.ne.s32.totalorder %s35, %s36
    %p50 = scmp.eq.s32.totalorder %s16, 1
    %p51 = por %p49, %p50
    %p53 = scmp.ne.s32.totalorder %s36, %s52
    %p54 = scmp.eq.s32.totalorder %s16, 0
    %p55 = por %p53, %p54
    %s56 = ssub.s32 %s18, %s25
    %p57 = scmp.eq.s32.totalorder %s56, 0
    %s59 = sadd.s32 %s58, 1
    %s60 = scalar_select %p57, %s58, %s59
    %p63 = pneg %p57
    %p64 = scmp.eq.s32.totalorder %s10, 1
    %p65 = por %p63, %p64
    %p66 = scmp.ne.s32.totalorder %s58, %s61
    %p67 = scmp.eq.s32.totalorder %s10, 0
    %p68 = por %p66, %p67
    %p69 = scmp.ne.s32.totalorder %s58, %s61
    %p70 = scmp.eq.s32.totalorder %s15, 1
    %p71 = por %p69, %p70
    %p72 = scmp.ne.s32.totalorder %s61, %s62
    %p73 = scmp.eq.s32.totalorder %s15, 0
    %p74 = por %p72, %p73
    %p75 = scmp.ne.s32.totalorder %s61, %s62
    %p76 = scmp.eq.s32.totalorder %s16, 1
    %p77 = por %p75, %p76
    %p79 = scmp.ne.s32.totalorder %s62, %s78
    %p80 = scmp.eq.s32.totalorder %s16, 0
    %p81 = por %p79, %p80
    %s83 = sadd.s32 %s82, 1
    %p86 = scmp.eq.s32.totalorder %s10, 1
    %p87 = scmp.ne.s32.totalorder %s82, %s84
    %p88 = scmp.eq.s32.totalorder %s10, 0
    %p89 = por %p87, %p88
    %p90 = scmp.ne.s32.totalorder %s82, %s84
    %p91 = scmp.eq.s32.totalorder %s15, 1
    %p92 = por %p90, %p91
    %p93 = scmp.ne.s32.totalorder %s84, %s85
    %p94 = scmp.eq.s32.totalorder %s15, 0
    %p95 = por %p93, %p94
    %p96 = scmp.ne.s32.totalorder %s84, %s85
    %p97 = scmp.eq.s32.totalorder %s16, 1
    %p98 = por %p96, %p97
    %p100 = scmp.ne.s32.totalorder %s85, %s99
    %p101 = scmp.eq.s32.totalorder %s16, 0
    %p102 = por %p100, %p101
    %s104 = sadd.s32 %s103, 1
    %p107 = scmp.eq.s32.totalorder %s10, 1
    %p108 = scmp.ne.s32.totalorder %s103, %s105
    %p109 = scmp.eq.s32.totalorder %s10, 0
    %p110 = por %p108, %p109
    %p111 = scmp.ne.s32.totalorder %s103, %s105
    %p112 = scmp.eq.s32.totalorder %s15, 1
    %p113 = por %p111, %p112
    %p114 = scmp.ne.s32.totalorder %s105, %s106
    %p115 = scmp.eq.s32.totalorder %s15, 0
    %p116 = por %p114, %p115
    %p117 = scmp.ne.s32.totalorder %s105, %s106
    %p118 = scmp.eq.s32.totalorder %s16, 1
    %p119 = por %p117, %p118
    %p121 = scmp.ne.s32.totalorder %s106, %s120
    %p122 = scmp.eq.s32.totalorder %s16, 0
    %p123 = por %p121, %p122
    %s124 = ssub.s32 %s17, %s29
    %s125 = ssub.s32 %s18, %s25
    %s126 = sor.u32 %s124, %s125
    %p127 = scmp.eq.s32.totalorder %s126, 0
    %s129 = sadd.s32 %s128, 1
    %s130 = scalar_select %p127, %s128, %s129
    %p133 = pneg %p127
    %p134 = scmp.eq.s32.totalorder %s10, 1
    %p135 = por %p133, %p134
    %p136 = scmp.ne.s32.totalorder %s128, %s131
    %p137 = scmp.eq.s32.totalorder %s10, 0
    %p138 = por %p136, %p137
    %p139 = scmp.ne.s32.totalorder %s128, %s131
    %p140 = scmp.eq.s32.totalorder %s15, 1
    %p141 = por %p139, %p140
    %p142 = scmp.ne.s32.totalorder %s131, %s132
    %p143 = scmp.eq.s32.totalorder %s15, 0
    %p144 = por %p142, %p143
    %p145 = scmp.ne.s32.totalorder %s131, %s132
    %p146 = scmp.eq.s32.totalorder %s16, 1
    %p147 = por %p145, %p146
    %p149 = scmp.ne.s32.totalorder %s132, %s148
    %p150 = scmp.eq.s32.totalorder %s16, 0
    %p151 = por %p149, %p150
    %p152 = scmp.le.s32.totalorder 1, %s10
    %p153 = scmp.lt.s32.totalorder %s10, 3
    %p154 = pnand %p152, %p153
    %p155 = pneg %p154
    // Predicated region
    $region9: #{generator_forward.16} parent=5 // pred_check
      _
    $region10: #{generator_forward.16} parent=5 // pred_check_branch
      %157 = sbr.rel (%p154) target = $region12
    $region11: #{generator_forward.16} parent=5 // pred_region
      %s158 = ssub.s32 %s10, 1
      // Predicated region
      $region13: #{generator_forward.16} parent=11 // pred_check
        %p159 = pneg %p74
      $region14: #{generator_forward.16} parent=11 // pred_check_branch
        %161 = sbr.rel (%p159) target = $region16
      $region15: #{generator_forward.16} parent=11 // pred_region
        %p162 = scmp.lt.s32.totalorder %s20, 0
        %s163 = scalar_select %p162, %s20, 0
        %s164 = smul.addr %s163, 4
        %s165 = scalar_lea.vmem %s1, %s164
      $region16: #{generator_forward.16} parent=11 // pred_fallthru
        _
      // Predicated region
      $region17: #{generator_forward.16} parent=11 // pred_check
        %p166 = pneg %p95
      $region18: #{generator_forward.16} parent=11 // pred_check_branch
        %168 = sbr.rel (%p166) target = $region20
      $region19: #{generator_forward.16} parent=11 // pred_region
        _
      $region20: #{generator_forward.16} parent=11 // pred_fallthru
        _
      // Predicated region
      $region21: #{generator_forward.16} parent=11 // pred_check
        %p169 = pneg %p116
      $region22: #{generator_forward.16} parent=11 // pred_check_branch
        %171 = sbr.rel (%p169) target = $region24
      $region23: #{generator_forward.16} parent=11 // pred_region
        _
      $region24: #{generator_forward.16} parent=11 // pred_fallthru
        _
    $region12: #{generator_forward.16} parent=5 // pred_fallthru
      _
    %p172 = scmp.lt.s32.totalorder %s10, 2
    // Predicated region
    $region25: #{generator_forward.16} parent=5 // pred_check
      %p173 = pneg %p172
    $region26: #{generator_forward.16} parent=5 // pred_check_branch
      %175 = sbr.rel (%p173) target = $region28
    $region27: #{generator_forward.16} parent=5 // pred_region
      // Predicated region
      $region29: #{generator_forward.16} parent=27 // pred_check
        %p176 = pneg %p42
      $region30: #{generator_forward.16} parent=27 // pred_check_branch
        %178 = sbr.rel (%p176) target = $region32
      $region31: #{generator_forward.16} parent=27 // pred_region
        %s179 = smul.u32 128, %s17
        %p180 = scmp.lt.s32.totalorder %s179, 255
        %s181 = scalar_select %p180, %s179, 255
        %s182 = smul.addr %s181, 4
        %s183 = scalar_lea.vmem %s0, %s182
        %s184 = smul.u32 128, %s17
      $region32: #{generator_forward.16} parent=27 // pred_fallthru
        _
    $region28: #{generator_forward.16} parent=5 // pred_fallthru
      _
    %p185 = scmp.le.s32.totalorder 1, %s10
    %p186 = scmp.lt.s32.totalorder %s10, 3
    %p187 = pnand %p185, %p186
    %p188 = pneg %p187
    // Predicated region
    $region33: #{generator_forward.16} parent=5 // pred_check
      _
    $region34: #{generator_forward.16} parent=5 // pred_check_branch
      %190 = sbr.rel (%p187) target = $region36
    $region35: #{generator_forward.16} parent=5 // pred_region
      %s191 = ssub.s32 %s10, 1
      %s192 = smul.u32 128, %s19
      %p193 = scmp.lt.s32.totalorder %s192, 255
      %s194 = scalar_select %p193, %s192, 255
      %s195 = smul.addr %s194, 4
      %s196 = scalar_lea.vmem %s0, %s195
      %p197 = pneg %p48
      %p198 = pneg %p45
      %p199 = scmp.lt.s32.totalorder %s20, 0
      %s200 = scalar_select %p199, %s20, 0
      %s201 = smul.addr %s200, 4
      %s202 = scalar_lea.vmem %s1, %s201
      %p203 = pneg %p74
      %p204 = pneg %p71
      %p205 = pneg %p95
      %p206 = pneg %p92
      %p207 = pneg %p116
      %p208 = pneg %p113
      %p209 = pneg %p144
      %p210 = pneg %p141
      %s211 = smul.u32 128, %s19
      %p212 = scmp.lt.s32.totalorder %s211, 255
      %s213 = scalar_select %p212, %s211, 255
      %p214 = scmp.lt.s32.totalorder %s20, 0
      %s215 = scalar_select %p214, %s20, 0
      %s216 = sadd.s32 %s215, %s213
      %s217 = smul.addr %s216, 4
      %s218 = scalar_lea.vmem %s4, %s217
      %s219 = smul.u32 128, %s19
      %p220 = scmp.lt.s32.totalorder %s219, 255
      %s221 = scalar_select %p220, %s219, 255
      %s222 = smul.addr %s221, 4
      %s223 = scalar_lea.vmem %s0, %s222
      %s224 = smul.u32 128, %s19
      %p225 = scmp.lt.s32.totalorder %s20, 0
      %s226 = scalar_select %p225, %s20, 0
      %s227 = smul.addr %s226, 4
      %s228 = scalar_lea.vmem %s1, %s227
      %s229 = smul.u32 128, %s19
      %p230 = scmp.lt.s32.totalorder %s229, 255
      %s231 = scalar_select %p230, %s229, 255
      %p232 = scmp.lt.s32.totalorder %s20, 0
      %s233 = scalar_select %p232, %s20, 0
      %s234 = sadd.s32 %s233, %s231
      %s235 = smul.addr %s234, 4
      %s236 = scalar_lea.vmem %s4, %s235
      %s237 = smul.u32 128, %s19
      %v239 = vld [vmem:[%s223] sm:$0xf]
      %v240 = vld [vmem:[%s223 + $0x4] sm:$0xf]
      %v241 = vld [vmem:[%s223 + $0x8] sm:$0xf]
      %v242 = vld [vmem:[%s223 + $0xc] sm:$0xf]
      %v243 = vld [vmem:[%s223 + $0x10] sm:$0xf]
      %v244 = vld [vmem:[%s223 + $0x14] sm:$0xf]
      %v245 = vld [vmem:[%s223 + $0x18] sm:$0xf]
      %v246 = vld [vmem:[%s223 + $0x1c] sm:$0xf]
      %v247 = vld [vmem:[%s223 + $0x20] sm:$0xf]
      %v248 = vld [vmem:[%s223 + $0x24] sm:$0xf]
      %v249 = vld [vmem:[%s223 + $0x28] sm:$0xf]
      %v250 = vld [vmem:[%s223 + $0x2c] sm:$0xf]
      %v251 = vld [vmem:[%s223 + $0x30] sm:$0xf]
      %v252 = vld [vmem:[%s223 + $0x34] sm:$0xf]
      %v253 = vld [vmem:[%s223 + $0x38] sm:$0xf]
      %v254 = vld [vmem:[%s223 + $0x3c] sm:$0xf]
      %v255 = vld [vmem:[%s223 + $0x40] sm:$0xf]
      %v256 = vld [vmem:[%s223 + $0x44] sm:$0xf]
      %v257 = vld [vmem:[%s223 + $0x48] sm:$0xf]
      %v258 = vld [vmem:[%s223 + $0x4c] sm:$0xf]
      %v259 = vld [vmem:[%s223 + $0x50] sm:$0xf]
      %v260 = vld [vmem:[%s223 + $0x54] sm:$0xf]
      %v261 = vld [vmem:[%s223 + $0x58] sm:$0xf]
      %v262 = vld [vmem:[%s223 + $0x5c] sm:$0xf]
      %v263 = vld [vmem:[%s223 + $0x60] sm:$0xf]
      %v264 = vld [vmem:[%s223 + $0x64] sm:$0xf]
      %v265 = vld [vmem:[%s223 + $0x68] sm:$0xf]
      %v266 = vld [vmem:[%s223 + $0x6c] sm:$0xf]
      %v267 = vld [vmem:[%s223 + $0x70] sm:$0xf]
      %v268 = vld [vmem:[%s223 + $0x74] sm:$0xf]
      %v269 = vld [vmem:[%s223 + $0x78] sm:$0xf]
      %v270 = vld [vmem:[%s223 + $0x7c] sm:$0xf]
      %v271 = vld [vmem:[%s223 + $0x80] sm:$0xf]
      %v272 = vld [vmem:[%s223 + $0x84] sm:$0xf]
      %v273 = vld [vmem:[%s223 + $0x88] sm:$0xf]
      %v274 = vld [vmem:[%s223 + $0x8c] sm:$0xf]
      %v275 = vld [vmem:[%s223 + $0x90] sm:$0xf]
      %v276 = vld [vmem:[%s223 + $0x94] sm:$0xf]
      %v277 = vld [vmem:[%s223 + $0x98] sm:$0xf]
      %v278 = vld [vmem:[%s223 + $0x9c] sm:$0xf]
      %v279 = vld [vmem:[%s223 + $0xa0] sm:$0xf]
      %v280 = vld [vmem:[%s223 + $0xa4] sm:$0xf]
      %v281 = vld [vmem:[%s223 + $0xa8] sm:$0xf]
      %v282 = vld [vmem:[%s223 + $0xac] sm:$0xf]
      %v283 = vld [vmem:[%s223 + $0xb0] sm:$0xf]
      %v284 = vld [vmem:[%s223 + $0xb4] sm:$0xf]
      %v285 = vld [vmem:[%s223 + $0xb8] sm:$0xf]
      %v286 = vld [vmem:[%s223 + $0xbc] sm:$0xf]
      %v287 = vld [vmem:[%s223 + $0xc0] sm:$0xf]
      %v288 = vld [vmem:[%s223 + $0xc4] sm:$0xf]
      %v289 = vld [vmem:[%s223 + $0xc8] sm:$0xf]
      %v290 = vld [vmem:[%s223 + $0xcc] sm:$0xf]
      %v291 = vld [vmem:[%s223 + $0xd0] sm:$0xf]
      %v292 = vld [vmem:[%s223 + $0xd4] sm:$0xf]
      %v293 = vld [vmem:[%s223 + $0xd8] sm:$0xf]
      %v294 = vld [vmem:[%s223 + $0xdc] sm:$0xf]
      %v295 = vld [vmem:[%s223 + $0xe0] sm:$0xf]
      %v296 = vld [vmem:[%s223 + $0xe4] sm:$0xf]
      %v297 = vld [vmem:[%s223 + $0xe8] sm:$0xf]
      %v298 = vld [vmem:[%s223 + $0xec] sm:$0xf]
      %v299 = vld [vmem:[%s223 + $0xf0] sm:$0xf]
      %v300 = vld [vmem:[%s223 + $0xf4] sm:$0xf]
      %v301 = vld [vmem:[%s223 + $0xf8] sm:$0xf]
      %v302 = vld [vmem:[%s223 + $0xfc] sm:$0xf]
      %v303 = vld [vmem:[%s223 + $0x100] sm:$0xf]
      %v304 = vld [vmem:[%s223 + $0x104] sm:$0xf]
      %v305 = vld [vmem:[%s223 + $0x108] sm:$0xf]
      %v306 = vld [vmem:[%s223 + $0x10c] sm:$0xf]
      %v307 = vld [vmem:[%s223 + $0x110] sm:$0xf]
      %v308 = vld [vmem:[%s223 + $0x114] sm:$0xf]
      %v309 = vld [vmem:[%s223 + $0x118] sm:$0xf]
      %v310 = vld [vmem:[%s223 + $0x11c] sm:$0xf]
      %v311 = vld [vmem:[%s223 + $0x120] sm:$0xf]
      %v312 = vld [vmem:[%s223 + $0x124] sm:$0xf]
      %v313 = vld [vmem:[%s223 + $0x128] sm:$0xf]
      %v314 = vld [vmem:[%s223 + $0x12c] sm:$0xf]
      %v315 = vld [vmem:[%s223 + $0x130] sm:$0xf]
      %v316 = vld [vmem:[%s223 + $0x134] sm:$0xf]
      %v317 = vld [vmem:[%s223 + $0x138] sm:$0xf]
      %v318 = vld [vmem:[%s223 + $0x13c] sm:$0xf]
      %v319 = vld [vmem:[%s223 + $0x140] sm:$0xf]
      %v320 = vld [vmem:[%s223 + $0x144] sm:$0xf]
      %v321 = vld [vmem:[%s223 + $0x148] sm:$0xf]
      %v322 = vld [vmem:[%s223 + $0x14c] sm:$0xf]
      %v323 = vld [vmem:[%s223 + $0x150] sm:$0xf]
      %v324 = vld [vmem:[%s223 + $0x154] sm:$0xf]
      %v325 = vld [vmem:[%s223 + $0x158] sm:$0xf]
      %v326 = vld [vmem:[%s223 + $0x15c] sm:$0xf]
      %v327 = vld [vmem:[%s223 + $0x160] sm:$0xf]
      %v328 = vld [vmem:[%s223 + $0x164] sm:$0xf]
      %v329 = vld [vmem:[%s223 + $0x168] sm:$0xf]
      %v330 = vld [vmem:[%s223 + $0x16c] sm:$0xf]
      %v331 = vld [vmem:[%s223 + $0x170] sm:$0xf]
      %v332 = vld [vmem:[%s223 + $0x174] sm:$0xf]
      %v333 = vld [vmem:[%s223 + $0x178] sm:$0xf]
      %v334 = vld [vmem:[%s223 + $0x17c] sm:$0xf]
      %v335 = vld [vmem:[%s223 + $0x180] sm:$0xf]
      %v336 = vld [vmem:[%s223 + $0x184] sm:$0xf]
      %v337 = vld [vmem:[%s223 + $0x188] sm:$0xf]
      %v338 = vld [vmem:[%s223 + $0x18c] sm:$0xf]
      %v339 = vld [vmem:[%s223 + $0x190] sm:$0xf]
      %v340 = vld [vmem:[%s223 + $0x194] sm:$0xf]
      %v341 = vld [vmem:[%s223 + $0x198] sm:$0xf]
      %v342 = vld [vmem:[%s223 + $0x19c] sm:$0xf]
      %v343 = vld [vmem:[%s223 + $0x1a0] sm:$0xf]
      %v344 = vld [vmem:[%s223 + $0x1a4] sm:$0xf]
      %v345 = vld [vmem:[%s223 + $0x1a8] sm:$0xf]
      %v346 = vld [vmem:[%s223 + $0x1ac] sm:$0xf]
      %v347 = vld [vmem:[%s223 + $0x1b0] sm:$0xf]
      %v348 = vld [vmem:[%s223 + $0x1b4] sm:$0xf]
      %v349 = vld [vmem:[%s223 + $0x1b8] sm:$0xf]
      %v350 = vld [vmem:[%s223 + $0x1bc] sm:$0xf]
      %v351 = vld [vmem:[%s223 + $0x1c0] sm:$0xf]
      %v352 = vld [vmem:[%s223 + $0x1c4] sm:$0xf]
      %v353 = vld [vmem:[%s223 + $0x1c8] sm:$0xf]
      %v354 = vld [vmem:[%s223 + $0x1cc] sm:$0xf]
      %v355 = vld [vmem:[%s223 + $0x1d0] sm:$0xf]
      %v356 = vld [vmem:[%s223 + $0x1d4] sm:$0xf]
      %v357 = vld [vmem:[%s223 + $0x1d8] sm:$0xf]
      %v358 = vld [vmem:[%s223 + $0x1dc] sm:$0xf]
      %v359 = vld [vmem:[%s223 + $0x1e0] sm:$0xf]
      %v360 = vld [vmem:[%s223 + $0x1e4] sm:$0xf]
      %v361 = vld [vmem:[%s223 + $0x1e8] sm:$0xf]
      %v362 = vld [vmem:[%s223 + $0x1ec] sm:$0xf]
      %v363 = vld [vmem:[%s223 + $0x1f0] sm:$0xf]
      %v364 = vld [vmem:[%s223 + $0x1f4] sm:$0xf]
      %v365 = vld [vmem:[%s223 + $0x1f8] sm:$0xf]
      %v366 = vld [vmem:[%s223 + $0x1fc] sm:$0xf]
      %v367 = vunpack.c.l.bf16 %v239
      %v368 = vunpack.c.l.bf16 %v240
      %v369 = vunpack.c.l.bf16 %v241
      %v370 = vunpack.c.l.bf16 %v242
      %v371 = vunpack.c.l.bf16 %v243
      %v372 = vunpack.c.l.bf16 %v244
      %v373 = vunpack.c.l.bf16 %v245
      %v374 = vunpack.c.l.bf16 %v246
      %v375 = vunpack.c.l.bf16 %v247
      %v376 = vunpack.c.l.bf16 %v248
      %v377 = vunpack.c.l.bf16 %v249
      %v378 = vunpack.c.l.bf16 %v250
      %v379 = vunpack.c.l.bf16 %v251
      %v380 = vunpack.c.l.bf16 %v252
      %v381 = vunpack.c.l.bf16 %v253
      %v382 = vunpack.c.l.bf16 %v254
      %v383 = vunpack.c.l.bf16 %v255
      %v384 = vunpack.c.l.bf16 %v256
      %v385 = vunpack.c.l.bf16 %v257
      %v386 = vunpack.c.l.bf16 %v258
      %v387 = vunpack.c.l.bf16 %v259
      %v388 = vunpack.c.l.bf16 %v260
      %v389 = vunpack.c.l.bf16 %v261
      %v390 = vunpack.c.l.bf16 %v262
      %v391 = vunpack.c.l.bf16 %v263
      %v392 = vunpack.c.l.bf16 %v264
      %v393 = vunpack.c.l.bf16 %v265
      %v394 = vunpack.c.l.bf16 %v266
      %v395 = vunpack.c.l.bf16 %v267
      %v396 = vunpack.c.l.bf16 %v268
      %v397 = vunpack.c.l.bf16 %v269
      %v398 = vunpack.c.l.bf16 %v270
      %v399 = vunpack.c.l.bf16 %v271
      %v400 = vunpack.c.l.bf16 %v272
      %v401 = vunpack.c.l.bf16 %v273
      %v402 = vunpack.c.l.bf16 %v274
      %v403 = vunpack.c.l.bf16 %v275
      %v404 = vunpack.c.l.bf16 %v276
      %v405 = vunpack.c.l.bf16 %v277
      %v406 = vunpack.c.l.bf16 %v278
      %v407 = vunpack.c.l.bf16 %v279
      %v408 = vunpack.c.l.bf16 %v280
      %v409 = vunpack.c.l.bf16 %v281
      %v410 = vunpack.c.l.bf16 %v282
      %v411 = vunpack.c.l.bf16 %v283
      %v412 = vunpack.c.l.bf16 %v284
      %v413 = vunpack.c.l.bf16 %v285
      %v414 = vunpack.c.l.bf16 %v286
      %v415 = vunpack.c.l.bf16 %v287
      %v416 = vunpack.c.l.bf16 %v288
      %v417 = vunpack.c.l.bf16 %v289
      %v418 = vunpack.c.l.bf16 %v290
      %v419 = vunpack.c.l.bf16 %v291
      %v420 = vunpack.c.l.bf16 %v292
      %v421 = vunpack.c.l.bf16 %v293
      %v422 = vunpack.c.l.bf16 %v294
      %v423 = vunpack.c.l.bf16 %v295
      %v424 = vunpack.c.l.bf16 %v296
      %v425 = vunpack.c.l.bf16 %v297
      %v426 = vunpack.c.l.bf16 %v298
      %v427 = vunpack.c.l.bf16 %v299
      %v428 = vunpack.c.l.bf16 %v300
      %v429 = vunpack.c.l.bf16 %v301
      %v430 = vunpack.c.l.bf16 %v302
      %v431 = vunpack.c.l.bf16 %v303
      %v432 = vunpack.c.l.bf16 %v304
      %v433 = vunpack.c.l.bf16 %v305
      %v434 = vunpack.c.l.bf16 %v306
      %v435 = vunpack.c.l.bf16 %v307
      %v436 = vunpack.c.l.bf16 %v308
      %v437 = vunpack.c.l.bf16 %v309
      %v438 = vunpack.c.l.bf16 %v310
      %v439 = vunpack.c.l.bf16 %v311
      %v440 = vunpack.c.l.bf16 %v312
      %v441 = vunpack.c.l.bf16 %v313
      %v442 = vunpack.c.l.bf16 %v314
      %v443 = vunpack.c.l.bf16 %v315
      %v444 = vunpack.c.l.bf16 %v316
      %v445 = vunpack.c.l.bf16 %v317
      %v446 = vunpack.c.l.bf16 %v318
      %v447 = vunpack.c.l.bf16 %v319
      %v448 = vunpack.c.l.bf16 %v320
      %v449 = vunpack.c.l.bf16 %v321
      %v450 = vunpack.c.l.bf16 %v322
      %v451 = vunpack.c.l.bf16 %v323
      %v452 = vunpack.c.l.bf16 %v324
      %v453 = vunpack.c.l.bf16 %v325
      %v454 = vunpack.c.l.bf16 %v326
      %v455 = vunpack.c.l.bf16 %v327
      %v456 = vunpack.c.l.bf16 %v328
      %v457 = vunpack.c.l.bf16 %v329
      %v458 = vunpack.c.l.bf16 %v330
      %v459 = vunpack.c.l.bf16 %v331
      %v460 = vunpack.c.l.bf16 %v332
      %v461 = vunpack.c.l.bf16 %v333
      %v462 = vunpack.c.l.bf16 %v334
      %v463 = vunpack.c.l.bf16 %v335
      %v464 = vunpack.c.l.bf16 %v336
      %v465 = vunpack.c.l.bf16 %v337
      %v466 = vunpack.c.l.bf16 %v338
      %v467 = vunpack.c.l.bf16 %v339
      %v468 = vunpack.c.l.bf16 %v340
      %v469 = vunpack.c.l.bf16 %v341
      %v470 = vunpack.c.l.bf16 %v342
      %v471 = vunpack.c.l.bf16 %v343
      %v472 = vunpack.c.l.bf16 %v344
      %v473 = vunpack.c.l.bf16 %v345
      %v474 = vunpack.c.l.bf16 %v346
      %v475 = vunpack.c.l.bf16 %v347
      %v476 = vunpack.c.l.bf16 %v348
      %v477 = vunpack.c.l.bf16 %v349
      %v478 = vunpack.c.l.bf16 %v350
      %v479 = vunpack.c.l.bf16 %v351
      %v480 = vunpack.c.l.bf16 %v352
      %v481 = vunpack.c.l.bf16 %v353
      %v482 = vunpack.c.l.bf16 %v354
      %v483 = vunpack.c.l.bf16 %v355
      %v484 = vunpack.c.l.bf16 %v356
      %v485 = vunpack.c.l.bf16 %v357
      %v486 = vunpack.c.l.bf16 %v358
      %v487 = vunpack.c.l.bf16 %v359
      %v488 = vunpack.c.l.bf16 %v360
      %v489 = vunpack.c.l.bf16 %v361
      %v490 = vunpack.c.l.bf16 %v362
      %v491 = vunpack.c.l.bf16 %v363
      %v492 = vunpack.c.l.bf16 %v364
      %v493 = vunpack.c.l.bf16 %v365
      %v494 = vunpack.c.l.bf16 %v366
      %v495 = vld [vmem:[%s2] sm:$0x1]
      %v497 = vlaneseq
      %v498 = vshrl.u32 %v497, 7
      %v499 = vsub.s32 0, %v498
      %v500 = vrot.slane %v495, %v499
      %v502 = vmul.f32 %v367, %v500
      %v503 = vmul.f32 %v368, %v500
      %v504 = vmul.f32 %v369, %v500
      %v505 = vmul.f32 %v370, %v500
      %v506 = vmul.f32 %v371, %v500
      %v507 = vmul.f32 %v372, %v500
      %v508 = vmul.f32 %v373, %v500
      %v509 = vmul.f32 %v374, %v500
      %v510 = vmul.f32 %v375, %v500
      %v511 = vmul.f32 %v376, %v500
      %v512 = vmul.f32 %v377, %v500
      %v513 = vmul.f32 %v378, %v500
      %v514 = vmul.f32 %v379, %v500
      %v515 = vmul.f32 %v380, %v500
      %v516 = vmul.f32 %v381, %v500
      %v517 = vmul.f32 %v382, %v500
      %v518 = vmul.f32 %v383, %v500
      %v519 = vmul.f32 %v384, %v500
      %v520 = vmul.f32 %v385, %v500
      %v521 = vmul.f32 %v386, %v500
      %v522 = vmul.f32 %v387, %v500
      %v523 = vmul.f32 %v388, %v500
      %v524 = vmul.f32 %v389, %v500
      %v525 = vmul.f32 %v390, %v500
      %v526 = vmul.f32 %v391, %v500
      %v527 = vmul.f32 %v392, %v500
      %v528 = vmul.f32 %v393, %v500
      %v529 = vmul.f32 %v394, %v500
      %v530 = vmul.f32 %v395, %v500
      %v531 = vmul.f32 %v396, %v500
      %v532 = vmul.f32 %v397, %v500
      %v533 = vmul.f32 %v398, %v500
      %v534 = vmul.f32 %v399, %v500
      %v535 = vmul.f32 %v400, %v500
      %v536 = vmul.f32 %v401, %v500
      %v537 = vmul.f32 %v402, %v500
      %v538 = vmul.f32 %v403, %v500
      %v539 = vmul.f32 %v404, %v500
      %v540 = vmul.f32 %v405, %v500
      %v541 = vmul.f32 %v406, %v500
      %v542 = vmul.f32 %v407, %v500
      %v543 = vmul.f32 %v408, %v500
      %v544 = vmul.f32 %v409, %v500
      %v545 = vmul.f32 %v410, %v500
      %v546 = vmul.f32 %v411, %v500
      %v547 = vmul.f32 %v412, %v500
      %v548 = vmul.f32 %v413, %v500
      %v549 = vmul.f32 %v414, %v500
      %v550 = vmul.f32 %v415, %v500
      %v551 = vmul.f32 %v416, %v500
      %v552 = vmul.f32 %v417, %v500
      %v553 = vmul.f32 %v418, %v500
      %v554 = vmul.f32 %v419, %v500
      %v555 = vmul.f32 %v420, %v500
      %v556 = vmul.f32 %v421, %v500
      %v557 = vmul.f32 %v422, %v500
      %v558 = vmul.f32 %v423, %v500
      %v559 = vmul.f32 %v424, %v500
      %v560 = vmul.f32 %v425, %v500
      %v561 = vmul.f32 %v426, %v500
      %v562 = vmul.f32 %v427, %v500
      %v563 = vmul.f32 %v428, %v500
      %v564 = vmul.f32 %v429, %v500
      %v565 = vmul.f32 %v430, %v500
      %v566 = vmul.f32 %v431, %v500
      %v567 = vmul.f32 %v432, %v500
      %v568 = vmul.f32 %v433, %v500
      %v569 = vmul.f32 %v434, %v500
      %v570 = vmul.f32 %v435, %v500
      %v571 = vmul.f32 %v436, %v500
      %v572 = vmul.f32 %v437, %v500
      %v573 = vmul.f32 %v438, %v500
      %v574 = vmul.f32 %v439, %v500
      %v575 = vmul.f32 %v440, %v500
      %v576 = vmul.f32 %v441, %v500
      %v577 = vmul.f32 %v442, %v500
      %v578 = vmul.f32 %v443, %v500
      %v579 = vmul.f32 %v444, %v500
      %v580 = vmul.f32 %v445, %v500
      %v581 = vmul.f32 %v446, %v500
      %v582 = vmul.f32 %v447, %v500
      %v583 = vmul.f32 %v448, %v500
      %v584 = vmul.f32 %v449, %v500
      %v585 = vmul.f32 %v450, %v500
      %v586 = vmul.f32 %v451, %v500
      %v587 = vmul.f32 %v452, %v500
      %v588 = vmul.f32 %v453, %v500
      %v589 = vmul.f32 %v454, %v500
      %v590 = vmul.f32 %v455, %v500
      %v591 = vmul.f32 %v456, %v500
      %v592 = vmul.f32 %v457, %v500
      %v593 = vmul.f32 %v458, %v500
      %v594 = vmul.f32 %v459, %v500
      %v595 = vmul.f32 %v460, %v500
      %v596 = vmul.f32 %v461, %v500
      %v597 = vmul.f32 %v462, %v500
      %v598 = vmul.f32 %v463, %v500
      %v599 = vmul.f32 %v464, %v500
      %v600 = vmul.f32 %v465, %v500
      %v601 = vmul.f32 %v466, %v500
      %v602 = vmul.f32 %v467, %v500
      %v603 = vmul.f32 %v468, %v500
      %v604 = vmul.f32 %v469, %v500
      %v605 = vmul.f32 %v470, %v500
      %v606 = vmul.f32 %v471, %v500
      %v607 = vmul.f32 %v472, %v500
      %v608 = vmul.f32 %v473, %v500
      %v609 = vmul.f32 %v474, %v500
      %v610 = vmul.f32 %v475, %v500
      %v611 = vmul.f32 %v476, %v500
      %v612 = vmul.f32 %v477, %v500
      %v613 = vmul.f32 %v478, %v500
      %v614 = vmul.f32 %v479, %v500
      %v615 = vmul.f32 %v480, %v500
      %v616 = vmul.f32 %v481, %v500
      %v617 = vmul.f32 %v482, %v500
      %v618 = vmul.f32 %v483, %v500
      %v619 = vmul.f32 %v484, %v500
      %v620 = vmul.f32 %v485, %v500
      %v621 = vmul.f32 %v486, %v500
      %v622 = vmul.f32 %v487, %v500
      %v623 = vmul.f32 %v488, %v500
      %v624 = vmul.f32 %v489, %v500
      %v625 = vmul.f32 %v490, %v500
      %v626 = vmul.f32 %v491, %v500
      %v627 = vmul.f32 %v492, %v500
      %v628 = vmul.f32 %v493, %v500
      %v629 = vmul.f32 %v494, %v500
      %v630 = vld [vmem:[%s3] sm:$0x1]
      %v632 = vlaneseq
      %v633 = vshrl.u32 %v632, 7
      %v634 = vsub.s32 0, %v633
      %v635 = vrot.slane %v630, %v634
      %v637 = vadd.f32 %v502, %v635
      %v638 = vadd.f32 %v503, %v635
      %v639 = vadd.f32 %v504, %v635
      %v640 = vadd.f32 %v505, %v635
      %v641 = vadd.f32 %v506, %v635
      %v642 = vadd.f32 %v507, %v635
      %v643 = vadd.f32 %v508, %v635
      %v644 = vadd.f32 %v509, %v635
      %v645 = vadd.f32 %v510, %v635
      %v646 = vadd.f32 %v511, %v635
      %v647 = vadd.f32 %v512, %v635
      %v648 = vadd.f32 %v513, %v635
      %v649 = vadd.f32 %v514, %v635
      %v650 = vadd.f32 %v515, %v635
      %v651 = vadd.f32 %v516, %v635
      %v652 = vadd.f32 %v517, %v635
      %v653 = vadd.f32 %v518, %v635
      %v654 = vadd.f32 %v519, %v635
      %v655 = vadd.f32 %v520, %v635
      %v656 = vadd.f32 %v521, %v635
      %v657 = vadd.f32 %v522, %v635
      %v658 = vadd.f32 %v523, %v635
      %v659 = vadd.f32 %v524, %v635
      %v660 = vadd.f32 %v525, %v635
      %v661 = vadd.f32 %v526, %v635
      %v662 = vadd.f32 %v527, %v635
      %v663 = vadd.f32 %v528, %v635
      %v664 = vadd.f32 %v529, %v635
      %v665 = vadd.f32 %v530, %v635
      %v666 = vadd.f32 %v531, %v635
      %v667 = vadd.f32 %v532, %v635
      %v668 = vadd.f32 %v533, %v635
      %v669 = vadd.f32 %v534, %v635
      %v670 = vadd.f32 %v535, %v635
      %v671 = vadd.f32 %v536, %v635
      %v672 = vadd.f32 %v537, %v635
      %v673 = vadd.f32 %v538, %v635
      %v674 = vadd.f32 %v539, %v635
      %v675 = vadd.f32 %v540, %v635
      %v676 = vadd.f32 %v541, %v635
      %v677 = vadd.f32 %v542, %v635
      %v678 = vadd.f32 %v543, %v635
      %v679 = vadd.f32 %v544, %v635
      %v680 = vadd.f32 %v545, %v635
      %v681 = vadd.f32 %v546, %v635
      %v682 = vadd.f32 %v547, %v635
      %v683 = vadd.f32 %v548, %v635
      %v684 = vadd.f32 %v549, %v635
      %v685 = vadd.f32 %v550, %v635
      %v686 = vadd.f32 %v551, %v635
      %v687 = vadd.f32 %v552, %v635
      %v688 = vadd.f32 %v553, %v635
      %v689 = vadd.f32 %v554, %v635
      %v690 = vadd.f32 %v555, %v635
      %v691 = vadd.f32 %v556, %v635
      %v692 = vadd.f32 %v557, %v635
      %v693 = vadd.f32 %v558, %v635
      %v694 = vadd.f32 %v559, %v635
      %v695 = vadd.f32 %v560, %v635
      %v696 = vadd.f32 %v561, %v635
      %v697 = vadd.f32 %v562, %v635
      %v698 = vadd.f32 %v563, %v635
      %v699 = vadd.f32 %v564, %v635
      %v700 = vadd.f32 %v565, %v635
      %v701 = vadd.f32 %v566, %v635
      %v702 = vadd.f32 %v567, %v635
      %v703 = vadd.f32 %v568, %v635
      %v704 = vadd.f32 %v569, %v635
      %v705 = vadd.f32 %v570, %v635
      %v706 = vadd.f32 %v571, %v635
      %v707 = vadd.f32 %v572, %v635
      %v708 = vadd.f32 %v573, %v635
      %v709 = vadd.f32 %v574, %v635
      %v710 = vadd.f32 %v575, %v635
      %v711 = vadd.f32 %v576, %v635
      %v712 = vadd.f32 %v577, %v635
      %v713 = vadd.f32 %v578, %v635
      %v714 = vadd.f32 %v579, %v635
      %v715 = vadd.f32 %v580, %v635
      %v716 = vadd.f32 %v581, %v635
      %v717 = vadd.f32 %v582, %v635
      %v718 = vadd.f32 %v583, %v635
      %v719 = vadd.f32 %v584, %v635
      %v720 = vadd.f32 %v585, %v635
      %v721 = vadd.f32 %v586, %v635
      %v722 = vadd.f32 %v587, %v635
      %v723 = vadd.f32 %v588, %v635
      %v724 = vadd.f32 %v589, %v635
      %v725 = vadd.f32 %v590, %v635
      %v726 = vadd.f32 %v591, %v635
      %v727 = vadd.f32 %v592, %v635
      %v728 = vadd.f32 %v593, %v635
      %v729 = vadd.f32 %v594, %v635
      %v730 = vadd.f32 %v595, %v635
      %v731 = vadd.f32 %v596, %v635
      %v732 = vadd.f32 %v597, %v635
      %v733 = vadd.f32 %v598, %v635
      %v734 = vadd.f32 %v599, %v635
      %v735 = vadd.f32 %v600, %v635
      %v736 = vadd.f32 %v601, %v635
      %v737 = vadd.f32 %v602, %v635
      %v738 = vadd.f32 %v603, %v635
      %v739 = vadd.f32 %v604, %v635
      %v740 = vadd.f32 %v605, %v635
      %v741 = vadd.f32 %v606, %v635
      %v742 = vadd.f32 %v607, %v635
      %v743 = vadd.f32 %v608, %v635
      %v744 = vadd.f32 %v609, %v635
      %v745 = vadd.f32 %v610, %v635
      %v746 = vadd.f32 %v611, %v635
      %v747 = vadd.f32 %v612, %v635
      %v748 = vadd.f32 %v613, %v635
      %v749 = vadd.f32 %v614, %v635
      %v750 = vadd.f32 %v615, %v635
      %v751 = vadd.f32 %v616, %v635
      %v752 = vadd.f32 %v617, %v635
      %v753 = vadd.f32 %v618, %v635
      %v754 = vadd.f32 %v619, %v635
      %v755 = vadd.f32 %v620, %v635
      %v756 = vadd.f32 %v621, %v635
      %v757 = vadd.f32 %v622, %v635
      %v758 = vadd.f32 %v623, %v635
      %v759 = vadd.f32 %v624, %v635
      %v760 = vadd.f32 %v625, %v635
      %v761 = vadd.f32 %v626, %v635
      %v762 = vadd.f32 %v627, %v635
      %v763 = vadd.f32 %v628, %v635
      %v764 = vadd.f32 %v629, %v635
      %v765 = vmax.f32 %v637, 0.0
      %v766 = vmax.f32 %v638, 0.0
      %v767 = vmax.f32 %v639, 0.0
      %v768 = vmax.f32 %v640, 0.0
      %v769 = vmax.f32 %v641, 0.0
      %v770 = vmax.f32 %v642, 0.0
      %v771 = vmax.f32 %v643, 0.0
      %v772 = vmax.f32 %v644, 0.0
      %v773 = vmax.f32 %v645, 0.0
      %v774 = vmax.f32 %v646, 0.0
      %v775 = vmax.f32 %v647, 0.0
      %v776 = vmax.f32 %v648, 0.0
      %v777 = vmax.f32 %v649, 0.0
      %v778 = vmax.f32 %v650, 0.0
      %v779 = vmax.f32 %v651, 0.0
      %v780 = vmax.f32 %v652, 0.0
      %v781 = vmax.f32 %v653, 0.0
      %v782 = vmax.f32 %v654, 0.0
      %v783 = vmax.f32 %v655, 0.0
      %v784 = vmax.f32 %v656, 0.0
      %v785 = vmax.f32 %v657, 0.0
      %v786 = vmax.f32 %v658, 0.0
      %v787 = vmax.f32 %v659, 0.0
      %v788 = vmax.f32 %v660, 0.0
      %v789 = vmax.f32 %v661, 0.0
      %v790 = vmax.f32 %v662, 0.0
      %v791 = vmax.f32 %v663, 0.0
      %v792 = vmax.f32 %v664, 0.0
      %v793 = vmax.f32 %v665, 0.0
      %v794 = vmax.f32 %v666, 0.0
      %v795 = vmax.f32 %v667, 0.0
      %v796 = vmax.f32 %v668, 0.0
      %v797 = vmax.f32 %v669, 0.0
      %v798 = vmax.f32 %v670, 0.0
      %v799 = vmax.f32 %v671, 0.0
      %v800 = vmax.f32 %v672, 0.0
      %v801 = vmax.f32 %v673, 0.0
      %v802 = vmax.f32 %v674, 0.0
      %v803 = vmax.f32 %v675, 0.0
      %v804 = vmax.f32 %v676, 0.0
      %v805 = vmax.f32 %v677, 0.0
      %v806 = vmax.f32 %v678, 0.0
      %v807 = vmax.f32 %v679, 0.0
      %v808 = vmax.f32 %v680, 0.0
      %v809 = vmax.f32 %v681, 0.0
      %v810 = vmax.f32 %v682, 0.0
      %v811 = vmax.f32 %v683, 0.0
      %v812 = vmax.f32 %v684, 0.0
      %v813 = vmax.f32 %v685, 0.0
      %v814 = vmax.f32 %v686, 0.0
      %v815 = vmax.f32 %v687, 0.0
      %v816 = vmax.f32 %v688, 0.0
      %v817 = vmax.f32 %v689, 0.0
      %v818 = vmax.f32 %v690, 0.0
      %v819 = vmax.f32 %v691, 0.0
      %v820 = vmax.f32 %v692, 0.0
      %v821 = vmax.f32 %v693, 0.0
      %v822 = vmax.f32 %v694, 0.0
      %v823 = vmax.f32 %v695, 0.0
      %v824 = vmax.f32 %v696, 0.0
      %v825 = vmax.f32 %v697, 0.0
      %v826 = vmax.f32 %v698, 0.0
      %v827 = vmax.f32 %v699, 0.0
      %v828 = vmax.f32 %v700, 0.0
      %v829 = vmax.f32 %v701, 0.0
      %v830 = vmax.f32 %v702, 0.0
      %v831 = vmax.f32 %v703, 0.0
      %v832 = vmax.f32 %v704, 0.0
      %v833 = vmax.f32 %v705, 0.0
      %v834 = vmax.f32 %v706, 0.0
      %v835 = vmax.f32 %v707, 0.0
      %v836 = vmax.f32 %v708, 0.0
      %v837 = vmax.f32 %v709, 0.0
      %v838 = vmax.f32 %v710, 0.0
      %v839 = vmax.f32 %v711, 0.0
      %v840 = vmax.f32 %v712, 0.0
      %v841 = vmax.f32 %v713, 0.0
      %v842 = vmax.f32 %v714, 0.0
      %v843 = vmax.f32 %v715, 0.0
      %v844 = vmax.f32 %v716, 0.0
      %v845 = vmax.f32 %v717, 0.0
      %v846 = vmax.f32 %v718, 0.0
      %v847 = vmax.f32 %v719, 0.0
      %v848 = vmax.f32 %v720, 0.0
      %v849 = vmax.f32 %v721, 0.0
      %v850 = vmax.f32 %v722, 0.0
      %v851 = vmax.f32 %v723, 0.0
      %v852 = vmax.f32 %v724, 0.0
      %v853 = vmax.f32 %v725, 0.0
      %v854 = vmax.f32 %v726, 0.0
      %v855 = vmax.f32 %v727, 0.0
      %v856 = vmax.f32 %v728, 0.0
      %v857 = vmax.f32 %v729, 0.0
      %v858 = vmax.f32 %v730, 0.0
      %v859 = vmax.f32 %v731, 0.0
      %v860 = vmax.f32 %v732, 0.0
      %v861 = vmax.f32 %v733, 0.0
      %v862 = vmax.f32 %v734, 0.0
      %v863 = vmax.f32 %v735, 0.0
      %v864 = vmax.f32 %v736, 0.0
      %v865 = vmax.f32 %v737, 0.0
      %v866 = vmax.f32 %v738, 0.0
      %v867 = vmax.f32 %v739, 0.0
      %v868 = vmax.f32 %v740, 0.0
      %v869 = vmax.f32 %v741, 0.0
      %v870 = vmax.f32 %v742, 0.0
      %v871 = vmax.f32 %v743, 0.0
      %v872 = vmax.f32 %v744, 0.0
      %v873 = vmax.f32 %v745, 0.0
      %v874 = vmax.f32 %v746, 0.0
      %v875 = vmax.f32 %v747, 0.0
      %v876 = vmax.f32 %v748, 0.0
      %v877 = vmax.f32 %v749, 0.0
      %v878 = vmax.f32 %v750, 0.0
      %v879 = vmax.f32 %v751, 0.0
      %v880 = vmax.f32 %v752, 0.0
      %v881 = vmax.f32 %v753, 0.0
      %v882 = vmax.f32 %v754, 0.0
      %v883 = vmax.f32 %v755, 0.0
      %v884 = vmax.f32 %v756, 0.0
      %v885 = vmax.f32 %v757, 0.0
      %v886 = vmax.f32 %v758, 0.0
      %v887 = vmax.f32 %v759, 0.0
      %v888 = vmax.f32 %v760, 0.0
      %v889 = vmax.f32 %v761, 0.0
      %v890 = vmax.f32 %v762, 0.0
      %v891 = vmax.f32 %v763, 0.0
      %v892 = vmax.f32 %v764, 0.0
      %v893 = vpack.c.bf16 %v766, %v765
      %v894 = vpack.c.bf16 %v768, %v767
      %v895 = vpack.c.bf16 %v770, %v769
      %v896 = vpack.c.bf16 %v772, %v771
      %v897 = vpack.c.bf16 %v774, %v773
      %v898 = vpack.c.bf16 %v776, %v775
      %v899 = vpack.c.bf16 %v778, %v777
      %v900 = vpack.c.bf16 %v780, %v779
      %v901 = vpack.c.bf16 %v782, %v781
      %v902 = vpack.c.bf16 %v784, %v783
      %v903 = vpack.c.bf16 %v786, %v785
      %v904 = vpack.c.bf16 %v788, %v787
      %v905 = vpack.c.bf16 %v790, %v789
      %v906 = vpack.c.bf16 %v792, %v791
      %v907 = vpack.c.bf16 %v794, %v793
      %v908 = vpack.c.bf16 %v796, %v795
      %v909 = vpack.c.bf16 %v798, %v797
      %v910 = vpack.c.bf16 %v800, %v799
      %v911 = vpack.c.bf16 %v802, %v801
      %v912 = vpack.c.bf16 %v804, %v803
      %v913 = vpack.c.bf16 %v806, %v805
      %v914 = vpack.c.bf16 %v808, %v807
      %v915 = vpack.c.bf16 %v810, %v809
      %v916 = vpack.c.bf16 %v812, %v811
      %v917 = vpack.c.bf16 %v814, %v813
      %v918 = vpack.c.bf16 %v816, %v815
      %v919 = vpack.c.bf16 %v818, %v817
      %v920 = vpack.c.bf16 %v820, %v819
      %v921 = vpack.c.bf16 %v822, %v821
      %v922 = vpack.c.bf16 %v824, %v823
      %v923 = vpack.c.bf16 %v826, %v825
      %v924 = vpack.c.bf16 %v828, %v827
      %v925 = vpack.c.bf16 %v830, %v829
      %v926 = vpack.c.bf16 %v832, %v831
      %v927 = vpack.c.bf16 %v834, %v833
      %v928 = vpack.c.bf16 %v836, %v835
      %v929 = vpack.c.bf16 %v838, %v837
      %v930 = vpack.c.bf16 %v840, %v839
      %v931 = vpack.c.bf16 %v842, %v841
      %v932 = vpack.c.bf16 %v844, %v843
      %v933 = vpack.c.bf16 %v846, %v845
      %v934 = vpack.c.bf16 %v848, %v847
      %v935 = vpack.c.bf16 %v850, %v849
      %v936 = vpack.c.bf16 %v852, %v851
      %v937 = vpack.c.bf16 %v854, %v853
      %v938 = vpack.c.bf16 %v856, %v855
      %v939 = vpack.c.bf16 %v858, %v857
      %v940 = vpack.c.bf16 %v860, %v859
      %v941 = vpack.c.bf16 %v862, %v861
      %v942 = vpack.c.bf16 %v864, %v863
      %v943 = vpack.c.bf16 %v866, %v865
      %v944 = vpack.c.bf16 %v868, %v867
      %v945 = vpack.c.bf16 %v870, %v869
      %v946 = vpack.c.bf16 %v872, %v871
      %v947 = vpack.c.bf16 %v874, %v873
      %v948 = vpack.c.bf16 %v876, %v875
      %v949 = vpack.c.bf16 %v878, %v877
      %v950 = vpack.c.bf16 %v880, %v879
      %v951 = vpack.c.bf16 %v882, %v881
      %v952 = vpack.c.bf16 %v884, %v883
      %v953 = vpack.c.bf16 %v886, %v885
      %v954 = vpack.c.bf16 %v888, %v887
      %v955 = vpack.c.bf16 %v890, %v889
      %v956 = vpack.c.bf16 %v892, %v891
      %v957 = vld [vmem:[%s228] sm:$0xf]
      %vm958 = vcmask 64512
      %v960 = vsel %vm958, %v893, 0
      %v963 = vsel %vm958, %v894, 0
      %v966 = vsel %vm958, %v895, 0
      %v969 = vsel %vm958, %v896, 0
      %v972 = vsel %vm958, %v897, 0
      %v975 = vsel %vm958, %v898, 0
      %v978 = vsel %vm958, %v899, 0
      %v981 = vsel %vm958, %v900, 0
      %v984 = vsel %vm958, %v901, 0
      %v987 = vsel %vm958, %v902, 0
      %v990 = vsel %vm958, %v903, 0
      %v993 = vsel %vm958, %v904, 0
      %v996 = vsel %vm958, %v905, 0
      %v999 = vsel %vm958, %v906, 0
      %v1002 = vsel %vm958, %v907, 0
      %v1005 = vsel %vm958, %v908, 0
      %v1008 = vsel %vm958, %v909, 0
      %v1011 = vsel %vm958, %v910, 0
      %v1014 = vsel %vm958, %v911, 0
      %v1017 = vsel %vm958, %v912, 0
      %v1020 = vsel %vm958, %v913, 0
      %v1023 = vsel %vm958, %v914, 0
      %v1026 = vsel %vm958, %v915, 0
      %v1029 = vsel %vm958, %v916, 0
      %v1032 = vsel %vm958, %v917, 0
      %v1035 = vsel %vm958, %v918, 0
      %v1038 = vsel %vm958, %v919, 0
      %v1041 = vsel %vm958, %v920, 0
      %v1044 = vsel %vm958, %v921, 0
      %v1047 = vsel %vm958, %v922, 0
      %v1050 = vsel %vm958, %v923, 0
      %v1053 = vsel %vm958, %v924, 0
      %v1056 = vsel %vm958, %v925, 0
      %v1059 = vsel %vm958, %v926, 0
      %v1062 = vsel %vm958, %v927, 0
      %v1065 = vsel %vm958, %v928, 0
      %v1068 = vsel %vm958, %v929, 0
      %v1071 = vsel %vm958, %v930, 0
      %v1074 = vsel %vm958, %v931, 0
      %v1077 = vsel %vm958, %v932, 0
      %v1080 = vsel %vm958, %v933, 0
      %v1083 = vsel %vm958, %v934, 0
      %v1086 = vsel %vm958, %v935, 0
      %v1089 = vsel %vm958, %v936, 0
      %v1092 = vsel %vm958, %v937, 0
      %v1095 = vsel %vm958, %v938, 0
      %v1098 = vsel %vm958, %v939, 0
      %v1101 = vsel %vm958, %v940, 0
      %v1104 = vsel %vm958, %v941, 0
      %v1107 = vsel %vm958, %v942, 0
      %v1110 = vsel %vm958, %v943, 0
      %v1113 = vsel %vm958, %v944, 0
      %v1116 = vsel %vm958, %v945, 0
      %v1119 = vsel %vm958, %v946, 0
      %v1122 = vsel %vm958, %v947, 0
      %v1125 = vsel %vm958, %v948, 0
      %v1128 = vsel %vm958, %v949, 0
      %v1131 = vsel %vm958, %v950, 0
      %v1134 = vsel %vm958, %v951, 0
      %v1137 = vsel %vm958, %v952, 0
      %v1140 = vsel %vm958, %v953, 0
      %v1143 = vsel %vm958, %v954, 0
      %v1146 = vsel %vm958, %v955, 0
      %v1149 = vsel %vm958, %v956, 0
      %vm1151 = vcmask 1043456
      %v1153 = vsel %vm1151, %v957, 0
      %1155 = vmatprep.subr.bf16.mxu0 0
      %1156 = vmatpush1.bf16.msra.mxu0 %v1153
      %1157 = vmatprep.subr.bf16.mxu0 0
      %1158 = vmatpush1.bf16.msra.mxu0 0
      %1159 = vmatprep.subr.bf16.mxu0 0
      %1160 = vmatpush1.bf16.msra.mxu0 0
      %1161 = vmatprep.subr.bf16.mxu0 0
      %1162 = vmatpush1.bf16.msra.mxu0 0
      %1163 = vmatprep.subr.bf16.mxu0 0
      %1164 = vmatpush1.bf16.msra.mxu0 0
      %1165 = vmatprep.subr.bf16.mxu0 0
      %1166 = vmatpush1.bf16.msra.mxu0 0
      %1167 = vmatprep.subr.bf16.mxu0 0
      %1168 = vmatpush1.bf16.msra.mxu0 0
      %1169 = vmatprep.subr.bf16.mxu0 0
      %1170 = vmatpush1.bf16.msra.mxu0 0
      %1171 = vmatprep.subr.bf16.mxu0 0
      %1172 = vmatpush1.bf16.msra.mxu0 0
      %1173 = vmatprep.subr.bf16.mxu0 0
      %1174 = vmatpush1.bf16.msra.mxu0 0
      %1175 = vmatprep.subr.bf16.mxu0 0
      %1176 = vmatpush1.bf16.msra.mxu0 0
      %1177 = vmatprep.subr.bf16.mxu0 0
      %1178 = vmatpush1.bf16.msra.mxu0 0
      %1179 = vmatprep.subr.bf16.mxu0 0
      %1180 = vmatpush1.bf16.msra.mxu0 0
      %1181 = vmatprep.subr.bf16.mxu0 0
      %1182 = vmatpush1.bf16.msra.mxu0 0
      %1183 = vmatprep.subr.bf16.mxu0 0
      %1184 = vmatpush1.bf16.msra.mxu0 0
      %1185 = vmatprep.subr.bf16.mxu0 0
      %1186 = vmatpush1.bf16.msra.mxu0 0
      %1187 = vmatprep.mubr.bf16.mxu0 0
      %1188 = vmatmul.mubr.bf16.gmra.mrb[0].mxu0 %v960
      %v1189 = vpop.f32.mrb[0].mxu0
      %v1190 = vadd.f32 0.0, %v1189
      %v1191 = vpop.f32.mrb[0].mxu0
      %v1192 = vpop.f32.mrb[0].mxu0
      %v1193 = vadd.f32 0.0, %v1192
      %v1194 = vpop.f32.mrb[0].mxu0
      %1195 = vmatprep.mubr.bf16.mxu0 0
      %1196 = vmatmul.mubr.bf16.gmra.mrb[0].mxu0 %v963
      %v1197 = vpop.f32.mrb[0].mxu0
      %v1198 = vadd.f32 0.0, %v1197
      %v1199 = vpop.f32.mrb[0].mxu0
      %v1200 = vpop.f32.mrb[0].mxu0
      %v1201 = vadd.f32 0.0, %v1200
      %v1202 = vpop.f32.mrb[0].mxu0
      %1203 = vmatprep.mubr.bf16.mxu0 0
      %1204 = vmatmul.mubr.bf16.gmra.mrb[0].mxu0 %v966
      %v1205 = vpop.f32.mrb[0].mxu0
      %v1206 = vadd.f32 0.0, %v1205
      %v1207 = vpop.f32.mrb[0].mxu0
      %v1208 = vpop.f32.mrb[0].mxu0
      %v1209 = vadd.f32 0.0, %v1208
      %v1210 = vpop.f32.mrb[0].mxu0
      %1211 = vmatprep.mubr.bf16.mxu0 0
      %1212 = vmatmul.mubr.bf16.gmra.mrb[0].mxu0 %v969
      %v1213 = vpop.f32.mrb[0].mxu0
      %v1214 = vadd.f32 0.0, %v1213
      %v1215 = vpop.f32.mrb[0].mxu0
      %v1216 = vpop.f32.mrb[0].mxu0
      %v1217 = vadd.f32 0.0, %v1216
      %v1218 = vpop.f32.mrb[0].mxu0
      %1219 = vmatprep.mubr.bf16.mxu0 0
      %1220 = vmatmul.mubr.bf16.gmra.mrb[0].mxu0 %v972
      %v1221 = vpop.f32.mrb[0].mxu0
      %v1222 = vadd.f32 0.0, %v1221
      %v1223 = vpop.f32.mrb[0].mxu0
      %v1224 = vpop.f32.mrb[0].mxu0
      %v1225 = vadd.f32 0.0, %v1224
      %v1226 = vpop.f32.mrb[0].mxu0
      %1227 = vmatprep.mubr.bf16.mxu0 0
      %1228 = vmatmul.mubr.bf16.gmra.mrb[0].mxu0 %v975
      %v1229 = vpop.f32.mrb[0].mxu0
      %v1230 = vadd.f32 0.0, %v1229
      %v1231 = vpop.f32.mrb[0].mxu0
      %v1232 = vpop.f32.mrb[0].mxu0
      %v1233 = vadd.f32 0.0, %v1232
      %v1234 = vpop.f32.mrb[0].mxu0
      %1235 = vmatprep.mubr.bf16.mxu0 0
      %1236 = vmatmul.mubr.bf16.gmra.mrb[0].mxu0 %v978
      %v1237 = vpop.f32.mrb[0].mxu0
      %v1238 = vadd.f32 0.0, %v1237
      %v1239 = vpop.f32.mrb[0].mxu0
      %v1240 = vpop.f32.mrb[0].mxu0
      %v1241 = vadd.f32 0.0, %v1240
      %v1242 = vpop.f32.mrb[0].mxu0
      %1243 = vmatprep.mubr.bf16.mxu0 0
      %1244 = vmatmul.mubr.bf16.gmra.mrb[0].mxu0 %v981
      %v1245 = vpop.f32.mrb[0].mxu0
      %v1246 = vadd.f32 0.0, %v1245
      %v1247 = vpop.f32.mrb[0].mxu0
      %v1248 = vpop.f32.mrb[0].mxu0
      %v1249 = vadd.f32 0.0, %v1248
      %v1250 = vpop.f32.mrb[0].mxu0
      %1251 = vmatprep.mubr.bf16.mxu0 0
      %1252 = vmatmul.mubr.bf16.gmra.mrb[0].mxu0 %v984
      %v1253 = vpop.f32.mrb[0].mxu0
      %v1254 = vadd.f32 0.0, %v1253
      %v1255 = vpop.f32.mrb[0].mxu0
      %v1256 = vpop.f32.mrb[0].mxu0
      %v1257 = vadd.f32 0.0, %v1256
      %v1258 = vpop.f32.mrb[0].mxu0
      %1259 = vmatprep.mubr.bf16.mxu0 0
      %1260 = vmatmul.mubr.bf16.gmra.mrb[0].mxu0 %v987
      %v1261 = vpop.f32.mrb[0].mxu0
      %v1262 = vadd.f32 0.0, %v1261
      %v1263 = vpop.f32.mrb[0].mxu0
      %v1264 = vpop.f32.mrb[0].mxu0
      %v1265 = vadd.f32 0.0, %v1264
      %v1266 = vpop.f32.mrb[0].mxu0
      %1267 = vmatprep.mubr.bf16.mxu0 0
      %1268 = vmatmul.mubr.bf16.gmra.mrb[0].mxu0 %v990
      %v1269 = vpop.f32.mrb[0].mxu0
      %v1270 = vadd.f32 0.0, %v1269
      %v1271 = vpop.f32.mrb[0].mxu0
      %v1272 = vpop.f32.mrb[0].mxu0
      %v1273 = vadd.f32 0.0, %v1272
      %v1274 = vpop.f32.mrb[0].mxu0
      %1275 = vmatprep.mubr.bf16.mxu0 0
      %1276 = vmatmul.mubr.bf16.gmra.mrb[0].mxu0 %v993
      %v1277 = vpop.f32.mrb[0].mxu0
      %v1278 = vadd.f32 0.0, %v1277
      %v1279 = vpop.f32.mrb[0].mxu0
      %v1280 = vpop.f32.mrb[0].mxu0
      %v1281 = vadd.f32 0.0, %v1280
      %v1282 = vpop.f32.mrb[0].mxu0
      %1283 = vmatprep.mubr.bf16.mxu0 0
      %1284 = vmatmul.mubr.bf16.gmra.mrb[0].mxu0 %v996
      %v1285 = vpop.f32.mrb[0].mxu0
      %v1286 = vadd.f32 0.0, %v1285
      %v1287 = vpop.f32.mrb[0].mxu0
      %v1288 = vpop.f32.mrb[0].mxu0
      %v1289 = vadd.f32 0.0, %v1288
      %v1290 = vpop.f32.mrb[0].mxu0
      %1291 = vmatprep.mubr.bf16.mxu0 0
      %1292 = vmatmul.mubr.bf16.gmra.mrb[0].mxu0 %v999
      %v1293 = vpop.f32.mrb[0].mxu0
      %v1294 = vadd.f32 0.0, %v1293
      %v1295 = vpop.f32.mrb[0].mxu0
      %v1296 = vpop.f32.mrb[0].mxu0
      %v1297 = vadd.f32 0.0, %v1296
      %v1298 = vpop.f32.mrb[0].mxu0
      %1299 = vmatprep.mubr.bf16.mxu0 0
      %1300 = vmatmul.mubr.bf16.gmra.mrb[0].mxu0 %v1002
      %v1301 = vpop.f32.mrb[0].mxu0
      %v1302 = vadd.f32 0.0, %v1301
      %v1303 = vpop.f32.mrb[0].mxu0
      %v1304 = vpop.f32.mrb[0].mxu0
      %v1305 = vadd.f32 0.0, %v1304
      %v1306 = vpop.f32.mrb[0].mxu0
      %1307 = vmatprep.mubr.bf16.mxu0 0
      %1308 = vmatmul.mubr.bf16.gmra.mrb[0].mxu0 %v1005
      %v1309 = vpop.f32.mrb[0].mxu0
      %v1310 = vadd.f32 0.0, %v1309
      %v1311 = vpop.f32.mrb[0].mxu0
      %v1312 = vpop.f32.mrb[0].mxu0
      %v1313 = vadd.f32 0.0, %v1312
      %v1314 = vpop.f32.mrb[0].mxu0
      %1315 = vmatprep.mubr.bf16.mxu0 0
      %1316 = vmatmul.mubr.bf16.gmra.mrb[0].mxu0 %v1008
      %v1317 = vpop.f32.mrb[0].mxu0
      %v1318 = vadd.f32 0.0, %v1317
      %v1319 = vpop.f32.mrb[0].mxu0
      %v1320 = vpop.f32.mrb[0].mxu0
      %v1321 = vadd.f32 0.0, %v1320
      %v1322 = vpop.f32.mrb[0].mxu0
      %1323 = vmatprep.mubr.bf16.mxu0 0
      %1324 = vmatmul.mubr.bf16.gmra.mrb[0].mxu0 %v1011
      %v1325 = vpop.f32.mrb[0].mxu0
      %v1326 = vadd.f32 0.0, %v1325
      %v1327 = vpop.f32.mrb[0].mxu0
      %v1328 = vpop.f32.mrb[0].mxu0
      %v1329 = vadd.f32 0.0, %v1328
      %v1330 = vpop.f32.mrb[0].mxu0
      %1331 = vmatprep.mubr.bf16.mxu0 0
      %1332 = vmatmul.mubr.bf16.gmra.mrb[0].mxu0 %v1014
      %v1333 = vpop.f32.mrb[0].mxu0
      %v1334 = vadd.f32 0.0, %v1333
      %v1335 = vpop.f32.mrb[0].mxu0
      %v1336 = vpop.f32.mrb[0].mxu0
      %v1337 = vadd.f32 0.0, %v1336
      %v1338 = vpop.f32.mrb[0].mxu0
      %1339 = vmatprep.mubr.bf16.mxu0 0
      %1340 = vmatmul.mubr.bf16.gmra.mrb[0].mxu0 %v1017
      %v1341 = vpop.f32.mrb[0].mxu0
      %v1342 = vadd.f32 0.0, %v1341
      %v1343 = vpop.f32.mrb[0].mxu0
      %v1344 = vpop.f32.mrb[0].mxu0
      %v1345 = vadd.f32 0.0, %v1344
      %v1346 = vpop.f32.mrb[0].mxu0
      %1347 = vmatprep.mubr.bf16.mxu0 0
      %1348 = vmatmul.mubr.bf16.gmra.mrb[0].mxu0 %v1020
      %v1349 = vpop.f32.mrb[0].mxu0
      %v1350 = vadd.f32 0.0, %v1349
      %v1351 = vpop.f32.mrb[0].mxu0
      %v1352 = vpop.f32.mrb[0].mxu0
      %v1353 = vadd.f32 0.0, %v1352
      %v1354 = vpop.f32.mrb[0].mxu0
      %1355 = vmatprep.mubr.bf16.mxu0 0
      %1356 = vmatmul.mubr.bf16.gmra.mrb[0].mxu0 %v1023
      %v1357 = vpop.f32.mrb[0].mxu0
      %v1358 = vadd.f32 0.0, %v1357
      %v1359 = vpop.f32.mrb[0].mxu0
      %v1360 = vpop.f32.mrb[0].mxu0
      %v1361 = vadd.f32 0.0, %v1360
      %v1362 = vpop.f32.mrb[0].mxu0
      %1363 = vmatprep.mubr.bf16.mxu0 0
      %1364 = vmatmul.mubr.bf16.gmra.mrb[0].mxu0 %v1026
      %v1365 = vpop.f32.mrb[0].mxu0
      %v1366 = vadd.f32 0.0, %v1365
      %v1367 = vpop.f32.mrb[0].mxu0
      %v1368 = vpop.f32.mrb[0].mxu0
      %v1369 = vadd.f32 0.0, %v1368
      %v1370 = vpop.f32.mrb[0].mxu0
      %1371 = vmatprep.mubr.bf16.mxu0 0
      %1372 = vmatmul.mubr.bf16.gmra.mrb[0].mxu0 %v1029
      %v1373 = vpop.f32.mrb[0].mxu0
      %v1374 = vadd.f32 0.0, %v1373
      %v1375 = vpop.f32.mrb[0].mxu0
      %v1376 = vpop.f32.mrb[0].mxu0
      %v1377 = vadd.f32 0.0, %v1376
      %v1378 = vpop.f32.mrb[0].mxu0
      %1379 = vmatprep.mubr.bf16.mxu0 0
      %1380 = vmatmul.mubr.bf16.gmra.mrb[0].mxu0 %v1032
      %v1381 = vpop.f32.mrb[0].mxu0
      %v1382 = vadd.f32 0.0, %v1381
      %v1383 = vpop.f32.mrb[0].mxu0
      %v1384 = vpop.f32.mrb[0].mxu0
      %v1385 = vadd.f32 0.0, %v1384
      %v1386 = vpop.f32.mrb[0].mxu0
      %1387 = vmatprep.mubr.bf16.mxu0 0
      %1388 = vmatmul.mubr.bf16.gmra.mrb[0].mxu0 %v1035
      %v1389 = vpop.f32.mrb[0].mxu0
      %v1390 = vadd.f32 0.0, %v1389
      %v1391 = vpop.f32.mrb[0].mxu0
      %v1392 = vpop.f32.mrb[0].mxu0
      %v1393 = vadd.f32 0.0, %v1392
      %v1394 = vpop.f32.mrb[0].mxu0
      %1395 = vmatprep.mubr.bf16.mxu0 0
      %1396 = vmatmul.mubr.bf16.gmra.mrb[0].mxu0 %v1038
      %v1397 = vpop.f32.mrb[0].mxu0
      %v1398 = vadd.f32 0.0, %v1397
      %v1399 = vpop.f32.mrb[0].mxu0
      %v1400 = vpop.f32.mrb[0].mxu0
      %v1401 = vadd.f32 0.0, %v1400
      %v1402 = vpop.f32.mrb[0].mxu0
      %1403 = vmatprep.mubr.bf16.mxu0 0
      %1404 = vmatmul.mubr.bf16.gmra.mrb[0].mxu0 %v1041
      %v1405 = vpop.f32.mrb[0].mxu0
      %v1406 = vadd.f32 0.0, %v1405
      %v1407 = vpop.f32.mrb[0].mxu0
      %v1408 = vpop.f32.mrb[0].mxu0
      %v1409 = vadd.f32 0.0, %v1408
      %v1410 = vpop.f32.mrb[0].mxu0
      %1411 = vmatprep.mubr.bf16.mxu0 0
      %1412 = vmatmul.mubr.bf16.gmra.mrb[0].mxu0 %v1044
      %v1413 = vpop.f32.mrb[0].mxu0
      %v1414 = vadd.f32 0.0, %v1413
      %v1415 = vpop.f32.mrb[0].mxu0
      %v1416 = vpop.f32.mrb[0].mxu0
      %v1417 = vadd.f32 0.0, %v1416
      %v1418 = vpop.f32.mrb[0].mxu0
      %1419 = vmatprep.mubr.bf16.mxu0 0
      %1420 = vmatmul.mubr.bf16.gmra.mrb[0].mxu0 %v1047
      %v1421 = vpop.f32.mrb[0].mxu0
      %v1422 = vadd.f32 0.0, %v1421
      %v1423 = vpop.f32.mrb[0].mxu0
      %v1424 = vpop.f32.mrb[0].mxu0
      %v1425 = vadd.f32 0.0, %v1424
      %v1426 = vpop.f32.mrb[0].mxu0
      %1427 = vmatprep.mubr.bf16.mxu0 0
      %1428 = vmatmul.mubr.bf16.gmra.mrb[0].mxu0 %v1050
      %v1429 = vpop.f32.mrb[0].mxu0
      %v1430 = vadd.f32 0.0, %v1429
      %v1431 = vpop.f32.mrb[0].mxu0
      %v1432 = vpop.f32.mrb[0].mxu0
      %v1433 = vadd.f32 0.0, %v1432
      %v1434 = vpop.f32.mrb[0].mxu0
      %1435 = vmatprep.mubr.bf16.mxu0 0
      %1436 = vmatmul.mubr.bf16.gmra.mrb[0].mxu0 %v1053
      %v1437 = vpop.f32.mrb[0].mxu0
      %v1438 = vadd.f32 0.0, %v1437
      %v1439 = vpop.f32.mrb[0].mxu0
      %v1440 = vpop.f32.mrb[0].mxu0
      %v1441 = vadd.f32 0.0, %v1440
      %v1442 = vpop.f32.mrb[0].mxu0
      %1443 = vmatprep.mubr.bf16.mxu0 0
      %1444 = vmatmul.mubr.bf16.gmra.mrb[0].mxu0 %v1056
      %v1445 = vpop.f32.mrb[0].mxu0
      %v1446 = vadd.f32 0.0, %v1445
      %v1447 = vpop.f32.mrb[0].mxu0
      %v1448 = vpop.f32.mrb[0].mxu0
      %v1449 = vadd.f32 0.0, %v1448
      %v1450 = vpop.f32.mrb[0].mxu0
      %1451 = vmatprep.mubr.bf16.mxu0 0
      %1452 = vmatmul.mubr.bf16.gmra.mrb[0].mxu0 %v1059
      %v1453 = vpop.f32.mrb[0].mxu0
      %v1454 = vadd.f32 0.0, %v1453
      %v1455 = vpop.f32.mrb[0].mxu0
      %v1456 = vpop.f32.mrb[0].mxu0
      %v1457 = vadd.f32 0.0, %v1456
      %v1458 = vpop.f32.mrb[0].mxu0
      %1459 = vmatprep.mubr.bf16.mxu0 0
      %1460 = vmatmul.mubr.bf16.gmra.mrb[0].mxu0 %v1062
      %v1461 = vpop.f32.mrb[0].mxu0
      %v1462 = vadd.f32 0.0, %v1461
      %v1463 = vpop.f32.mrb[0].mxu0
      %v1464 = vpop.f32.mrb[0].mxu0
      %v1465 = vadd.f32 0.0, %v1464
      %v1466 = vpop.f32.mrb[0].mxu0
      %1467 = vmatprep.mubr.bf16.mxu0 0
      %1468 = vmatmul.mubr.bf16.gmra.mrb[0].mxu0 %v1065
      %v1469 = vpop.f32.mrb[0].mxu0
      %v1470 = vadd.f32 0.0, %v1469
      %v1471 = vpop.f32.mrb[0].mxu0
      %v1472 = vpop.f32.mrb[0].mxu0
      %v1473 = vadd.f32 0.0, %v1472
      %v1474 = vpop.f32.mrb[0].mxu0
      %1475 = vmatprep.mubr.bf16.mxu0 0
      %1476 = vmatmul.mubr.bf16.gmra.mrb[0].mxu0 %v1068
      %v1477 = vpop.f32.mrb[0].mxu0
      %v1478 = vadd.f32 0.0, %v1477
      %v1479 = vpop.f32.mrb[0].mxu0
      %v1480 = vpop.f32.mrb[0].mxu0
      %v1481 = vadd.f32 0.0, %v1480
      %v1482 = vpop.f32.mrb[0].mxu0
      %1483 = vmatprep.mubr.bf16.mxu0 0
      %1484 = vmatmul.mubr.bf16.gmra.mrb[0].mxu0 %v1071
      %v1485 = vpop.f32.mrb[0].mxu0
      %v1486 = vadd.f32 0.0, %v1485
      %v1487 = vpop.f32.mrb[0].mxu0
      %v1488 = vpop.f32.mrb[0].mxu0
      %v1489 = vadd.f32 0.0, %v1488
      %v1490 = vpop.f32.mrb[0].mxu0
      %1491 = vmatprep.mubr.bf16.mxu0 0
      %1492 = vmatmul.mubr.bf16.gmra.mrb[0].mxu0 %v1074
      %v1493 = vpop.f32.mrb[0].mxu0
      %v1494 = vadd.f32 0.0, %v1493
      %v1495 = vpop.f32.mrb[0].mxu0
      %v1496 = vpop.f32.mrb[0].mxu0
      %v1497 = vadd.f32 0.0, %v1496
      %v1498 = vpop.f32.mrb[0].mxu0
      %1499 = vmatprep.mubr.bf16.mxu0 0
      %1500 = vmatmul.mubr.bf16.gmra.mrb[0].mxu0 %v1077
      %v1501 = vpop.f32.mrb[0].mxu0
      %v1502 = vadd.f32 0.0, %v1501
      %v1503 = vpop.f32.mrb[0].mxu0
      %v1504 = vpop.f32.mrb[0].mxu0
      %v1505 = vadd.f32 0.0, %v1504
      %v1506 = vpop.f32.mrb[0].mxu0
      %1507 = vmatprep.mubr.bf16.mxu0 0
      %1508 = vmatmul.mubr.bf16.gmra.mrb[0].mxu0 %v1080
      %v1509 = vpop.f32.mrb[0].mxu0
      %v1510 = vadd.f32 0.0, %v1509
      %v1511 = vpop.f32.mrb[0].mxu0
      %v1512 = vpop.f32.mrb[0].mxu0
      %v1513 = vadd.f32 0.0, %v1512
      %v1514 = vpop.f32.mrb[0].mxu0
      %1515 = vmatprep.mubr.bf16.mxu0 0
      %1516 = vmatmul.mubr.bf16.gmra.mrb[0].mxu0 %v1083
      %v1517 = vpop.f32.mrb[0].mxu0
      %v1518 = vadd.f32 0.0, %v1517
      %v1519 = vpop.f32.mrb[0].mxu0
      %v1520 = vpop.f32.mrb[0].mxu0
      %v1521 = vadd.f32 0.0, %v1520
      %v1522 = vpop.f32.mrb[0].mxu0
      %1523 = vmatprep.mubr.bf16.mxu0 0
      %1524 = vmatmul.mubr.bf16.gmra.mrb[0].mxu0 %v1086
      %v1525 = vpop.f32.mrb[0].mxu0
      %v1526 = vadd.f32 0.0, %v1525
      %v1527 = vpop.f32.mrb[0].mxu0
      %v1528 = vpop.f32.mrb[0].mxu0
      %v1529 = vadd.f32 0.0, %v1528
      %v1530 = vpop.f32.mrb[0].mxu0
      %1531 = vmatprep.mubr.bf16.mxu0 0
      %1532 = vmatmul.mubr.bf16.gmra.mrb[0].mxu0 %v1089
      %v1533 = vpop.f32.mrb[0].mxu0
      %v1534 = vadd.f32 0.0, %v1533
      %v1535 = vpop.f32.mrb[0].mxu0
      %v1536 = vpop.f32.mrb[0].mxu0
      %v1537 = vadd.f32 0.0, %v1536
      %v1538 = vpop.f32.mrb[0].mxu0
      %1539 = vmatprep.mubr.bf16.mxu0 0
      %1540 = vmatmul.mubr.bf16.gmra.mrb[0].mxu0 %v1092
      %v1541 = vpop.f32.mrb[0].mxu0
      %v1542 = vadd.f32 0.0, %v1541
      %v1543 = vpop.f32.mrb[0].mxu0
      %v1544 = vpop.f32.mrb[0].mxu0
      %v1545 = vadd.f32 0.0, %v1544
      %v1546 = vpop.f32.mrb[0].mxu0
      %1547 = vmatprep.mubr.bf16.mxu0 0
      %1548 = vmatmul.mubr.bf16.gmra.mrb[0].mxu0 %v1095
      %v1549 = vpop.f32.mrb[0].mxu0
      %v1550 = vadd.f32 0.0, %v1549
      %v1551 = vpop.f32.mrb[0].mxu0
      %v1552 = vpop.f32.mrb[0].mxu0
      %v1553 = vadd.f32 0.0, %v1552
      %v1554 = vpop.f32.mrb[0].mxu0
      %1555 = vmatprep.mubr.bf16.mxu0 0
      %1556 = vmatmul.mubr.bf16.gmra.mrb[0].mxu0 %v1098
      %v1557 = vpop.f32.mrb[0].mxu0
      %v1558 = vadd.f32 0.0, %v1557
      %v1559 = vpop.f32.mrb[0].mxu0
      %v1560 = vpop.f32.mrb[0].mxu0
      %v1561 = vadd.f32 0.0, %v1560
      %v1562 = vpop.f32.mrb[0].mxu0
      %1563 = vmatprep.mubr.bf16.mxu0 0
      %1564 = vmatmul.mubr.bf16.gmra.mrb[0].mxu0 %v1101
      %v1565 = vpop.f32.mrb[0].mxu0
      %v1566 = vadd.f32 0.0, %v1565
      %v1567 = vpop.f32.mrb[0].mxu0
      %v1568 = vpop.f32.mrb[0].mxu0
      %v1569 = vadd.f32 0.0, %v1568
      %v1570 = vpop.f32.mrb[0].mxu0
      %1571 = vmatprep.mubr.bf16.mxu0 0
      %1572 = vmatmul.mubr.bf16.gmra.mrb[0].mxu0 %v1104
      %v1573 = vpop.f32.mrb[0].mxu0
      %v1574 = vadd.f32 0.0, %v1573
      %v1575 = vpop.f32.mrb[0].mxu0
      %v1576 = vpop.f32.mrb[0].mxu0
      %v1577 = vadd.f32 0.0, %v1576
      %v1578 = vpop.f32.mrb[0].mxu0
      %1579 = vmatprep.mubr.bf16.mxu0 0
      %1580 = vmatmul.mubr.bf16.gmra.mrb[0].mxu0 %v1107
      %v1581 = vpop.f32.mrb[0].mxu0
      %v1582 = vadd.f32 0.0, %v1581
      %v1583 = vpop.f32.mrb[0].mxu0
      %v1584 = vpop.f32.mrb[0].mxu0
      %v1585 = vadd.f32 0.0, %v1584
      %v1586 = vpop.f32.mrb[0].mxu0
      %1587 = vmatprep.mubr.bf16.mxu0 0
      %1588 = vmatmul.mubr.bf16.gmra.mrb[0].mxu0 %v1110
      %v1589 = vpop.f32.mrb[0].mxu0
      %v1590 = vadd.f32 0.0, %v1589
      %v1591 = vpop.f32.mrb[0].mxu0
      %v1592 = vpop.f32.mrb[0].mxu0
      %v1593 = vadd.f32 0.0, %v1592
      %v1594 = vpop.f32.mrb[0].mxu0
      %1595 = vmatprep.mubr.bf16.mxu0 0
      %1596 = vmatmul.mubr.bf16.gmra.mrb[0].mxu0 %v1113
      %v1597 = vpop.f32.mrb[0].mxu0
      %v1598 = vadd.f32 0.0, %v1597
      %v1599 = vpop.f32.mrb[0].mxu0
      %v1600 = vpop.f32.mrb[0].mxu0
      %v1601 = vadd.f32 0.0, %v1600
      %v1602 = vpop.f32.mrb[0].mxu0
      %1603 = vmatprep.mubr.bf16.mxu0 0
      %1604 = vmatmul.mubr.bf16.gmra.mrb[0].mxu0 %v1116
      %v1605 = vpop.f32.mrb[0].mxu0
      %v1606 = vadd.f32 0.0, %v1605
      %v1607 = vpop.f32.mrb[0].mxu0
      %v1608 = vpop.f32.mrb[0].mxu0
      %v1609 = vadd.f32 0.0, %v1608
      %v1610 = vpop.f32.mrb[0].mxu0
      %1611 = vmatprep.mubr.bf16.mxu0 0
      %1612 = vmatmul.mubr.bf16.gmra.mrb[0].mxu0 %v1119
      %v1613 = vpop.f32.mrb[0].mxu0
      %v1614 = vadd.f32 0.0, %v1613
      %v1615 = vpop.f32.mrb[0].mxu0
      %v1616 = vpop.f32.mrb[0].mxu0
      %v1617 = vadd.f32 0.0, %v1616
      %v1618 = vpop.f32.mrb[0].mxu0
      %1619 = vmatprep.mubr.bf16.mxu0 0
      %1620 = vmatmul.mubr.bf16.gmra.mrb[0].mxu0 %v1122
      %v1621 = vpop.f32.mrb[0].mxu0
      %v1622 = vadd.f32 0.0, %v1621
      %v1623 = vpop.f32.mrb[0].mxu0
      %v1624 = vpop.f32.mrb[0].mxu0
      %v1625 = vadd.f32 0.0, %v1624
      %v1626 = vpop.f32.mrb[0].mxu0
      %1627 = vmatprep.mubr.bf16.mxu0 0
      %1628 = vmatmul.mubr.bf16.gmra.mrb[0].mxu0 %v1125
      %v1629 = vpop.f32.mrb[0].mxu0
      %v1630 = vadd.f32 0.0, %v1629
      %v1631 = vpop.f32.mrb[0].mxu0
      %v1632 = vpop.f32.mrb[0].mxu0
      %v1633 = vadd.f32 0.0, %v1632
      %v1634 = vpop.f32.mrb[0].mxu0
      %1635 = vmatprep.mubr.bf16.mxu0 0
      %1636 = vmatmul.mubr.bf16.gmra.mrb[0].mxu0 %v1128
      %v1637 = vpop.f32.mrb[0].mxu0
      %v1638 = vadd.f32 0.0, %v1637
      %v1639 = vpop.f32.mrb[0].mxu0
      %v1640 = vpop.f32.mrb[0].mxu0
      %v1641 = vadd.f32 0.0, %v1640
      %v1642 = vpop.f32.mrb[0].mxu0
      %1643 = vmatprep.mubr.bf16.mxu0 0
      %1644 = vmatmul.mubr.bf16.gmra.mrb[0].mxu0 %v1131
      %v1645 = vpop.f32.mrb[0].mxu0
      %v1646 = vadd.f32 0.0, %v1645
      %v1647 = vpop.f32.mrb[0].mxu0
      %v1648 = vpop.f32.mrb[0].mxu0
      %v1649 = vadd.f32 0.0, %v1648
      %v1650 = vpop.f32.mrb[0].mxu0
      %1651 = vmatprep.mubr.bf16.mxu0 0
      %1652 = vmatmul.mubr.bf16.gmra.mrb[0].mxu0 %v1134
      %v1653 = vpop.f32.mrb[0].mxu0
      %v1654 = vadd.f32 0.0, %v1653
      %v1655 = vpop.f32.mrb[0].mxu0
      %v1656 = vpop.f32.mrb[0].mxu0
      %v1657 = vadd.f32 0.0, %v1656
      %v1658 = vpop.f32.mrb[0].mxu0
      %1659 = vmatprep.mubr.bf16.mxu0 0
      %1660 = vmatmul.mubr.bf16.gmra.mrb[0].mxu0 %v1137
      %v1661 = vpop.f32.mrb[0].mxu0
      %v1662 = vadd.f32 0.0, %v1661
      %v1663 = vpop.f32.mrb[0].mxu0
      %v1664 = vpop.f32.mrb[0].mxu0
      %v1665 = vadd.f32 0.0, %v1664
      %v1666 = vpop.f32.mrb[0].mxu0
      %1667 = vmatprep.mubr.bf16.mxu0 0
      %1668 = vmatmul.mubr.bf16.gmra.mrb[0].mxu0 %v1140
      %v1669 = vpop.f32.mrb[0].mxu0
      %v1670 = vadd.f32 0.0, %v1669
      %v1671 = vpop.f32.mrb[0].mxu0
      %v1672 = vpop.f32.mrb[0].mxu0
      %v1673 = vadd.f32 0.0, %v1672
      %v1674 = vpop.f32.mrb[0].mxu0
      %1675 = vmatprep.mubr.bf16.mxu0 0
      %1676 = vmatmul.mubr.bf16.gmra.mrb[0].mxu0 %v1143
      %v1677 = vpop.f32.mrb[0].mxu0
      %v1678 = vadd.f32 0.0, %v1677
      %v1679 = vpop.f32.mrb[0].mxu0
      %v1680 = vpop.f32.mrb[0].mxu0
      %v1681 = vadd.f32 0.0, %v1680
      %v1682 = vpop.f32.mrb[0].mxu0
      %1683 = vmatprep.mubr.bf16.mxu0 0
      %1684 = vmatmul.mubr.bf16.gmra.mrb[0].mxu0 %v1146
      %v1685 = vpop.f32.mrb[0].mxu0
      %v1686 = vadd.f32 0.0, %v1685
      %v1687 = vpop.f32.mrb[0].mxu0
      %v1688 = vpop.f32.mrb[0].mxu0
      %v1689 = vadd.f32 0.0, %v1688
      %v1690 = vpop.f32.mrb[0].mxu0
      %1691 = vmatprep.mubr.bf16.mxu0 0
      %1692 = vmatmul.mubr.bf16.gmra.mrb[0].mxu0 %v1149
      %v1693 = vpop.f32.mrb[0].mxu0
      %v1694 = vadd.f32 0.0, %v1693
      %v1695 = vpop.f32.mrb[0].mxu0
      %v1696 = vpop.f32.mrb[0].mxu0
      %v1697 = vadd.f32 0.0, %v1696
      %v1698 = vpop.f32.mrb[0].mxu0
      %1699 = vdwg.mxu0
      %v1700 = vpack.c.bf16 %v1193, %v1190
      %v1701 = vpack.c.bf16 %v1201, %v1198
      %v1702 = vpack.c.bf16 %v1209, %v1206
      %v1703 = vpack.c.bf16 %v1217, %v1214
      %v1704 = vpack.c.bf16 %v1225, %v1222
      %v1705 = vpack.c.bf16 %v1233, %v1230
      %v1706 = vpack.c.bf16 %v1241, %v1238
      %v1707 = vpack.c.bf16 %v1249, %v1246
      %v1708 = vpack.c.bf16 %v1257, %v1254
      %v1709 = vpack.c.bf16 %v1265, %v1262
      %v1710 = vpack.c.bf16 %v1273, %v1270
      %v1711 = vpack.c.bf16 %v1281, %v1278
      %v1712 = vpack.c.bf16 %v1289, %v1286
      %v1713 = vpack.c.bf16 %v1297, %v1294
      %v1714 = vpack.c.bf16 %v1305, %v1302
      %v1715 = vpack.c.bf16 %v1313, %v1310
      %v1716 = vpack.c.bf16 %v1321, %v1318
      %v1717 = vpack.c.bf16 %v1329, %v1326
      %v1718 = vpack.c.bf16 %v1337, %v1334
      %v1719 = vpack.c.bf16 %v1345, %v1342
      %v1720 = vpack.c.bf16 %v1353, %v1350
      %v1721 = vpack.c.bf16 %v1361, %v1358
      %v1722 = vpack.c.bf16 %v1369, %v1366
      %v1723 = vpack.c.bf16 %v1377, %v1374
      %v1724 = vpack.c.bf16 %v1385, %v1382
      %v1725 = vpack.c.bf16 %v1393, %v1390
      %v1726 = vpack.c.bf16 %v1401, %v1398
      %v1727 = vpack.c.bf16 %v1409, %v1406
      %v1728 = vpack.c.bf16 %v1417, %v1414
      %v1729 = vpack.c.bf16 %v1425, %v1422
      %v1730 = vpack.c.bf16 %v1433, %v1430
      %v1731 = vpack.c.bf16 %v1441, %v1438
      %v1732 = vpack.c.bf16 %v1449, %v1446
      %v1733 = vpack.c.bf16 %v1457, %v1454
      %v1734 = vpack.c.bf16 %v1465, %v1462
      %v1735 = vpack.c.bf16 %v1473, %v1470
      %v1736 = vpack.c.bf16 %v1481, %v1478
      %v1737 = vpack.c.bf16 %v1489, %v1486
      %v1738 = vpack.c.bf16 %v1497, %v1494
      %v1739 = vpack.c.bf16 %v1505, %v1502
      %v1740 = vpack.c.bf16 %v1513, %v1510
      %v1741 = vpack.c.bf16 %v1521, %v1518
      %v1742 = vpack.c.bf16 %v1529, %v1526
      %v1743 = vpack.c.bf16 %v1537, %v1534
      %v1744 = vpack.c.bf16 %v1545, %v1542
      %v1745 = vpack.c.bf16 %v1553, %v1550
      %v1746 = vpack.c.bf16 %v1561, %v1558
      %v1747 = vpack.c.bf16 %v1569, %v1566
      %v1748 = vpack.c.bf16 %v1577, %v1574
      %v1749 = vpack.c.bf16 %v1585, %v1582
      %v1750 = vpack.c.bf16 %v1593, %v1590
      %v1751 = vpack.c.bf16 %v1601, %v1598
      %v1752 = vpack.c.bf16 %v1609, %v1606
      %v1753 = vpack.c.bf16 %v1617, %v1614
      %v1754 = vpack.c.bf16 %v1625, %v1622
      %v1755 = vpack.c.bf16 %v1633, %v1630
      %v1756 = vpack.c.bf16 %v1641, %v1638
      %v1757 = vpack.c.bf16 %v1649, %v1646
      %v1758 = vpack.c.bf16 %v1657, %v1654
      %v1759 = vpack.c.bf16 %v1665, %v1662
      %v1760 = vpack.c.bf16 %v1673, %v1670
      %v1761 = vpack.c.bf16 %v1681, %v1678
      %v1762 = vpack.c.bf16 %v1689, %v1686
      %v1763 = vpack.c.bf16 %v1697, %v1694
      %v1828 = vunpack.c.l.b16 %v1700
      %v1829 = vunpack.c.h.b16 %v1700
      %v1830 = vunpack.c.l.b16 %v1701
      %v1831 = vunpack.c.h.b16 %v1701
      %v1832 = vunpack.c.l.b16 %v1702
      %v1833 = vunpack.c.h.b16 %v1702
      %v1834 = vunpack.c.l.b16 %v1703
      %v1835 = vunpack.c.h.b16 %v1703
      %v1836 = vunpack.c.l.b16 %v1704
      %v1837 = vunpack.c.h.b16 %v1704
      %v1838 = vunpack.c.l.b16 %v1705
      %v1839 = vunpack.c.h.b16 %v1705
      %v1840 = vunpack.c.l.b16 %v1706
      %v1841 = vunpack.c.h.b16 %v1706
      %v1842 = vunpack.c.l.b16 %v1707
      %v1843 = vunpack.c.h.b16 %v1707
      %v1844 = vunpack.c.l.b16 %v1708
      %v1845 = vunpack.c.h.b16 %v1708
      %v1846 = vunpack.c.l.b16 %v1709
      %v1847 = vunpack.c.h.b16 %v1709
      %v1848 = vunpack.c.l.b16 %v1710
      %v1849 = vunpack.c.h.b16 %v1710
      %v1850 = vunpack.c.l.b16 %v1711
      %v1851 = vunpack.c.h.b16 %v1711
      %v1852 = vunpack.c.l.b16 %v1712
      %v1853 = vunpack.c.h.b16 %v1712
      %v1854 = vunpack.c.l.b16 %v1713
      %v1855 = vunpack.c.h.b16 %v1713
      %v1856 = vunpack.c.l.b16 %v1714
      %v1857 = vunpack.c.h.b16 %v1714
      %v1858 = vunpack.c.l.b16 %v1715
      %v1859 = vunpack.c.h.b16 %v1715
      %v1860 = vunpack.c.l.b16 %v1716
      %v1861 = vunpack.c.h.b16 %v1716
      %v1862 = vunpack.c.l.b16 %v1717
      %v1863 = vunpack.c.h.b16 %v1717
      %v1864 = vunpack.c.l.b16 %v1718
      %v1865 = vunpack.c.h.b16 %v1718
      %v1866 = vunpack.c.l.b16 %v1719
      %v1867 = vunpack.c.h.b16 %v1719
      %v1868 = vunpack.c.l.b16 %v1720
      %v1869 = vunpack.c.h.b16 %v1720
      %v1870 = vunpack.c.l.b16 %v1721
      %v1871 = vunpack.c.h.b16 %v1721
      %v1872 = vunpack.c.l.b16 %v1722
      %v1873 = vunpack.c.h.b16 %v1722
      %v1874 = vunpack.c.l.b16 %v1723
      %v1875 = vunpack.c.h.b16 %v1723
      %v1876 = vunpack.c.l.b16 %v1724
      %v1877 = vunpack.c.h.b16 %v1724
      %v1878 = vunpack.c.l.b16 %v1725
      %v1879 = vunpack.c.h.b16 %v1725
      %v1880 = vunpack.c.l.b16 %v1726
      %v1881 = vunpack.c.h.b16 %v1726
      %v1882 = vunpack.c.l.b16 %v1727
      %v1883 = vunpack.c.h.b16 %v1727
      %v1884 = vunpack.c.l.b16 %v1728
      %v1885 = vunpack.c.h.b16 %v1728
      %v1886 = vunpack.c.l.b16 %v1729
      %v1887 = vunpack.c.h.b16 %v1729
      %v1888 = vunpack.c.l.b16 %v1730
      %v1889 = vunpack.c.h.b16 %v1730
      %v1890 = vunpack.c.l.b16 %v1731
      %v1891 = vunpack.c.h.b16 %v1731
      %v1892 = vunpack.c.l.b16 %v1732
      %v1893 = vunpack.c.h.b16 %v1732
      %v1894 = vunpack.c.l.b16 %v1733
      %v1895 = vunpack.c.h.b16 %v1733
      %v1896 = vunpack.c.l.b16 %v1734
      %v1897 = vunpack.c.h.b16 %v1734
      %v1898 = vunpack.c.l.b16 %v1735
      %v1899 = vunpack.c.h.b16 %v1735
      %v1900 = vunpack.c.l.b16 %v1736
      %v1901 = vunpack.c.h.b16 %v1736
      %v1902 = vunpack.c.l.b16 %v1737
      %v1903 = vunpack.c.h.b16 %v1737
      %v1904 = vunpack.c.l.b16 %v1738
      %v1905 = vunpack.c.h.b16 %v1738
      %v1906 = vunpack.c.l.b16 %v1739
      %v1907 = vunpack.c.h.b16 %v1739
      %v1908 = vunpack.c.l.b16 %v1740
      %v1909 = vunpack.c.h.b16 %v1740
      %v1910 = vunpack.c.l.b16 %v1741
      %v1911 = vunpack.c.h.b16 %v1741
      %v1912 = vunpack.c.l.b16 %v1742
      %v1913 = vunpack.c.h.b16 %v1742
      %v1914 = vunpack.c.l.b16 %v1743
      %v1915 = vunpack.c.h.b16 %v1743
      %v1916 = vunpack.c.l.b16 %v1744
      %v1917 = vunpack.c.h.b16 %v1744
      %v1918 = vunpack.c.l.b16 %v1745
      %v1919 = vunpack.c.h.b16 %v1745
      %v1920 = vunpack.c.l.b16 %v1746
      %v1921 = vunpack.c.h.b16 %v1746
      %v1922 = vunpack.c.l.b16 %v1747
      %v1923 = vunpack.c.h.b16 %v1747
      %v1924 = vunpack.c.l.b16 %v1748
      %v1925 = vunpack.c.h.b16 %v1748
      %v1926 = vunpack.c.l.b16 %v1749
      %v1927 = vunpack.c.h.b16 %v1749
      %v1928 = vunpack.c.l.b16 %v1750
      %v1929 = vunpack.c.h.b16 %v1750
      %v1930 = vunpack.c.l.b16 %v1751
      %v1931 = vunpack.c.h.b16 %v1751
      %v1932 = vunpack.c.l.b16 %v1752
      %v1933 = vunpack.c.h.b16 %v1752
      %v1934 = vunpack.c.l.b16 %v1753
      %v1935 = vunpack.c.h.b16 %v1753
      %v1936 = vunpack.c.l.b16 %v1754
      %v1937 = vunpack.c.h.b16 %v1754
      %v1938 = vunpack.c.l.b16 %v1755
      %v1939 = vunpack.c.h.b16 %v1755
      %v1940 = vunpack.c.l.b16 %v1756
      %v1941 = vunpack.c.h.b16 %v1756
      %v1942 = vunpack.c.l.b16 %v1757
      %v1943 = vunpack.c.h.b16 %v1757
      %v1944 = vunpack.c.l.b16 %v1758
      %v1945 = vunpack.c.h.b16 %v1758
      %v1946 = vunpack.c.l.b16 %v1759
      %v1947 = vunpack.c.h.b16 %v1759
      %v1948 = vunpack.c.l.b16 %v1760
      %v1949 = vunpack.c.h.b16 %v1760
      %v1950 = vunpack.c.l.b16 %v1761
      %v1951 = vunpack.c.h.b16 %v1761
      %v1952 = vunpack.c.l.b16 %v1762
      %v1953 = vunpack.c.h.b16 %v1762
      %v1954 = vunpack.c.l.b16 %v1763
      %v1955 = vunpack.c.h.b16 %v1763
      %v1956 = vpack.c.b16 %v1828, %v1828
      %v1957 = vpack.c.b16 %v1829, %v1829
      %v1958 = vpack.c.b16 %v1830, %v1830
      %v1959 = vpack.c.b16 %v1831, %v1831
      %v1960 = vpack.c.b16 %v1832, %v1832
      %v1961 = vpack.c.b16 %v1833, %v1833
      %v1962 = vpack.c.b16 %v1834, %v1834
      %v1963 = vpack.c.b16 %v1835, %v1835
      %v1964 = vpack.c.b16 %v1836, %v1836
      %v1965 = vpack.c.b16 %v1837, %v1837
      %v1966 = vpack.c.b16 %v1838, %v1838
      %v1967 = vpack.c.b16 %v1839, %v1839
      %v1968 = vpack.c.b16 %v1840, %v1840
      %v1969 = vpack.c.b16 %v1841, %v1841
      %v1970 = vpack.c.b16 %v1842, %v1842
      %v1971 = vpack.c.b16 %v1843, %v1843
      %v1972 = vpack.c.b16 %v1844, %v1844
      %v1973 = vpack.c.b16 %v1845, %v1845
      %v1974 = vpack.c.b16 %v1846, %v1846
      %v1975 = vpack.c.b16 %v1847, %v1847
      %v1976 = vpack.c.b16 %v1848, %v1848
      %v1977 = vpack.c.b16 %v1849, %v1849
      %v1978 = vpack.c.b16 %v1850, %v1850
      %v1979 = vpack.c.b16 %v1851, %v1851
      %v1980 = vpack.c.b16 %v1852, %v1852
      %v1981 = vpack.c.b16 %v1853, %v1853
      %v1982 = vpack.c.b16 %v1854, %v1854
      %v1983 = vpack.c.b16 %v1855, %v1855
      %v1984 = vpack.c.b16 %v1856, %v1856
      %v1985 = vpack.c.b16 %v1857, %v1857
      %v1986 = vpack.c.b16 %v1858, %v1858
      %v1987 = vpack.c.b16 %v1859, %v1859
      %v1988 = vpack.c.b16 %v1860, %v1860
      %v1989 = vpack.c.b16 %v1861, %v1861
      %v1990 = vpack.c.b16 %v1862, %v1862
      %v1991 = vpack.c.b16 %v1863, %v1863
      %v1992 = vpack.c.b16 %v1864, %v1864
      %v1993 = vpack.c.b16 %v1865, %v1865
      %v1994 = vpack.c.b16 %v1866, %v1866
      %v1995 = vpack.c.b16 %v1867, %v1867
      %v1996 = vpack.c.b16 %v1868, %v1868
      %v1997 = vpack.c.b16 %v1869, %v1869
      %v1998 = vpack.c.b16 %v1870, %v1870
      %v1999 = vpack.c.b16 %v1871, %v1871
      %v2000 = vpack.c.b16 %v1872, %v1872
      %v2001 = vpack.c.b16 %v1873, %v1873
      %v2002 = vpack.c.b16 %v1874, %v1874
      %v2003 = vpack.c.b16 %v1875, %v1875
      %v2004 = vpack.c.b16 %v1876, %v1876
      %v2005 = vpack.c.b16 %v1877, %v1877
      %v2006 = vpack.c.b16 %v1878, %v1878
      %v2007 = vpack.c.b16 %v1879, %v1879
      %v2008 = vpack.c.b16 %v1880, %v1880
      %v2009 = vpack.c.b16 %v1881, %v1881
      %v2010 = vpack.c.b16 %v1882, %v1882
      %v2011 = vpack.c.b16 %v1883, %v1883
      %v2012 = vpack.c.b16 %v1884, %v1884
      %v2013 = vpack.c.b16 %v1885, %v1885
      %v2014 = vpack.c.b16 %v1886, %v1886
      %v2015 = vpack.c.b16 %v1887, %v1887
      %v2016 = vpack.c.b16 %v1888, %v1888
      %v2017 = vpack.c.b16 %v1889, %v1889
      %v2018 = vpack.c.b16 %v1890, %v1890
      %v2019 = vpack.c.b16 %v1891, %v1891
      %v2020 = vpack.c.b16 %v1892, %v1892
      %v2021 = vpack.c.b16 %v1893, %v1893
      %v2022 = vpack.c.b16 %v1894, %v1894
      %v2023 = vpack.c.b16 %v1895, %v1895
      %v2024 = vpack.c.b16 %v1896, %v1896
      %v2025 = vpack.c.b16 %v1897, %v1897
      %v2026 = vpack.c.b16 %v1898, %v1898
      %v2027 = vpack.c.b16 %v1899, %v1899
      %v2028 = vpack.c.b16 %v1900, %v1900
      %v2029 = vpack.c.b16 %v1901, %v1901
      %v2030 = vpack.c.b16 %v1902, %v1902
      %v2031 = vpack.c.b16 %v1903, %v1903
      %v2032 = vpack.c.b16 %v1904, %v1904
      %v2033 = vpack.c.b16 %v1905, %v1905
      %v2034 = vpack.c.b16 %v1906, %v1906
      %v2035 = vpack.c.b16 %v1907, %v1907
      %v2036 = vpack.c.b16 %v1908, %v1908
      %v2037 = vpack.c.b16 %v1909, %v1909
      %v2038 = vpack.c.b16 %v1910, %v1910
      %v2039 = vpack.c.b16 %v1911, %v1911
      %v2040 = vpack.c.b16 %v1912, %v1912
      %v2041 = vpack.c.b16 %v1913, %v1913
      %v2042 = vpack.c.b16 %v1914, %v1914
      %v2043 = vpack.c.b16 %v1915, %v1915
      %v2044 = vpack.c.b16 %v1916, %v1916
      %v2045 = vpack.c.b16 %v1917, %v1917
      %v2046 = vpack.c.b16 %v1918, %v1918
      %v2047 = vpack.c.b16 %v1919, %v1919
      %v2048 = vpack.c.b16 %v1920, %v1920
      %v2049 = vpack.c.b16 %v1921, %v1921
      %v2050 = vpack.c.b16 %v1922, %v1922
      %v2051 = vpack.c.b16 %v1923, %v1923
      %v2052 = vpack.c.b16 %v1924, %v1924
      %v2053 = vpack.c.b16 %v1925, %v1925
      %v2054 = vpack.c.b16 %v1926, %v1926
      %v2055 = vpack.c.b16 %v1927, %v1927
      %v2056 = vpack.c.b16 %v1928, %v1928
      %v2057 = vpack.c.b16 %v1929, %v1929
      %v2058 = vpack.c.b16 %v1930, %v1930
      %v2059 = vpack.c.b16 %v1931, %v1931
      %v2060 = vpack.c.b16 %v1932, %v1932
      %v2061 = vpack.c.b16 %v1933, %v1933
      %v2062 = vpack.c.b16 %v1934, %v1934
      %v2063 = vpack.c.b16 %v1935, %v1935
      %v2064 = vpack.c.b16 %v1936, %v1936
      %v2065 = vpack.c.b16 %v1937, %v1937
      %v2066 = vpack.c.b16 %v1938, %v1938
      %v2067 = vpack.c.b16 %v1939, %v1939
      %v2068 = vpack.c.b16 %v1940, %v1940
      %v2069 = vpack.c.b16 %v1941, %v1941
      %v2070 = vpack.c.b16 %v1942, %v1942
      %v2071 = vpack.c.b16 %v1943, %v1943
      %v2072 = vpack.c.b16 %v1944, %v1944
      %v2073 = vpack.c.b16 %v1945, %v1945
      %v2074 = vpack.c.b16 %v1946, %v1946
      %v2075 = vpack.c.b16 %v1947, %v1947
      %v2076 = vpack.c.b16 %v1948, %v1948
      %v2077 = vpack.c.b16 %v1949, %v1949
      %v2078 = vpack.c.b16 %v1950, %v1950
      %v2079 = vpack.c.b16 %v1951, %v1951
      %v2080 = vpack.c.b16 %v1952, %v1952
      %v2081 = vpack.c.b16 %v1953, %v1953
      %v2082 = vpack.c.b16 %v1954, %v1954
      %v2083 = vpack.c.b16 %v1955, %v1955
      %2212 = vst [vmem:[%s236] sm:$0xf] %v1956
      %2213 = vst [vmem:[%s236 + $0x4] sm:$0xf] %v1957
      %2214 = vst [vmem:[%s236 + $0x8] sm:$0xf] %v1958
      %2215 = vst [vmem:[%s236 + $0xc] sm:$0xf] %v1959
      %2216 = vst [vmem:[%s236 + $0x10] sm:$0xf] %v1960
      %2217 = vst [vmem:[%s236 + $0x14] sm:$0xf] %v1961
      %2218 = vst [vmem:[%s236 + $0x18] sm:$0xf] %v1962
      %2219 = vst [vmem:[%s236 + $0x1c] sm:$0xf] %v1963
      %2220 = vst [vmem:[%s236 + $0x20] sm:$0xf] %v1964
      %2221 = vst [vmem:[%s236 + $0x24] sm:$0xf] %v1965
      %2222 = vst [vmem:[%s236 + $0x28] sm:$0xf] %v1966
      %2223 = vst [vmem:[%s236 + $0x2c] sm:$0xf] %v1967
      %2224 = vst [vmem:[%s236 + $0x30] sm:$0xf] %v1968
      %2225 = vst [vmem:[%s236 + $0x34] sm:$0xf] %v1969
      %2226 = vst [vmem:[%s236 + $0x38] sm:$0xf] %v1970
      %2227 = vst [vmem:[%s236 + $0x3c] sm:$0xf] %v1971
      %2228 = vst [vmem:[%s236 + $0x40] sm:$0xf] %v1972
      %2229 = vst [vmem:[%s236 + $0x44] sm:$0xf] %v1973
      %2230 = vst [vmem:[%s236 + $0x48] sm:$0xf] %v1974
      %2231 = vst [vmem:[%s236 + $0x4c] sm:$0xf] %v1975
      %2232 = vst [vmem:[%s236 + $0x50] sm:$0xf] %v1976
      %2233 = vst [vmem:[%s236 + $0x54] sm:$0xf] %v1977
      %2234 = vst [vmem:[%s236 + $0x58] sm:$0xf] %v1978
      %2235 = vst [vmem:[%s236 + $0x5c] sm:$0xf] %v1979
      %2236 = vst [vmem:[%s236 + $0x60] sm:$0xf] %v1980
      %2237 = vst [vmem:[%s236 + $0x64] sm:$0xf] %v1981
      %2238 = vst [vmem:[%s236 + $0x68] sm:$0xf] %v1982
      %2239 = vst [vmem:[%s236 + $0x6c] sm:$0xf] %v1983
      %2240 = vst [vmem:[%s236 + $0x70] sm:$0xf] %v1984
      %2241 = vst [vmem:[%s236 + $0x74] sm:$0xf] %v1985
      %2242 = vst [vmem:[%s236 + $0x78] sm:$0xf] %v1986
      %2243 = vst [vmem:[%s236 + $0x7c] sm:$0xf] %v1987
      %2244 = vst [vmem:[%s236 + $0x80] sm:$0xf] %v1988
      %2245 = vst [vmem:[%s236 + $0x84] sm:$0xf] %v1989
      %2246 = vst [vmem:[%s236 + $0x88] sm:$0xf] %v1990
      %2247 = vst [vmem:[%s236 + $0x8c] sm:$0xf] %v1991
      %2248 = vst [vmem:[%s236 + $0x90] sm:$0xf] %v1992
      %2249 = vst [vmem:[%s236 + $0x94] sm:$0xf] %v1993
      %2250 = vst [vmem:[%s236 + $0x98] sm:$0xf] %v1994
      %2251 = vst [vmem:[%s236 + $0x9c] sm:$0xf] %v1995
      %2252 = vst [vmem:[%s236 + $0xa0] sm:$0xf] %v1996
      %2253 = vst [vmem:[%s236 + $0xa4] sm:$0xf] %v1997
      %2254 = vst [vmem:[%s236 + $0xa8] sm:$0xf] %v1998
      %2255 = vst [vmem:[%s236 + $0xac] sm:$0xf] %v1999
      %2256 = vst [vmem:[%s236 + $0xb0] sm:$0xf] %v2000
      %2257 = vst [vmem:[%s236 + $0xb4] sm:$0xf] %v2001
      %2258 = vst [vmem:[%s236 + $0xb8] sm:$0xf] %v2002
      %2259 = vst [vmem:[%s236 + $0xbc] sm:$0xf] %v2003
      %2260 = vst [vmem:[%s236 + $0xc0] sm:$0xf] %v2004
      %2261 = vst [vmem:[%s236 + $0xc4] sm:$0xf] %v2005
      %2262 = vst [vmem:[%s236 + $0xc8] sm:$0xf] %v2006
      %2263 = vst [vmem:[%s236 + $0xcc] sm:$0xf] %v2007
      %2264 = vst [vmem:[%s236 + $0xd0] sm:$0xf] %v2008
      %2265 = vst [vmem:[%s236 + $0xd4] sm:$0xf] %v2009
      %2266 = vst [vmem:[%s236 + $0xd8] sm:$0xf] %v2010
      %2267 = vst [vmem:[%s236 + $0xdc] sm:$0xf] %v2011
      %2268 = vst [vmem:[%s236 + $0xe0] sm:$0xf] %v2012
      %2269 = vst [vmem:[%s236 + $0xe4] sm:$0xf] %v2013
      %2270 = vst [vmem:[%s236 + $0xe8] sm:$0xf] %v2014
      %2271 = vst [vmem:[%s236 + $0xec] sm:$0xf] %v2015
      %2272 = vst [vmem:[%s236 + $0xf0] sm:$0xf] %v2016
      %2273 = vst [vmem:[%s236 + $0xf4] sm:$0xf] %v2017
      %2274 = vst [vmem:[%s236 + $0xf8] sm:$0xf] %v2018
      %2275 = vst [vmem:[%s236 + $0xfc] sm:$0xf] %v2019
      %2276 = vst [vmem:[%s236 + $0x100] sm:$0xf] %v2020
      %2277 = vst [vmem:[%s236 + $0x104] sm:$0xf] %v2021
      %2278 = vst [vmem:[%s236 + $0x108] sm:$0xf] %v2022
      %2279 = vst [vmem:[%s236 + $0x10c] sm:$0xf] %v2023
      %2280 = vst [vmem:[%s236 + $0x110] sm:$0xf] %v2024
      %2281 = vst [vmem:[%s236 + $0x114] sm:$0xf] %v2025
      %2282 = vst [vmem:[%s236 + $0x118] sm:$0xf] %v2026
      %2283 = vst [vmem:[%s236 + $0x11c] sm:$0xf] %v2027
      %2284 = vst [vmem:[%s236 + $0x120] sm:$0xf] %v2028
      %2285 = vst [vmem:[%s236 + $0x124] sm:$0xf] %v2029
      %2286 = vst [vmem:[%s236 + $0x128] sm:$0xf] %v2030
      %2287 = vst [vmem:[%s236 + $0x12c] sm:$0xf] %v2031
      %2288 = vst [vmem:[%s236 + $0x130] sm:$0xf] %v2032
      %2289 = vst [vmem:[%s236 + $0x134] sm:$0xf] %v2033
      %2290 = vst [vmem:[%s236 + $0x138] sm:$0xf] %v2034
      %2291 = vst [vmem:[%s236 + $0x13c] sm:$0xf] %v2035
      %2292 = vst [vmem:[%s236 + $0x140] sm:$0xf] %v2036
      %2293 = vst [vmem:[%s236 + $0x144] sm:$0xf] %v2037
      %2294 = vst [vmem:[%s236 + $0x148] sm:$0xf] %v2038
      %2295 = vst [vmem:[%s236 + $0x14c] sm:$0xf] %v2039
      %2296 = vst [vmem:[%s236 + $0x150] sm:$0xf] %v2040
      %2297 = vst [vmem:[%s236 + $0x154] sm:$0xf] %v2041
      %2298 = vst [vmem:[%s236 + $0x158] sm:$0xf] %v2042
      %2299 = vst [vmem:[%s236 + $0x15c] sm:$0xf] %v2043
      %2300 = vst [vmem:[%s236 + $0x160] sm:$0xf] %v2044
      %2301 = vst [vmem:[%s236 + $0x164] sm:$0xf] %v2045
      %2302 = vst [vmem:[%s236 + $0x168] sm:$0xf] %v2046
      %2303 = vst [vmem:[%s236 + $0x16c] sm:$0xf] %v2047
      %2304 = vst [vmem:[%s236 + $0x170] sm:$0xf] %v2048
      %2305 = vst [vmem:[%s236 + $0x174] sm:$0xf] %v2049
      %2306 = vst [vmem:[%s236 + $0x178] sm:$0xf] %v2050
      %2307 = vst [vmem:[%s236 + $0x17c] sm:$0xf] %v2051
      %2308 = vst [vmem:[%s236 + $0x180] sm:$0xf] %v2052
      %2309 = vst [vmem:[%s236 + $0x184] sm:$0xf] %v2053
      %2310 = vst [vmem:[%s236 + $0x188] sm:$0xf] %v2054
      %2311 = vst [vmem:[%s236 + $0x18c] sm:$0xf] %v2055
      %2312 = vst [vmem:[%s236 + $0x190] sm:$0xf] %v2056
      %2313 = vst [vmem:[%s236 + $0x194] sm:$0xf] %v2057
      %2314 = vst [vmem:[%s236 + $0x198] sm:$0xf] %v2058
      %2315 = vst [vmem:[%s236 + $0x19c] sm:$0xf] %v2059
      %2316 = vst [vmem:[%s236 + $0x1a0] sm:$0xf] %v2060
      %2317 = vst [vmem:[%s236 + $0x1a4] sm:$0xf] %v2061
      %2318 = vst [vmem:[%s236 + $0x1a8] sm:$0xf] %v2062
      %2319 = vst [vmem:[%s236 + $0x1ac] sm:$0xf] %v2063
      %2320 = vst [vmem:[%s236 + $0x1b0] sm:$0xf] %v2064
      %2321 = vst [vmem:[%s236 + $0x1b4] sm:$0xf] %v2065
      %2322 = vst [vmem:[%s236 + $0x1b8] sm:$0xf] %v2066
      %2323 = vst [vmem:[%s236 + $0x1bc] sm:$0xf] %v2067
      %2324 = vst [vmem:[%s236 + $0x1c0] sm:$0xf] %v2068
      %2325 = vst [vmem:[%s236 + $0x1c4] sm:$0xf] %v2069
      %2326 = vst [vmem:[%s236 + $0x1c8] sm:$0xf] %v2070
      %2327 = vst [vmem:[%s236 + $0x1cc] sm:$0xf] %v2071
      %2328 = vst [vmem:[%s236 + $0x1d0] sm:$0xf] %v2072
      %2329 = vst [vmem:[%s236 + $0x1d4] sm:$0xf] %v2073
      %2330 = vst [vmem:[%s236 + $0x1d8] sm:$0xf] %v2074
      %2331 = vst [vmem:[%s236 + $0x1dc] sm:$0xf] %v2075
      %2332 = vst [vmem:[%s236 + $0x1e0] sm:$0xf] %v2076
      %2333 = vst [vmem:[%s236 + $0x1e4] sm:$0xf] %v2077
      %2334 = vst [vmem:[%s236 + $0x1e8] sm:$0xf] %v2078
      %2335 = vst [vmem:[%s236 + $0x1ec] sm:$0xf] %v2079
      %2336 = vst [vmem:[%s236 + $0x1f0] sm:$0xf] %v2080
      %2337 = vst [vmem:[%s236 + $0x1f4] sm:$0xf] %v2081
      %2338 = vst [vmem:[%s236 + $0x1f8] sm:$0xf] %v2082
      %2339 = vst [vmem:[%s236 + $0x1fc] sm:$0xf] %v2083
      %s2340 = smul.u32 128, %s19
      %p2341 = scmp.lt.s32.totalorder %s2340, 255
      %s2342 = scalar_select %p2341, %s2340, 255
      %p2343 = scmp.lt.s32.totalorder %s20, 0
      %s2344 = scalar_select %p2343, %s20, 0
      %s2345 = sadd.s32 %s2344, %s2342
      %s2346 = smul.addr %s2345, 4
      %s2347 = scalar_lea.vmem %s4, %s2346
      // Predicated region
      $region37: #{generator_forward.16} parent=35 // pred_check
        %p2348 = pneg %p141
      $region38: #{generator_forward.16} parent=35 // pred_check_branch
        %2350 = sbr.rel (%p2348) target = $region40
      $region39: #{generator_forward.16} parent=35 // pred_region
        %s2351 = smul.u32 128, %s19
      $region40: #{generator_forward.16} parent=35 // pred_fallthru
        _
    $region36: #{generator_forward.16} parent=5 // pred_fallthru
      _
    %p2352 = scmp.le.s32.totalorder 2, %s10
    // Predicated region
    $region41: #{generator_forward.16} parent=5 // pred_check
      %p2353 = pneg %p2352
    $region42: #{generator_forward.16} parent=5 // pred_check_branch
      %2355 = sbr.rel (%p2353) target = $region44
    $region43: #{generator_forward.16} parent=5 // pred_region
      %s2356 = ssub.s32 %s10, 2
      // Predicated region
      $region45: #{generator_forward.16} parent=43 // pred_check
        %p2357 = pneg %p147
      $region46: #{generator_forward.16} parent=43 // pred_check_branch
        %2359 = sbr.rel (%p2357) target = $region48
      $region47: #{generator_forward.16} parent=43 // pred_region
        %s2360 = smul.u32 128, %s21
        %p2361 = scmp.lt.s32.totalorder %s2360, 255
        %s2362 = scalar_select %p2361, %s2360, 255
        %p2363 = scmp.lt.s32.totalorder %s22, 0
        %s2364 = scalar_select %p2363, %s22, 0
        %s2365 = sadd.s32 %s2364, %s2362
        %s2366 = smul.addr %s2365, 4
        %s2367 = scalar_lea.vmem %s4, %s2366
      $region48: #{generator_forward.16} parent=43 // pred_fallthru
        _
    $region44: #{generator_forward.16} parent=5 // pred_fallthru
      _
  $region6: #{generator_forward.16} parent=0 // loop_footer
    %s14 = sadd.s32 1, %s10
  $region7: #{generator_forward.16} parent=0 // loop_footer_branch
    %9 = sbr.rel target = $region3
  $region8: #{generator_forward.16} parent=0 // loop_exit
    _

// kernel: generator_forward.17
$region0: #{generator_forward.17}
  #allocation0 [shape = 'u32[]', space=smem, size = 0x4, offset = 0x4, fixed_abs, tag = 'smem constant byte address 0x4 - core index']
  #allocation1 [shape = 'u32[144,128]{1,0:T(1,128)}', space=vmem, size = 0x12000, scoped, tag = 'internal scratch']
  %s0 = inlined_call_operand.vmem [shape: bf16[128,512], index: 0, kind: input, shape index: {}]
  %s1 = inlined_call_operand.vmem [shape: f32[1,512], index: 1, kind: input, shape index: {}]
  %s2 = inlined_call_operand.vmem [shape: f32[128,512], index: 2, kind: output, shape index: {}]
  %s3 = sld [smem:[#allocation0]]
  $region41: #{generator_forward.17} parent=0
    _
  %s5 = ssub.s32 1, %s3
  %s6 = scalar_select 0, %s5, %s3
  loop: start=0, step=1, limit=4
  $region2: #{generator_forward.17} parent=0 // loop_pre_header
    _
  $region3: #{generator_forward.17} parent=0 // loop_header
    %s8 = sphi 0, %s12
    %p9 = scmp.ge.s32.totalorder %s8, 4
    %s18 = sphi 0, %s20
    %s21 = sphi 0, %s18
    %s22 = sphi 0, %s21
    %s38 = sphi 0, %s22
    %s42 = sphi 0, %s42
    %s44 = sphi 0, %s42
    %s45 = sphi 0, %s44
    %s59 = sphi 0, %s45
    %s65 = sphi 0, %s67
    %s68 = sphi 0, %s65
    %s69 = sphi 0, %s68
    %s85 = sphi 0, %s69
  $region4: #{generator_forward.17} parent=0 // loop_header_branch
    %11 = sbr.rel (%p9) target = $region8
  $region5: #{generator_forward.17} parent=0 // loop_body
    %s13 = ssub.s32 %s8, 1
    %s14 = ssub.s32 %s8, 2
    %s15 = sadd.s32 %s8, 1
    %s16 = ssub.s32 %s8, %s15
    %p17 = scmp.eq.s32.totalorder %s16, 0
    %s19 = sadd.s32 %s18, 1
    %s20 = scalar_select %p17, %s18, %s19
    %p23 = pneg %p17
    %p24 = scmp.eq.s32.totalorder %s8, 1
    %p25 = por %p23, %p24
    %p26 = scmp.ne.s32.totalorder %s18, %s21
    %p27 = scmp.eq.s32.totalorder %s8, 0
    %p28 = por %p26, %p27
    %p29 = scmp.ne.s32.totalorder %s18, %s21
    %p30 = scmp.eq.s32.totalorder %s13, 1
    %p31 = por %p29, %p30
    %p32 = scmp.ne.s32.totalorder %s21, %s22
    %p33 = scmp.eq.s32.totalorder %s13, 0
    %p34 = por %p32, %p33
    %p35 = scmp.ne.s32.totalorder %s21, %s22
    %p36 = scmp.eq.s32.totalorder %s14, 1
    %p37 = por %p35, %p36
    %p39 = scmp.ne.s32.totalorder %s22, %s38
    %p40 = scmp.eq.s32.totalorder %s14, 0
    %p41 = por %p39, %p40
    %s43 = sadd.s32 %s42, 1
    %p46 = scmp.eq.s32.totalorder %s8, 1
    %p47 = scmp.ne.s32.totalorder %s42, %s44
    %p48 = scmp.eq.s32.totalorder %s8, 0
    %p49 = por %p47, %p48
    %p50 = scmp.ne.s32.totalorder %s42, %s44
    %p51 = scmp.eq.s32.totalorder %s13, 1
    %p52 = por %p50, %p51
    %p53 = scmp.ne.s32.totalorder %s44, %s45
    %p54 = scmp.eq.s32.totalorder %s13, 0
    %p55 = por %p53, %p54
    %p56 = scmp.ne.s32.totalorder %s44, %s45
    %p57 = scmp.eq.s32.totalorder %s14, 1
    %p58 = por %p56, %p57
    %p60 = scmp.ne.s32.totalorder %s45, %s59
    %p61 = scmp.eq.s32.totalorder %s14, 0
    %p62 = por %p60, %p61
    %s63 = ssub.s32 %s8, %s15
    %p64 = scmp.eq.s32.totalorder %s63, 0
    %s66 = sadd.s32 %s65, 1
    %s67 = scalar_select %p64, %s65, %s66
    %p70 = pneg %p64
    %p71 = scmp.eq.s32.totalorder %s8, 1
    %p72 = por %p70, %p71
    %p73 = scmp.ne.s32.totalorder %s65, %s68
    %p74 = scmp.eq.s32.totalorder %s8, 0
    %p75 = por %p73, %p74
    %p76 = scmp.ne.s32.totalorder %s65, %s68
    %p77 = scmp.eq.s32.totalorder %s13, 1
    %p78 = por %p76, %p77
    %p79 = scmp.ne.s32.totalorder %s68, %s69
    %p80 = scmp.eq.s32.totalorder %s13, 0
    %p81 = por %p79, %p80
    %p82 = scmp.ne.s32.totalorder %s68, %s69
    %p83 = scmp.eq.s32.totalorder %s14, 1
    %p84 = por %p82, %p83
    %p86 = scmp.ne.s32.totalorder %s69, %s85
    %p87 = scmp.eq.s32.totalorder %s14, 0
    %p88 = por %p86, %p87
    %p89 = scmp.le.s32.totalorder 1, %s8
    %p90 = scmp.lt.s32.totalorder %s8, 3
    %p91 = pnand %p89, %p90
    %p92 = pneg %p91
    // Predicated region
    $region9: #{generator_forward.17} parent=5 // pred_check
      _
    $region10: #{generator_forward.17} parent=5 // pred_check_branch
      %94 = sbr.rel (%p91) target = $region12
    $region11: #{generator_forward.17} parent=5 // pred_region
      %s95 = ssub.s32 %s8, 1
      // Predicated region
      $region13: #{generator_forward.17} parent=11 // pred_check
        %p96 = pneg %p55
      $region14: #{generator_forward.17} parent=11 // pred_check_branch
        %98 = sbr.rel (%p96) target = $region16
      $region15: #{generator_forward.17} parent=11 // pred_region
        _
      $region16: #{generator_forward.17} parent=11 // pred_fallthru
        _
    $region12: #{generator_forward.17} parent=5 // pred_fallthru
      _
    %p99 = scmp.lt.s32.totalorder %s8, 2
    // Predicated region
    $region17: #{generator_forward.17} parent=5 // pred_check
      %p100 = pneg %p99
    $region18: #{generator_forward.17} parent=5 // pred_check_branch
      %102 = sbr.rel (%p100) target = $region20
    $region19: #{generator_forward.17} parent=5 // pred_region
      // Predicated region
      $region21: #{generator_forward.17} parent=19 // pred_check
        %p103 = pneg %p28
      $region22: #{generator_forward.17} parent=19 // pred_check_branch
        %105 = sbr.rel (%p103) target = $region24
      $region23: #{generator_forward.17} parent=19 // pred_region
        %s106 = smul.u32 8, %s8
        %p107 = scmp.lt.s32.totalorder %s106, 15
        %s108 = scalar_select %p107, %s106, 15
        %s109 = smul.addr %s108, 4
        %s110 = smul.addr %s109, 4
        %s111 = scalar_lea.vmem %s0, %s110
        %s112 = smul.u32 8, %s8
      $region24: #{generator_forward.17} parent=19 // pred_fallthru
        _
    $region20: #{generator_forward.17} parent=5 // pred_fallthru
      _
    %p113 = scmp.le.s32.totalorder 1, %s8
    %p114 = scmp.lt.s32.totalorder %s8, 3
    %p115 = pnand %p113, %p114
    %p116 = pneg %p115
    // Predicated region
    $region25: #{generator_forward.17} parent=5 // pred_check
      _
    $region26: #{generator_forward.17} parent=5 // pred_check_branch
      %118 = sbr.rel (%p115) target = $region28
    $region27: #{generator_forward.17} parent=5 // pred_region
      %s119 = ssub.s32 %s8, 1
      %s120 = smul.u32 8, %s13
      %p121 = scmp.lt.s32.totalorder %s120, 15
      %s122 = scalar_select %p121, %s120, 15
      %s123 = smul.addr %s122, 4
      %s124 = smul.addr %s123, 4
      %s125 = scalar_lea.vmem %s0, %s124
      %p126 = pneg %p34
      %p127 = pneg %p31
      %p128 = pneg %p55
      %p129 = pneg %p52
      %p130 = pneg %p81
      %p131 = pneg %p78
      %s132 = smul.u32 8, %s13
      %p133 = scmp.lt.s32.totalorder %s132, 15
      %s134 = scalar_select %p133, %s132, 15
      %s135 = smul.addr %s134, 4
      %s136 = smul.addr %s135, 8
      %s137 = scalar_lea.vmem %s2, %s136
      %s138 = smul.u32 8, %s13
      %p139 = scmp.lt.s32.totalorder %s138, 15
      %s140 = scalar_select %p139, %s138, 15
      %s141 = smul.addr %s140, 4
      %s142 = smul.addr %s141, 4
      %s143 = scalar_lea.vmem %s0, %s142
      %s144 = smul.u32 8, %s13
      %s145 = smul.u32 8, %s13
      %p146 = scmp.lt.s32.totalorder %s145, 15
      %s147 = scalar_select %p146, %s145, 15
      %s148 = smul.addr %s147, 4
      %s149 = smul.addr %s148, 8
      %s150 = scalar_lea.vmem %s2, %s149
      %s151 = smul.u32 8, %s13
      %v152 = vld [vmem:[%s143] sm:$0xff]
      %v153 = vld [vmem:[%s143 + $0x8] sm:$0xff]
      %v154 = vld [vmem:[%s143 + $0x10] sm:$0xff]
      %v155 = vld [vmem:[%s143 + $0x18] sm:$0xff]
      %v156 = vld [vmem:[%s143 + $0x20] sm:$0xff]
      %v157 = vld [vmem:[%s143 + $0x28] sm:$0xff]
      %v158 = vld [vmem:[%s143 + $0x30] sm:$0xff]
      %v159 = vld [vmem:[%s143 + $0x38] sm:$0xff]
      %v160 = vld [vmem:[%s143 + $0x40] sm:$0xff]
      %v161 = vld [vmem:[%s143 + $0x48] sm:$0xff]
      %v162 = vld [vmem:[%s143 + $0x50] sm:$0xff]
      %v163 = vld [vmem:[%s143 + $0x58] sm:$0xff]
      %v164 = vld [vmem:[%s143 + $0x60] sm:$0xff]
      %v165 = vld [vmem:[%s143 + $0x68] sm:$0xff]
      %v166 = vld [vmem:[%s143 + $0x70] sm:$0xff]
      %v167 = vld [vmem:[%s143 + $0x78] sm:$0xff]
      %v168 = vunpack.c.l.bf16 %v152
      %v169 = vunpack.c.h.bf16 %v152
      %v170 = vunpack.c.l.bf16 %v153
      %v171 = vunpack.c.h.bf16 %v153
      %v172 = vunpack.c.l.bf16 %v154
      %v173 = vunpack.c.h.bf16 %v154
      %v174 = vunpack.c.l.bf16 %v155
      %v175 = vunpack.c.h.bf16 %v155
      %v176 = vunpack.c.l.bf16 %v156
      %v177 = vunpack.c.h.bf16 %v156
      %v178 = vunpack.c.l.bf16 %v157
      %v179 = vunpack.c.h.bf16 %v157
      %v180 = vunpack.c.l.bf16 %v158
      %v181 = vunpack.c.h.bf16 %v158
      %v182 = vunpack.c.l.bf16 %v159
      %v183 = vunpack.c.h.bf16 %v159
      %v184 = vunpack.c.l.bf16 %v160
      %v185 = vunpack.c.h.bf16 %v160
      %v186 = vunpack.c.l.bf16 %v161
      %v187 = vunpack.c.h.bf16 %v161
      %v188 = vunpack.c.l.bf16 %v162
      %v189 = vunpack.c.h.bf16 %v162
      %v190 = vunpack.c.l.bf16 %v163
      %v191 = vunpack.c.h.bf16 %v163
      %v192 = vunpack.c.l.bf16 %v164
      %v193 = vunpack.c.h.bf16 %v164
      %v194 = vunpack.c.l.bf16 %v165
      %v195 = vunpack.c.h.bf16 %v165
      %v196 = vunpack.c.l.bf16 %v166
      %v197 = vunpack.c.h.bf16 %v166
      %v198 = vunpack.c.l.bf16 %v167
      %v199 = vunpack.c.h.bf16 %v167
      %v200 = vld [vmem:[%s1] sm:$0xf]
      %v202 = vlaneseq
      %v203 = vshrl.u32 %v202, 7
      %v204 = vsub.s32 0, %v203
      %v205 = vrot.slane %v200, %v204
      %v206 = vlaneseq
      %v207 = vshrl.u32 %v206, 7
      %v208 = vsub.s32 1, %v207
      %v209 = vrot.slane %v200, %v208
      %v210 = vlaneseq
      %v211 = vshrl.u32 %v210, 7
      %v212 = vsub.s32 2, %v211
      %v213 = vrot.slane %v200, %v212
      %v214 = vlaneseq
      %v215 = vshrl.u32 %v214, 7
      %v216 = vsub.s32 3, %v215
      %v217 = vrot.slane %v200, %v216
      %v222 = vadd.f32 %v168, %v205
      %v223 = vadd.f32 %v169, %v209
      %v224 = vadd.f32 %v170, %v213
      %v225 = vadd.f32 %v171, %v217
      %v226 = vadd.f32 %v172, %v205
      %v227 = vadd.f32 %v173, %v209
      %v228 = vadd.f32 %v174, %v213
      %v229 = vadd.f32 %v175, %v217
      %v230 = vadd.f32 %v176, %v205
      %v231 = vadd.f32 %v177, %v209
      %v232 = vadd.f32 %v178, %v213
      %v233 = vadd.f32 %v179, %v217
      %v234 = vadd.f32 %v180, %v205
      %v235 = vadd.f32 %v181, %v209
      %v236 = vadd.f32 %v182, %v213
      %v237 = vadd.f32 %v183, %v217
      %v238 = vadd.f32 %v184, %v205
      %v239 = vadd.f32 %v185, %v209
      %v240 = vadd.f32 %v186, %v213
      %v241 = vadd.f32 %v187, %v217
      %v242 = vadd.f32 %v188, %v205
      %v243 = vadd.f32 %v189, %v209
      %v244 = vadd.f32 %v190, %v213
      %v245 = vadd.f32 %v191, %v217
      %v246 = vadd.f32 %v192, %v205
      %v247 = vadd.f32 %v193, %v209
      %v248 = vadd.f32 %v194, %v213
      %v249 = vadd.f32 %v195, %v217
      %v250 = vadd.f32 %v196, %v205
      %v251 = vadd.f32 %v197, %v209
      %v252 = vadd.f32 %v198, %v213
      %v253 = vadd.f32 %v199, %v217
      %v254 = vtanh.pop %v222
      %v255 = vtanh.pop %v223
      %v256 = vtanh.pop %v224
      %v257 = vtanh.pop %v225
      %v258 = vtanh.pop %v226
      %v259 = vtanh.pop %v227
      %v260 = vtanh.pop %v228
      %v261 = vtanh.pop %v229
      %v262 = vtanh.pop %v230
      %v263 = vtanh.pop %v231
      %v264 = vtanh.pop %v232
      %v265 = vtanh.pop %v233
      %v266 = vtanh.pop %v234
      %v267 = vtanh.pop %v235
      %v268 = vtanh.pop %v236
      %v269 = vtanh.pop %v237
      %v270 = vtanh.pop %v238
      %v271 = vtanh.pop %v239
      %v272 = vtanh.pop %v240
      %v273 = vtanh.pop %v241
      %v274 = vtanh.pop %v242
      %v275 = vtanh.pop %v243
      %v276 = vtanh.pop %v244
      %v277 = vtanh.pop %v245
      %v278 = vtanh.pop %v246
      %v279 = vtanh.pop %v247
      %v280 = vtanh.pop %v248
      %v281 = vtanh.pop %v249
      %v282 = vtanh.pop %v250
      %v283 = vtanh.pop %v251
      %v284 = vtanh.pop %v252
      %v285 = vtanh.pop %v253
      %286 = vst [vmem:[%s150] sm:$0xff] %v254
      %287 = vst [vmem:[%s150 + $0x8] sm:$0xff] %v255
      %288 = vst [vmem:[%s150 + $0x10] sm:$0xff] %v256
      %289 = vst [vmem:[%s150 + $0x18] sm:$0xff] %v257
      %290 = vst [vmem:[%s150 + $0x20] sm:$0xff] %v258
      %291 = vst [vmem:[%s150 + $0x28] sm:$0xff] %v259
      %292 = vst [vmem:[%s150 + $0x30] sm:$0xff] %v260
      %293 = vst [vmem:[%s150 + $0x38] sm:$0xff] %v261
      %294 = vst [vmem:[%s150 + $0x40] sm:$0xff] %v262
      %295 = vst [vmem:[%s150 + $0x48] sm:$0xff] %v263
      %296 = vst [vmem:[%s150 + $0x50] sm:$0xff] %v264
      %297 = vst [vmem:[%s150 + $0x58] sm:$0xff] %v265
      %298 = vst [vmem:[%s150 + $0x60] sm:$0xff] %v266
      %299 = vst [vmem:[%s150 + $0x68] sm:$0xff] %v267
      %300 = vst [vmem:[%s150 + $0x70] sm:$0xff] %v268
      %301 = vst [vmem:[%s150 + $0x78] sm:$0xff] %v269
      %302 = vst [vmem:[%s150 + $0x80] sm:$0xff] %v270
      %303 = vst [vmem:[%s150 + $0x88] sm:$0xff] %v271
      %304 = vst [vmem:[%s150 + $0x90] sm:$0xff] %v272
      %305 = vst [vmem:[%s150 + $0x98] sm:$0xff] %v273
      %306 = vst [vmem:[%s150 + $0xa0] sm:$0xff] %v274
      %307 = vst [vmem:[%s150 + $0xa8] sm:$0xff] %v275
      %308 = vst [vmem:[%s150 + $0xb0] sm:$0xff] %v276
      %309 = vst [vmem:[%s150 + $0xb8] sm:$0xff] %v277
      %310 = vst [vmem:[%s150 + $0xc0] sm:$0xff] %v278
      %311 = vst [vmem:[%s150 + $0xc8] sm:$0xff] %v279
      %312 = vst [vmem:[%s150 + $0xd0] sm:$0xff] %v280
      %313 = vst [vmem:[%s150 + $0xd8] sm:$0xff] %v281
      %314 = vst [vmem:[%s150 + $0xe0] sm:$0xff] %v282
      %315 = vst [vmem:[%s150 + $0xe8] sm:$0xff] %v283
      %316 = vst [vmem:[%s150 + $0xf0] sm:$0xff] %v284
      %317 = vst [vmem:[%s150 + $0xf8] sm:$0xff] %v285
      %s318 = smul.u32 8, %s13
      %p319 = scmp.lt.s32.totalorder %s318, 15
      %s320 = scalar_select %p319, %s318, 15
      %s321 = smul.addr %s320, 4
      %s322 = smul.addr %s321, 8
      %s323 = scalar_lea.vmem %s2, %s322
      // Predicated region
      $region29: #{generator_forward.17} parent=27 // pred_check
        %p324 = pneg %p78
      $region30: #{generator_forward.17} parent=27 // pred_check_branch
        %326 = sbr.rel (%p324) target = $region32
      $region31: #{generator_forward.17} parent=27 // pred_region
        %s327 = smul.u32 8, %s13
      $region32: #{generator_forward.17} parent=27 // pred_fallthru
        _
    $region28: #{generator_forward.17} parent=5 // pred_fallthru
      _
    %p328 = scmp.le.s32.totalorder 2, %s8
    // Predicated region
    $region33: #{generator_forward.17} parent=5 // pred_check
      %p329 = pneg %p328
    $region34: #{generator_forward.17} parent=5 // pred_check_branch
      %331 = sbr.rel (%p329) target = $region36
    $region35: #{generator_forward.17} parent=5 // pred_region
      %s332 = ssub.s32 %s8, 2
      // Predicated region
      $region37: #{generator_forward.17} parent=35 // pred_check
        %p333 = pneg %p84
      $region38: #{generator_forward.17} parent=35 // pred_check_branch
        %335 = sbr.rel (%p333) target = $region40
      $region39: #{generator_forward.17} parent=35 // pred_region
        %s336 = smul.u32 8, %s14
        %p337 = scmp.lt.s32.totalorder %s336, 15
        %s338 = scalar_select %p337, %s336, 15
        %s339 = smul.addr %s338, 4
        %s340 = smul.addr %s339, 8
        %s341 = scalar_lea.vmem %s2, %s340
      $region40: #{generator_forward.17} parent=35 // pred_fallthru
        _
    $region36: #{generator_forward.17} parent=5 // pred_fallthru
      _
  $region6: #{generator_forward.17} parent=0 // loop_footer
    %s12 = sadd.s32 1, %s8
  $region7: #{generator_forward.17} parent=0 // loop_footer_branch
    %7 = sbr.rel target = $region3
  $region8: #{generator_forward.17} parent=0 // loop_exit
    _

</llo_original>
